<compile_context>
chip_gen: v5e
topology: v5e:2x2
jax: 0.10.0
libtpu: 0.0.40
codegen_flags: <defaults>
</compile_context>

<pallas_src>
import jax
import jax.numpy as jnp
from jax.experimental import pallas as pl
from jax.experimental.pallas import tpu as pltpu

D_IN, D_HID, D_OUT = 76, 760, 76   # dim_list = [76, 760, 76]


def nn_kernel(x_ref, w0_ref, b0_ref, w1_ref, b1_ref, vol_ref, out_ref):
    # One grid step == one block of MB deformation modes.
    x = x_ref[...].astype(jnp.bfloat16)            # (B, 76)  bf16 for MXU
    vol = vol_ref[...]                              # (1, 76)  f32
    mb = w0_ref.shape[0]                            # static modes-per-block
    for m in range(mb):                             # small static unrolled loop
        # layer 0: tanh(x @ W0[m] + b0[m])
        h1 = jnp.dot(x, w0_ref[m],
                     preferred_element_type=jnp.float32) + b0_ref[m]
        h1 = jnp.tanh(h1)                           # (B, 760) f32
        # layer 1: relu(h1 @ W1[m] + b1[m])
        h2 = jnp.dot(h1.astype(jnp.bfloat16), w1_ref[m],
                     preferred_element_type=jnp.float32) + b1_ref[m]
        h2 = jnp.maximum(h2, 0.0)                   # (B, 76) f32
        # pred = h2 / (h2 @ vol)   (divide -> EUP reciprocal + multiply)
        denom = jnp.sum(h2 * vol, axis=-1, keepdims=True)     # (B, 1)
        out_ref[m] = h2 * pl.reciprocal(denom, approx=True)   # (B, 76)


def nn_forward(x, w0, b0, w1, b1, vol, modes_per_block=8):
    B = x.shape[0]
    num_modes = w0.shape[0]
    mb = modes_per_block
    n_blocks = pl.cdiv(num_modes, mb)
    m_pad = n_blocks * mb
    pad = m_pad - num_modes

    # Pad the mode axis to a multiple of MB; padded modes produce garbage (0/0)
    # rows that are sliced off below and never read.
    # Stream weights as bf16 (halves the dominant HBM traffic); biases stay f32.
    w0b = jnp.pad(w0, ((0, pad), (0, 0), (0, 0))).astype(jnp.bfloat16)
    w1b = jnp.pad(w1, ((0, pad), (0, 0), (0, 0))).astype(jnp.bfloat16)
    b0p = jnp.pad(b0, ((0, pad), (0, 0), (0, 0)))
    b1p = jnp.pad(b1, ((0, pad), (0, 0), (0, 0)))
    vol2d = vol.reshape(1, D_OUT).astype(jnp.float32)

    flops = 2 * B * num_modes * (D_IN * D_HID + D_HID * D_OUT)
    bytes_accessed = (
        (int(w0b.size) + int(w1b.size)) * 2                       # bf16 weights
        + (int(b0p.size) + int(b1p.size) + int(x.size)) * 4        # f32 biases + x
        + m_pad * B * D_OUT * 4                                    # f32 output
    )
    cost = pl.CostEstimate(flops=flops,
                           transcendentals=B * num_modes * D_HID,
                           bytes_accessed=bytes_accessed)

    out = pl.pallas_call(
        nn_kernel,
        out_shape=jax.ShapeDtypeStruct((m_pad, B, D_OUT), jnp.float32),
        grid_spec=pltpu.PrefetchScalarGridSpec(
            num_scalar_prefetch=0,
            grid=(n_blocks,),
            in_specs=[
                pl.BlockSpec((B, D_IN), lambda i: (0, 0)),             # x (shared)
                pl.BlockSpec((mb, D_IN, D_HID), lambda i: (i, 0, 0)),  # W0 block
                pl.BlockSpec((mb, 1, D_HID), lambda i: (i, 0, 0)),     # b0 block
                pl.BlockSpec((mb, D_HID, D_OUT), lambda i: (i, 0, 0)),  # W1 block
                pl.BlockSpec((mb, 1, D_OUT), lambda i: (i, 0, 0)),      # b1 block
                pl.BlockSpec((1, D_OUT), lambda i: (0, 0)),             # vol
            ],
            out_specs=pl.BlockSpec((mb, B, D_OUT), lambda i: (i, 0, 0)),
        ),
        compiler_params=pltpu.CompilerParams(
            dimension_semantics=("parallel",)),
        cost_estimate=cost,
    )(x, w0b, b0p, w1b, b1p, vol2d)

    # Drop padded modes, then (m, B, 76) -> (B, num_modes, 76) to match
    # PyTorch's y.squeeze().  This is ~78 KB -- negligible vs weight traffic.
    return jnp.transpose(out[:num_modes], (1, 0, 2))


def nn_reference(x, w0, b0, w1, b1, vol):
    """Pure-JAX (f32) mirror of the PyTorch forward."""
    y = x[:, None, None, :]                       # (B, 1, 1, 76)
    y = jnp.tanh(jnp.matmul(y, w0) + b0)          # (B, M, 1, 760)
    y = jax.nn.relu(jnp.matmul(y, w1) + b1)       # (B, M, 1, 76)
    denom = jnp.matmul(y, vol)                    # (B, M, 1)
    return jnp.squeeze(y, axis=2) / denom         # (B, M, 76)


def init_params(key, num_modes):
    k0, k1, kv = jax.random.split(key, 3)
    # xavier-normal-style deterministic init (bias zero, like the module).
    std0 = (2.0 / (D_IN + D_HID)) ** 0.5
    std1 = (2.0 / (D_HID + D_OUT)) ** 0.5
    w0 = std0 * jax.random.normal(k0, (num_modes, D_IN, D_HID), jnp.float32)
    b0 = jnp.zeros((num_modes, 1, D_HID), jnp.float32)
    w1 = std1 * jax.random.normal(k1, (num_modes, D_HID, D_OUT), jnp.float32)
    b1 = jnp.zeros((num_modes, 1, D_OUT), jnp.float32)
    # volume fraction: deterministic positive vector of length 76
    vol = jax.random.uniform(kv, (D_OUT,), jnp.float32, 0.5, 1.5)
    return w0, b0, w1, b1, vol


if __name__ == "__main__":
    key = jax.random.PRNGKey(0)
    kx, kp = jax.random.split(key)
    B, NUM_MODES = 8, 31
    x = jax.random.normal(kx, (B, D_IN), jnp.float32)
    w0, b0, w1, b1, vol = init_params(kp, NUM_MODES)

    fwd = jax.jit(nn_forward)
    out = jax.block_until_ready(fwd(x, w0, b0, w1, b1, vol))
    ref = jax.block_until_ready(nn_reference(x, w0, b0, w1, b1, vol))

    assert out.shape == (B, NUM_MODES, D_OUT), out.shape
    assert bool(jnp.all(jnp.isfinite(out)))
    max_err = float(jnp.max(jnp.abs(out - ref)))
    # bf16 weight streaming -> slightly looser tolerance than pure f32.
    assert jnp.allclose(out, ref, rtol=3e-2, atol=3e-2), max_err
    print("KERNEL_OK")
</pallas_src>

<mosaic_0001>
module attributes {stable_mosaic.version = 11 : i64} {
  func.func @nn_kernel(%arg0: i32, %arg1: memref<8x76xf32, #tpu.memory_space<vmem>>, %arg2: memref<8x76x760xbf16, #tpu.memory_space<vmem>>, %arg3: memref<8x1x760xf32, #tpu.memory_space<vmem>>, %arg4: memref<8x760x76xbf16, #tpu.memory_space<vmem>>, %arg5: memref<8x1x76xf32, #tpu.memory_space<vmem>>, %arg6: memref<1x76xf32, #tpu.memory_space<vmem>>, %arg7: memref<8x8x76xf32, #tpu.memory_space<vmem>>) attributes {dimension_semantics = [#tpu.dimension_semantics<parallel>], iteration_bounds = array<i64: 4>, scalar_prefetch = 0 : i64, scratch_operands = 0 : i64, tpu.core_type = #tpu.core_type<tc>, window_params = [{pipeline_mode = #tpu.pipeline_mode<synchronous>, transform_indices = @transform_0, window_bounds = array<i64: 8, 76>}, {transform_indices = @transform_1, window_bounds = array<i64: 8, 76, 760>}, {transform_indices = @transform_2, window_bounds = array<i64: 8, 1, 760>}, {transform_indices = @transform_3, window_bounds = array<i64: 8, 760, 76>}, {transform_indices = @transform_4, window_bounds = array<i64: 8, 1, 76>}, {pipeline_mode = #tpu.pipeline_mode<synchronous>, transform_indices = @transform_5, window_bounds = array<i64: 1, 76>}, {transform_indices = @transform_6, window_bounds = array<i64: 8, 8, 76>}]} {
    %c0 = arith.constant 0 : index
    %c0_0 = arith.constant 0 : index
    %0 = vector.load %arg1[%c0, %c0_0] : memref<8x76xf32, #tpu.memory_space<vmem>>, vector<8x76xf32>
    %1 = arith.truncf %0 : vector<8x76xf32> to vector<8x76xbf16>
    %c0_1 = arith.constant 0 : index
    %c0_2 = arith.constant 0 : index
    %2 = vector.load %arg6[%c0_1, %c0_2] : memref<1x76xf32, #tpu.memory_space<vmem>>, vector<1x76xf32>
    %c0_3 = arith.constant 0 : index
    %c0_4 = arith.constant 0 : index
    %c0_5 = arith.constant 0 : index
    %3 = vector.load %arg2[%c0_3, %c0_4, %c0_5] : memref<8x76x760xbf16, #tpu.memory_space<vmem>>, vector<1x76x760xbf16>
    %4 = vector.shape_cast %3 : vector<1x76x760xbf16> to vector<76x760xbf16>
    %cst = arith.constant dense<0.000000e+00> : vector<8x760xf32>
    %5 = tpu.matmul %1, %4, %cst {dimension_numbers = #tpu.dot_dimension_numbers<[1], [0], [0], [1], [0, 0, 1, 1], [], []>} : vector<8x76xbf16>, vector<76x760xbf16>, vector<8x760xf32> -> vector<8x760xf32>
    %c0_6 = arith.constant 0 : index
    %c0_7 = arith.constant 0 : index
    %c0_8 = arith.constant 0 : index
    %6 = vector.load %arg3[%c0_6, %c0_7, %c0_8] : memref<8x1x760xf32, #tpu.memory_space<vmem>>, vector<1x1x760xf32>
    %7 = vector.shape_cast %6 : vector<1x1x760xf32> to vector<1x760xf32>
    %8 = vector.broadcast %7 : vector<1x760xf32> to vector<8x760xf32>
    %9 = arith.addf %5, %8 : vector<8x760xf32>
    %10 = math.tanh %9 : vector<8x760xf32>
    %11 = arith.truncf %10 : vector<8x760xf32> to vector<8x760xbf16>
    %c0_9 = arith.constant 0 : index
    %c0_10 = arith.constant 0 : index
    %c0_11 = arith.constant 0 : index
    %12 = vector.load %arg4[%c0_9, %c0_10, %c0_11] : memref<8x760x76xbf16, #tpu.memory_space<vmem>>, vector<1x760x76xbf16>
    %13 = vector.shape_cast %12 : vector<1x760x76xbf16> to vector<760x76xbf16>
    %cst_12 = arith.constant dense<0.000000e+00> : vector<8x76xf32>
    %14 = tpu.matmul %11, %13, %cst_12 {dimension_numbers = #tpu.dot_dimension_numbers<[1], [0], [0], [1], [0, 0, 1, 1], [], []>} : vector<8x760xbf16>, vector<760x76xbf16>, vector<8x76xf32> -> vector<8x76xf32>
    %c0_13 = arith.constant 0 : index
    %c0_14 = arith.constant 0 : index
    %c0_15 = arith.constant 0 : index
    %15 = vector.load %arg5[%c0_13, %c0_14, %c0_15] : memref<8x1x76xf32, #tpu.memory_space<vmem>>, vector<1x1x76xf32>
    %16 = vector.shape_cast %15 : vector<1x1x76xf32> to vector<1x76xf32>
    %17 = vector.broadcast %16 : vector<1x76xf32> to vector<8x76xf32>
    %18 = arith.addf %14, %17 : vector<8x76xf32>
    %cst_16 = arith.constant 0.000000e+00 : f32
    %19 = vector.broadcast %cst_16 : f32 to vector<8x76xf32>
    %20 = arith.maximumf %18, %19 : vector<8x76xf32>
    %21 = vector.broadcast %2 : vector<1x76xf32> to vector<8x76xf32>
    %22 = arith.mulf %20, %21 : vector<8x76xf32>
    %cst_17 = arith.constant dense<0.000000e+00> : vector<8xf32>
    %23 = vector.multi_reduction <add>, %22, %cst_17 [1] : vector<8x76xf32> to vector<8xf32>
    %24 = vector.shape_cast %23 : vector<8xf32> to vector<8x1xf32>
    %25 = tpu.reciprocal %24 {approx = true} : vector<8x1xf32> -> vector<8x1xf32>
    %26 = vector.broadcast %25 : vector<8x1xf32> to vector<8x76xf32>
    %27 = arith.mulf %20, %26 : vector<8x76xf32>
    %c0_18 = arith.constant 0 : index
    %c0_19 = arith.constant 0 : index
    %c0_20 = arith.constant 0 : index
    %28 = vector.load %arg7[%c0_18, %c0_19, %c0_20] : memref<8x8x76xf32, #tpu.memory_space<vmem>>, vector<1x8x76xf32>
    %29 = vector.shape_cast %28 : vector<1x8x76xf32> to vector<8x76xf32>
    %30 = vector.shape_cast %27 : vector<8x76xf32> to vector<1x8x76xf32>
    tpu.vector_store %arg7[%c0_18, %c0_19, %c0_20], %30 {strides = array<i32>} : memref<8x8x76xf32, #tpu.memory_space<vmem>>, vector<1x8x76xf32>,
    %c1 = arith.constant 1 : index
    %c0_21 = arith.constant 0 : index
    %c0_22 = arith.constant 0 : index
    %31 = vector.load %arg2[%c1, %c0_21, %c0_22] : memref<8x76x760xbf16, #tpu.memory_space<vmem>>, vector<1x76x760xbf16>
    %32 = vector.shape_cast %31 : vector<1x76x760xbf16> to vector<76x760xbf16>
    %cst_23 = arith.constant dense<0.000000e+00> : vector<8x760xf32>
    %33 = tpu.matmul %1, %32, %cst_23 {dimension_numbers = #tpu.dot_dimension_numbers<[1], [0], [0], [1], [0, 0, 1, 1], [], []>} : vector<8x76xbf16>, vector<76x760xbf16>, vector<8x760xf32> -> vector<8x760xf32>
    %c1_24 = arith.constant 1 : index
    %c0_25 = arith.constant 0 : index
    %c0_26 = arith.constant 0 : index
    %34 = vector.load %arg3[%c1_24, %c0_25, %c0_26] : memref<8x1x760xf32, #tpu.memory_space<vmem>>, vector<1x1x760xf32>
    %35 = vector.shape_cast %34 : vector<1x1x760xf32> to vector<1x760xf32>
    %36 = vector.broadcast %35 : vector<1x760xf32> to vector<8x760xf32>
    %37 = arith.addf %33, %36 : vector<8x760xf32>
    %38 = math.tanh %37 : vector<8x760xf32>
    %39 = arith.truncf %38 : vector<8x760xf32> to vector<8x760xbf16>
    %c1_27 = arith.constant 1 : index
    %c0_28 = arith.constant 0 : index
    %c0_29 = arith.constant 0 : index
    %40 = vector.load %arg4[%c1_27, %c0_28, %c0_29] : memref<8x760x76xbf16, #tpu.memory_space<vmem>>, vector<1x760x76xbf16>
    %41 = vector.shape_cast %40 : vector<1x760x76xbf16> to vector<760x76xbf16>
    %cst_30 = arith.constant dense<0.000000e+00> : vector<8x76xf32>
    %42 = tpu.matmul %39, %41, %cst_30 {dimension_numbers = #tpu.dot_dimension_numbers<[1], [0], [0], [1], [0, 0, 1, 1], [], []>} : vector<8x760xbf16>, vector<760x76xbf16>, vector<8x76xf32> -> vector<8x76xf32>
    %c1_31 = arith.constant 1 : index
    %c0_32 = arith.constant 0 : index
    %c0_33 = arith.constant 0 : index
    %43 = vector.load %arg5[%c1_31, %c0_32, %c0_33] : memref<8x1x76xf32, #tpu.memory_space<vmem>>, vector<1x1x76xf32>
    %44 = vector.shape_cast %43 : vector<1x1x76xf32> to vector<1x76xf32>
    %45 = vector.broadcast %44 : vector<1x76xf32> to vector<8x76xf32>
    %46 = arith.addf %42, %45 : vector<8x76xf32>
    %cst_34 = arith.constant 0.000000e+00 : f32
    %47 = vector.broadcast %cst_34 : f32 to vector<8x76xf32>
    %48 = arith.maximumf %46, %47 : vector<8x76xf32>
    %49 = vector.broadcast %2 : vector<1x76xf32> to vector<8x76xf32>
    %50 = arith.mulf %48, %49 : vector<8x76xf32>
    %cst_35 = arith.constant dense<0.000000e+00> : vector<8xf32>
    %51 = vector.multi_reduction <add>, %50, %cst_35 [1] : vector<8x76xf32> to vector<8xf32>
    %52 = vector.shape_cast %51 : vector<8xf32> to vector<8x1xf32>
    %53 = tpu.reciprocal %52 {approx = true} : vector<8x1xf32> -> vector<8x1xf32>
    %54 = vector.broadcast %53 : vector<8x1xf32> to vector<8x76xf32>
    %55 = arith.mulf %48, %54 : vector<8x76xf32>
    %c1_36 = arith.constant 1 : index
    %c0_37 = arith.constant 0 : index
    %c0_38 = arith.constant 0 : index
    %56 = vector.load %arg7[%c1_36, %c0_37, %c0_38] : memref<8x8x76xf32, #tpu.memory_space<vmem>>, vector<1x8x76xf32>
    %57 = vector.shape_cast %56 : vector<1x8x76xf32> to vector<8x76xf32>
    %58 = vector.shape_cast %55 : vector<8x76xf32> to vector<1x8x76xf32>
    tpu.vector_store %arg7[%c1_36, %c0_37, %c0_38], %58 {strides = array<i32>} : memref<8x8x76xf32, #tpu.memory_space<vmem>>, vector<1x8x76xf32>,
    %c2 = arith.constant 2 : index
    %c0_39 = arith.constant 0 : index
    %c0_40 = arith.constant 0 : index
    %59 = vector.load %arg2[%c2, %c0_39, %c0_40] : memref<8x76x760xbf16, #tpu.memory_space<vmem>>, vector<1x76x760xbf16>
    %60 = vector.shape_cast %59 : vector<1x76x760xbf16> to vector<76x760xbf16>
    %cst_41 = arith.constant dense<0.000000e+00> : vector<8x760xf32>
    %61 = tpu.matmul %1, %60, %cst_41 {dimension_numbers = #tpu.dot_dimension_numbers<[1], [0], [0], [1], [0, 0, 1, 1], [], []>} : vector<8x76xbf16>, vector<76x760xbf16>, vector<8x760xf32> -> vector<8x760xf32>
    %c2_42 = arith.constant 2 : index
    %c0_43 = arith.constant 0 : index
    %c0_44 = arith.constant 0 : index
    %62 = vector.load %arg3[%c2_42, %c0_43, %c0_44] : memref<8x1x760xf32, #tpu.memory_space<vmem>>, vector<1x1x760xf32>
    %63 = vector.shape_cast %62 : vector<1x1x760xf32> to vector<1x760xf32>
    %64 = vector.broadcast %63 : vector<1x760xf32> to vector<8x760xf32>
    %65 = arith.addf %61, %64 : vector<8x760xf32>
    %66 = math.tanh %65 : vector<8x760xf32>
    %67 = arith.truncf %66 : vector<8x760xf32> to vector<8x760xbf16>
    %c2_45 = arith.constant 2 : index
    %c0_46 = arith.constant 0 : index
    %c0_47 = arith.constant 0 : index
    %68 = vector.load %arg4[%c2_45, %c0_46, %c0_47] : memref<8x760x76xbf16, #tpu.memory_space<vmem>>, vector<1x760x76xbf16>
    %69 = vector.shape_cast %68 : vector<1x760x76xbf16> to vector<760x76xbf16>
    %cst_48 = arith.constant dense<0.000000e+00> : vector<8x76xf32>
    %70 = tpu.matmul %67, %69, %cst_48 {dimension_numbers = #tpu.dot_dimension_numbers<[1], [0], [0], [1], [0, 0, 1, 1], [], []>} : vector<8x760xbf16>, vector<760x76xbf16>, vector<8x76xf32> -> vector<8x76xf32>
    %c2_49 = arith.constant 2 : index
    %c0_50 = arith.constant 0 : index
    %c0_51 = arith.constant 0 : index
    %71 = vector.load %arg5[%c2_49, %c0_50, %c0_51] : memref<8x1x76xf32, #tpu.memory_space<vmem>>, vector<1x1x76xf32>
    %72 = vector.shape_cast %71 : vector<1x1x76xf32> to vector<1x76xf32>
    %73 = vector.broadcast %72 : vector<1x76xf32> to vector<8x76xf32>
    %74 = arith.addf %70, %73 : vector<8x76xf32>
    %cst_52 = arith.constant 0.000000e+00 : f32
    %75 = vector.broadcast %cst_52 : f32 to vector<8x76xf32>
    %76 = arith.maximumf %74, %75 : vector<8x76xf32>
    %77 = vector.broadcast %2 : vector<1x76xf32> to vector<8x76xf32>
    %78 = arith.mulf %76, %77 : vector<8x76xf32>
    %cst_53 = arith.constant dense<0.000000e+00> : vector<8xf32>
    %79 = vector.multi_reduction <add>, %78, %cst_53 [1] : vector<8x76xf32> to vector<8xf32>
    %80 = vector.shape_cast %79 : vector<8xf32> to vector<8x1xf32>
    %81 = tpu.reciprocal %80 {approx = true} : vector<8x1xf32> -> vector<8x1xf32>
    %82 = vector.broadcast %81 : vector<8x1xf32> to vector<8x76xf32>
    %83 = arith.mulf %76, %82 : vector<8x76xf32>
    %c2_54 = arith.constant 2 : index
    %c0_55 = arith.constant 0 : index
    %c0_56 = arith.constant 0 : index
    %84 = vector.load %arg7[%c2_54, %c0_55, %c0_56] : memref<8x8x76xf32, #tpu.memory_space<vmem>>, vector<1x8x76xf32>
    %85 = vector.shape_cast %84 : vector<1x8x76xf32> to vector<8x76xf32>
    %86 = vector.shape_cast %83 : vector<8x76xf32> to vector<1x8x76xf32>
    tpu.vector_store %arg7[%c2_54, %c0_55, %c0_56], %86 {strides = array<i32>} : memref<8x8x76xf32, #tpu.memory_space<vmem>>, vector<1x8x76xf32>,
    %c3 = arith.constant 3 : index
    %c0_57 = arith.constant 0 : index
    %c0_58 = arith.constant 0 : index
    %87 = vector.load %arg2[%c3, %c0_57, %c0_58] : memref<8x76x760xbf16, #tpu.memory_space<vmem>>, vector<1x76x760xbf16>
    %88 = vector.shape_cast %87 : vector<1x76x760xbf16> to vector<76x760xbf16>
    %cst_59 = arith.constant dense<0.000000e+00> : vector<8x760xf32>
    %89 = tpu.matmul %1, %88, %cst_59 {dimension_numbers = #tpu.dot_dimension_numbers<[1], [0], [0], [1], [0, 0, 1, 1], [], []>} : vector<8x76xbf16>, vector<76x760xbf16>, vector<8x760xf32> -> vector<8x760xf32>
    %c3_60 = arith.constant 3 : index
    %c0_61 = arith.constant 0 : index
    %c0_62 = arith.constant 0 : index
    %90 = vector.load %arg3[%c3_60, %c0_61, %c0_62] : memref<8x1x760xf32, #tpu.memory_space<vmem>>, vector<1x1x760xf32>
    %91 = vector.shape_cast %90 : vector<1x1x760xf32> to vector<1x760xf32>
    %92 = vector.broadcast %91 : vector<1x760xf32> to vector<8x760xf32>
    %93 = arith.addf %89, %92 : vector<8x760xf32>
    %94 = math.tanh %93 : vector<8x760xf32>
    %95 = arith.truncf %94 : vector<8x760xf32> to vector<8x760xbf16>
    %c3_63 = arith.constant 3 : index
    %c0_64 = arith.constant 0 : index
    %c0_65 = arith.constant 0 : index
    %96 = vector.load %arg4[%c3_63, %c0_64, %c0_65] : memref<8x760x76xbf16, #tpu.memory_space<vmem>>, vector<1x760x76xbf16>
    %97 = vector.shape_cast %96 : vector<1x760x76xbf16> to vector<760x76xbf16>
    %cst_66 = arith.constant dense<0.000000e+00> : vector<8x76xf32>
    %98 = tpu.matmul %95, %97, %cst_66 {dimension_numbers = #tpu.dot_dimension_numbers<[1], [0], [0], [1], [0, 0, 1, 1], [], []>} : vector<8x760xbf16>, vector<760x76xbf16>, vector<8x76xf32> -> vector<8x76xf32>
    %c3_67 = arith.constant 3 : index
    %c0_68 = arith.constant 0 : index
    %c0_69 = arith.constant 0 : index
    %99 = vector.load %arg5[%c3_67, %c0_68, %c0_69] : memref<8x1x76xf32, #tpu.memory_space<vmem>>, vector<1x1x76xf32>
    %100 = vector.shape_cast %99 : vector<1x1x76xf32> to vector<1x76xf32>
    %101 = vector.broadcast %100 : vector<1x76xf32> to vector<8x76xf32>
    %102 = arith.addf %98, %101 : vector<8x76xf32>
    %cst_70 = arith.constant 0.000000e+00 : f32
    %103 = vector.broadcast %cst_70 : f32 to vector<8x76xf32>
    %104 = arith.maximumf %102, %103 : vector<8x76xf32>
    %105 = vector.broadcast %2 : vector<1x76xf32> to vector<8x76xf32>
    %106 = arith.mulf %104, %105 : vector<8x76xf32>
    %cst_71 = arith.constant dense<0.000000e+00> : vector<8xf32>
    %107 = vector.multi_reduction <add>, %106, %cst_71 [1] : vector<8x76xf32> to vector<8xf32>
    %108 = vector.shape_cast %107 : vector<8xf32> to vector<8x1xf32>
    %109 = tpu.reciprocal %108 {approx = true} : vector<8x1xf32> -> vector<8x1xf32>
    %110 = vector.broadcast %109 : vector<8x1xf32> to vector<8x76xf32>
    %111 = arith.mulf %104, %110 : vector<8x76xf32>
    %c3_72 = arith.constant 3 : index
    %c0_73 = arith.constant 0 : index
    %c0_74 = arith.constant 0 : index
    %112 = vector.load %arg7[%c3_72, %c0_73, %c0_74] : memref<8x8x76xf32, #tpu.memory_space<vmem>>, vector<1x8x76xf32>
    %113 = vector.shape_cast %112 : vector<1x8x76xf32> to vector<8x76xf32>
    %114 = vector.shape_cast %111 : vector<8x76xf32> to vector<1x8x76xf32>
    tpu.vector_store %arg7[%c3_72, %c0_73, %c0_74], %114 {strides = array<i32>} : memref<8x8x76xf32, #tpu.memory_space<vmem>>, vector<1x8x76xf32>,
    %c4 = arith.constant 4 : index
    %c0_75 = arith.constant 0 : index
    %c0_76 = arith.constant 0 : index
    %115 = vector.load %arg2[%c4, %c0_75, %c0_76] : memref<8x76x760xbf16, #tpu.memory_space<vmem>>, vector<1x76x760xbf16>
    %116 = vector.shape_cast %115 : vector<1x76x760xbf16> to vector<76x760xbf16>
    %cst_77 = arith.constant dense<0.000000e+00> : vector<8x760xf32>
    %117 = tpu.matmul %1, %116, %cst_77 {dimension_numbers = #tpu.dot_dimension_numbers<[1], [0], [0], [1], [0, 0, 1, 1], [], []>} : vector<8x76xbf16>, vector<76x760xbf16>, vector<8x760xf32> -> vector<8x760xf32>
    %c4_78 = arith.constant 4 : index
    %c0_79 = arith.constant 0 : index
    %c0_80 = arith.constant 0 : index
    %118 = vector.load %arg3[%c4_78, %c0_79, %c0_80] : memref<8x1x760xf32, #tpu.memory_space<vmem>>, vector<1x1x760xf32>
    %119 = vector.shape_cast %118 : vector<1x1x760xf32> to vector<1x760xf32>
    %120 = vector.broadcast %119 : vector<1x760xf32> to vector<8x760xf32>
    %121 = arith.addf %117, %120 : vector<8x760xf32>
    %122 = math.tanh %121 : vector<8x760xf32>
    %123 = arith.truncf %122 : vector<8x760xf32> to vector<8x760xbf16>
    %c4_81 = arith.constant 4 : index
    %c0_82 = arith.constant 0 : index
    %c0_83 = arith.constant 0 : index
    %124 = vector.load %arg4[%c4_81, %c0_82, %c0_83] : memref<8x760x76xbf16, #tpu.memory_space<vmem>>, vector<1x760x76xbf16>
    %125 = vector.shape_cast %124 : vector<1x760x76xbf16> to vector<760x76xbf16>
    %cst_84 = arith.constant dense<0.000000e+00> : vector<8x76xf32>
    %126 = tpu.matmul %123, %125, %cst_84 {dimension_numbers = #tpu.dot_dimension_numbers<[1], [0], [0], [1], [0, 0, 1, 1], [], []>} : vector<8x760xbf16>, vector<760x76xbf16>, vector<8x76xf32> -> vector<8x76xf32>
    %c4_85 = arith.constant 4 : index
    %c0_86 = arith.constant 0 : index
    %c0_87 = arith.constant 0 : index
    %127 = vector.load %arg5[%c4_85, %c0_86, %c0_87] : memref<8x1x76xf32, #tpu.memory_space<vmem>>, vector<1x1x76xf32>
    %128 = vector.shape_cast %127 : vector<1x1x76xf32> to vector<1x76xf32>
    %129 = vector.broadcast %128 : vector<1x76xf32> to vector<8x76xf32>
    %130 = arith.addf %126, %129 : vector<8x76xf32>
    %cst_88 = arith.constant 0.000000e+00 : f32
    %131 = vector.broadcast %cst_88 : f32 to vector<8x76xf32>
    %132 = arith.maximumf %130, %131 : vector<8x76xf32>
    %133 = vector.broadcast %2 : vector<1x76xf32> to vector<8x76xf32>
    %134 = arith.mulf %132, %133 : vector<8x76xf32>
    %cst_89 = arith.constant dense<0.000000e+00> : vector<8xf32>
    %135 = vector.multi_reduction <add>, %134, %cst_89 [1] : vector<8x76xf32> to vector<8xf32>
    %136 = vector.shape_cast %135 : vector<8xf32> to vector<8x1xf32>
    %137 = tpu.reciprocal %136 {approx = true} : vector<8x1xf32> -> vector<8x1xf32>
    %138 = vector.broadcast %137 : vector<8x1xf32> to vector<8x76xf32>
    %139 = arith.mulf %132, %138 : vector<8x76xf32>
    %c4_90 = arith.constant 4 : index
    %c0_91 = arith.constant 0 : index
    %c0_92 = arith.constant 0 : index
    %140 = vector.load %arg7[%c4_90, %c0_91, %c0_92] : memref<8x8x76xf32, #tpu.memory_space<vmem>>, vector<1x8x76xf32>
    %141 = vector.shape_cast %140 : vector<1x8x76xf32> to vector<8x76xf32>
    %142 = vector.shape_cast %139 : vector<8x76xf32> to vector<1x8x76xf32>
    tpu.vector_store %arg7[%c4_90, %c0_91, %c0_92], %142 {strides = array<i32>} : memref<8x8x76xf32, #tpu.memory_space<vmem>>, vector<1x8x76xf32>,
    %c5 = arith.constant 5 : index
    %c0_93 = arith.constant 0 : index
    %c0_94 = arith.constant 0 : index
    %143 = vector.load %arg2[%c5, %c0_93, %c0_94] : memref<8x76x760xbf16, #tpu.memory_space<vmem>>, vector<1x76x760xbf16>
    %144 = vector.shape_cast %143 : vector<1x76x760xbf16> to vector<76x760xbf16>
    %cst_95 = arith.constant dense<0.000000e+00> : vector<8x760xf32>
    %145 = tpu.matmul %1, %144, %cst_95 {dimension_numbers = #tpu.dot_dimension_numbers<[1], [0], [0], [1], [0, 0, 1, 1], [], []>} : vector<8x76xbf16>, vector<76x760xbf16>, vector<8x760xf32> -> vector<8x760xf32>
    %c5_96 = arith.constant 5 : index
    %c0_97 = arith.constant 0 : index
    %c0_98 = arith.constant 0 : index
    %146 = vector.load %arg3[%c5_96, %c0_97, %c0_98] : memref<8x1x760xf32, #tpu.memory_space<vmem>>, vector<1x1x760xf32>
    %147 = vector.shape_cast %146 : vector<1x1x760xf32> to vector<1x760xf32>
    %148 = vector.broadcast %147 : vector<1x760xf32> to vector<8x760xf32>
    %149 = arith.addf %145, %148 : vector<8x760xf32>
    %150 = math.tanh %149 : vector<8x760xf32>
    %151 = arith.truncf %150 : vector<8x760xf32> to vector<8x760xbf16>
    %c5_99 = arith.constant 5 : index
    %c0_100 = arith.constant 0 : index
    %c0_101 = arith.constant 0 : index
    %152 = vector.load %arg4[%c5_99, %c0_100, %c0_101] : memref<8x760x76xbf16, #tpu.memory_space<vmem>>, vector<1x760x76xbf16>
    %153 = vector.shape_cast %152 : vector<1x760x76xbf16> to vector<760x76xbf16>
    %cst_102 = arith.constant dense<0.000000e+00> : vector<8x76xf32>
    %154 = tpu.matmul %151, %153, %cst_102 {dimension_numbers = #tpu.dot_dimension_numbers<[1], [0], [0], [1], [0, 0, 1, 1], [], []>} : vector<8x760xbf16>, vector<760x76xbf16>, vector<8x76xf32> -> vector<8x76xf32>
    %c5_103 = arith.constant 5 : index
    %c0_104 = arith.constant 0 : index
    %c0_105 = arith.constant 0 : index
    %155 = vector.load %arg5[%c5_103, %c0_104, %c0_105] : memref<8x1x76xf32, #tpu.memory_space<vmem>>, vector<1x1x76xf32>
    %156 = vector.shape_cast %155 : vector<1x1x76xf32> to vector<1x76xf32>
    %157 = vector.broadcast %156 : vector<1x76xf32> to vector<8x76xf32>
    %158 = arith.addf %154, %157 : vector<8x76xf32>
    %cst_106 = arith.constant 0.000000e+00 : f32
    %159 = vector.broadcast %cst_106 : f32 to vector<8x76xf32>
    %160 = arith.maximumf %158, %159 : vector<8x76xf32>
    %161 = vector.broadcast %2 : vector<1x76xf32> to vector<8x76xf32>
    %162 = arith.mulf %160, %161 : vector<8x76xf32>
    %cst_107 = arith.constant dense<0.000000e+00> : vector<8xf32>
    %163 = vector.multi_reduction <add>, %162, %cst_107 [1] : vector<8x76xf32> to vector<8xf32>
    %164 = vector.shape_cast %163 : vector<8xf32> to vector<8x1xf32>
    %165 = tpu.reciprocal %164 {approx = true} : vector<8x1xf32> -> vector<8x1xf32>
    %166 = vector.broadcast %165 : vector<8x1xf32> to vector<8x76xf32>
    %167 = arith.mulf %160, %166 : vector<8x76xf32>
    %c5_108 = arith.constant 5 : index
    %c0_109 = arith.constant 0 : index
    %c0_110 = arith.constant 0 : index
    %168 = vector.load %arg7[%c5_108, %c0_109, %c0_110] : memref<8x8x76xf32, #tpu.memory_space<vmem>>, vector<1x8x76xf32>
    %169 = vector.shape_cast %168 : vector<1x8x76xf32> to vector<8x76xf32>
    %170 = vector.shape_cast %167 : vector<8x76xf32> to vector<1x8x76xf32>
    tpu.vector_store %arg7[%c5_108, %c0_109, %c0_110], %170 {strides = array<i32>} : memref<8x8x76xf32, #tpu.memory_space<vmem>>, vector<1x8x76xf32>,
    %c6 = arith.constant 6 : index
    %c0_111 = arith.constant 0 : index
    %c0_112 = arith.constant 0 : index
    %171 = vector.load %arg2[%c6, %c0_111, %c0_112] : memref<8x76x760xbf16, #tpu.memory_space<vmem>>, vector<1x76x760xbf16>
    %172 = vector.shape_cast %171 : vector<1x76x760xbf16> to vector<76x760xbf16>
    %cst_113 = arith.constant dense<0.000000e+00> : vector<8x760xf32>
    %173 = tpu.matmul %1, %172, %cst_113 {dimension_numbers = #tpu.dot_dimension_numbers<[1], [0], [0], [1], [0, 0, 1, 1], [], []>} : vector<8x76xbf16>, vector<76x760xbf16>, vector<8x760xf32> -> vector<8x760xf32>
    %c6_114 = arith.constant 6 : index
    %c0_115 = arith.constant 0 : index
    %c0_116 = arith.constant 0 : index
    %174 = vector.load %arg3[%c6_114, %c0_115, %c0_116] : memref<8x1x760xf32, #tpu.memory_space<vmem>>, vector<1x1x760xf32>
    %175 = vector.shape_cast %174 : vector<1x1x760xf32> to vector<1x760xf32>
    %176 = vector.broadcast %175 : vector<1x760xf32> to vector<8x760xf32>
    %177 = arith.addf %173, %176 : vector<8x760xf32>
    %178 = math.tanh %177 : vector<8x760xf32>
    %179 = arith.truncf %178 : vector<8x760xf32> to vector<8x760xbf16>
    %c6_117 = arith.constant 6 : index
    %c0_118 = arith.constant 0 : index
    %c0_119 = arith.constant 0 : index
    %180 = vector.load %arg4[%c6_117, %c0_118, %c0_119] : memref<8x760x76xbf16, #tpu.memory_space<vmem>>, vector<1x760x76xbf16>
    %181 = vector.shape_cast %180 : vector<1x760x76xbf16> to vector<760x76xbf16>
    %cst_120 = arith.constant dense<0.000000e+00> : vector<8x76xf32>
    %182 = tpu.matmul %179, %181, %cst_120 {dimension_numbers = #tpu.dot_dimension_numbers<[1], [0], [0], [1], [0, 0, 1, 1], [], []>} : vector<8x760xbf16>, vector<760x76xbf16>, vector<8x76xf32> -> vector<8x76xf32>
    %c6_121 = arith.constant 6 : index
    %c0_122 = arith.constant 0 : index
    %c0_123 = arith.constant 0 : index
    %183 = vector.load %arg5[%c6_121, %c0_122, %c0_123] : memref<8x1x76xf32, #tpu.memory_space<vmem>>, vector<1x1x76xf32>
    %184 = vector.shape_cast %183 : vector<1x1x76xf32> to vector<1x76xf32>
    %185 = vector.broadcast %184 : vector<1x76xf32> to vector<8x76xf32>
    %186 = arith.addf %182, %185 : vector<8x76xf32>
    %cst_124 = arith.constant 0.000000e+00 : f32
    %187 = vector.broadcast %cst_124 : f32 to vector<8x76xf32>
    %188 = arith.maximumf %186, %187 : vector<8x76xf32>
    %189 = vector.broadcast %2 : vector<1x76xf32> to vector<8x76xf32>
    %190 = arith.mulf %188, %189 : vector<8x76xf32>
    %cst_125 = arith.constant dense<0.000000e+00> : vector<8xf32>
    %191 = vector.multi_reduction <add>, %190, %cst_125 [1] : vector<8x76xf32> to vector<8xf32>
    %192 = vector.shape_cast %191 : vector<8xf32> to vector<8x1xf32>
    %193 = tpu.reciprocal %192 {approx = true} : vector<8x1xf32> -> vector<8x1xf32>
    %194 = vector.broadcast %193 : vector<8x1xf32> to vector<8x76xf32>
    %195 = arith.mulf %188, %194 : vector<8x76xf32>
    %c6_126 = arith.constant 6 : index
    %c0_127 = arith.constant 0 : index
    %c0_128 = arith.constant 0 : index
    %196 = vector.load %arg7[%c6_126, %c0_127, %c0_128] : memref<8x8x76xf32, #tpu.memory_space<vmem>>, vector<1x8x76xf32>
    %197 = vector.shape_cast %196 : vector<1x8x76xf32> to vector<8x76xf32>
    %198 = vector.shape_cast %195 : vector<8x76xf32> to vector<1x8x76xf32>
    tpu.vector_store %arg7[%c6_126, %c0_127, %c0_128], %198 {strides = array<i32>} : memref<8x8x76xf32, #tpu.memory_space<vmem>>, vector<1x8x76xf32>,
    %c7 = arith.constant 7 : index
    %c0_129 = arith.constant 0 : index
    %c0_130 = arith.constant 0 : index
    %199 = vector.load %arg2[%c7, %c0_129, %c0_130] : memref<8x76x760xbf16, #tpu.memory_space<vmem>>, vector<1x76x760xbf16>
    %200 = vector.shape_cast %199 : vector<1x76x760xbf16> to vector<76x760xbf16>
    %cst_131 = arith.constant dense<0.000000e+00> : vector<8x760xf32>
    %201 = tpu.matmul %1, %200, %cst_131 {dimension_numbers = #tpu.dot_dimension_numbers<[1], [0], [0], [1], [0, 0, 1, 1], [], []>} : vector<8x76xbf16>, vector<76x760xbf16>, vector<8x760xf32> -> vector<8x760xf32>
    %c7_132 = arith.constant 7 : index
    %c0_133 = arith.constant 0 : index
    %c0_134 = arith.constant 0 : index
    %202 = vector.load %arg3[%c7_132, %c0_133, %c0_134] : memref<8x1x760xf32, #tpu.memory_space<vmem>>, vector<1x1x760xf32>
    %203 = vector.shape_cast %202 : vector<1x1x760xf32> to vector<1x760xf32>
    %204 = vector.broadcast %203 : vector<1x760xf32> to vector<8x760xf32>
    %205 = arith.addf %201, %204 : vector<8x760xf32>
    %206 = math.tanh %205 : vector<8x760xf32>
    %207 = arith.truncf %206 : vector<8x760xf32> to vector<8x760xbf16>
    %c7_135 = arith.constant 7 : index
    %c0_136 = arith.constant 0 : index
    %c0_137 = arith.constant 0 : index
    %208 = vector.load %arg4[%c7_135, %c0_136, %c0_137] : memref<8x760x76xbf16, #tpu.memory_space<vmem>>, vector<1x760x76xbf16>
    %209 = vector.shape_cast %208 : vector<1x760x76xbf16> to vector<760x76xbf16>
    %cst_138 = arith.constant dense<0.000000e+00> : vector<8x76xf32>
    %210 = tpu.matmul %207, %209, %cst_138 {dimension_numbers = #tpu.dot_dimension_numbers<[1], [0], [0], [1], [0, 0, 1, 1], [], []>} : vector<8x760xbf16>, vector<760x76xbf16>, vector<8x76xf32> -> vector<8x76xf32>
    %c7_139 = arith.constant 7 : index
    %c0_140 = arith.constant 0 : index
    %c0_141 = arith.constant 0 : index
    %211 = vector.load %arg5[%c7_139, %c0_140, %c0_141] : memref<8x1x76xf32, #tpu.memory_space<vmem>>, vector<1x1x76xf32>
    %212 = vector.shape_cast %211 : vector<1x1x76xf32> to vector<1x76xf32>
    %213 = vector.broadcast %212 : vector<1x76xf32> to vector<8x76xf32>
    %214 = arith.addf %210, %213 : vector<8x76xf32>
    %cst_142 = arith.constant 0.000000e+00 : f32
    %215 = vector.broadcast %cst_142 : f32 to vector<8x76xf32>
    %216 = arith.maximumf %214, %215 : vector<8x76xf32>
    %217 = vector.broadcast %2 : vector<1x76xf32> to vector<8x76xf32>
    %218 = arith.mulf %216, %217 : vector<8x76xf32>
    %cst_143 = arith.constant dense<0.000000e+00> : vector<8xf32>
    %219 = vector.multi_reduction <add>, %218, %cst_143 [1] : vector<8x76xf32> to vector<8xf32>
    %220 = vector.shape_cast %219 : vector<8xf32> to vector<8x1xf32>
    %221 = tpu.reciprocal %220 {approx = true} : vector<8x1xf32> -> vector<8x1xf32>
    %222 = vector.broadcast %221 : vector<8x1xf32> to vector<8x76xf32>
    %223 = arith.mulf %216, %222 : vector<8x76xf32>
    %c7_144 = arith.constant 7 : index
    %c0_145 = arith.constant 0 : index
    %c0_146 = arith.constant 0 : index
    %224 = vector.load %arg7[%c7_144, %c0_145, %c0_146] : memref<8x8x76xf32, #tpu.memory_space<vmem>>, vector<1x8x76xf32>
    %225 = vector.shape_cast %224 : vector<1x8x76xf32> to vector<8x76xf32>
    %226 = vector.shape_cast %223 : vector<8x76xf32> to vector<1x8x76xf32>
    tpu.vector_store %arg7[%c7_144, %c0_145, %c0_146], %226 {strides = array<i32>} : memref<8x8x76xf32, #tpu.memory_space<vmem>>, vector<1x8x76xf32>,
    return
  }
  func.func @transform_0(%arg0: i32) -> (i32, i32) {
    %c0_i32 = arith.constant 0 : i32
    %c0_i32_0 = arith.constant 0 : i32
    %c0_i32_1 = arith.constant 0 : i32
    return %c0_i32, %c0_i32_0 : i32, i32
  }
  func.func @transform_1(%arg0: i32) -> (i32, i32, i32) {
    %c0_i32 = arith.constant 0 : i32
    %c0_i32_0 = arith.constant 0 : i32
    %c0_i32_1 = arith.constant 0 : i32
    return %arg0, %c0_i32, %c0_i32_0 : i32, i32, i32
  }
  func.func @transform_2(%arg0: i32) -> (i32, i32, i32) {
    %c0_i32 = arith.constant 0 : i32
    %c0_i32_0 = arith.constant 0 : i32
    %c0_i32_1 = arith.constant 0 : i32
    return %arg0, %c0_i32, %c0_i32_0 : i32, i32, i32
  }
  func.func @transform_3(%arg0: i32) -> (i32, i32, i32) {
    %c0_i32 = arith.constant 0 : i32
    %c0_i32_0 = arith.constant 0 : i32
    %c0_i32_1 = arith.constant 0 : i32
    return %arg0, %c0_i32, %c0_i32_0 : i32, i32, i32
  }
  func.func @transform_4(%arg0: i32) -> (i32, i32, i32) {
    %c0_i32 = arith.constant 0 : i32
    %c0_i32_0 = arith.constant 0 : i32
    %c0_i32_1 = arith.constant 0 : i32
    return %arg0, %c0_i32, %c0_i32_0 : i32, i32, i32
  }
  func.func @transform_5(%arg0: i32) -> (i32, i32) {
    %c0_i32 = arith.constant 0 : i32
    %c0_i32_0 = arith.constant 0 : i32
    %c0_i32_1 = arith.constant 0 : i32
    return %c0_i32, %c0_i32_0 : i32, i32
  }
  func.func @transform_6(%arg0: i32) -> (i32, i32, i32) {
    %c0_i32 = arith.constant 0 : i32
    %c0_i32_0 = arith.constant 0 : i32
    %c0_i32_1 = arith.constant 0 : i32
    return %arg0, %c0_i32, %c0_i32_0 : i32, i32, i32
  }
}

</mosaic_0001>

<llo_original>
// kernel: nn_forward.1
$region0: #{nn_forward.1}
  #allocation0 [shape = 'u32[]', space=smem, size = 0x4, offset = 0x4, fixed_abs, tag = 'smem constant byte address 0x4 - core index']
  #allocation1 [shape = 'u32[72,128]{1,0:T(1,128)}', space=vmem, size = 0x9000, scoped, tag = 'internal scratch']
  %s0 = inlined_call_operand.vmem [shape: f32[8,76], index: 0, kind: input, shape index: {}]
  %s1 = inlined_call_operand.vmem [shape: bf16[32,76,760], index: 1, kind: input, shape index: {}]
  %s2 = inlined_call_operand.vmem [shape: f32[32,1,760], index: 2, kind: input, shape index: {}]
  %s3 = inlined_call_operand.vmem [shape: bf16[32,760,76], index: 3, kind: input, shape index: {}]
  %s4 = inlined_call_operand.vmem [shape: f32[32,1,76], index: 4, kind: input, shape index: {}]
  %s5 = inlined_call_operand.vmem [shape: f32[1,76], index: 5, kind: input, shape index: {}]
  %s6 = inlined_call_operand.vmem [shape: f32[32,8,76], index: 6, kind: output, shape index: {}]
  %s7 = sld [smem:[#allocation0]]
  $region57: #{nn_forward.1} parent=0
    _
  %s9 = ssub.s32 1, %s7
  %s10 = scalar_select 0, %s9, %s7
  loop: start=0, step=1, limit=6
  $region2: #{nn_forward.1} parent=0 // loop_pre_header
    _
  $region3: #{nn_forward.1} parent=0 // loop_header
    %s12 = sphi 0, %s16
    %p13 = scmp.ge.s32.totalorder %s12, 6
    %s20 = sphi 0, %s20
    %s22 = sphi 0, %s20
    %s23 = sphi 0, %s22
    %s37 = sphi 0, %s23
    %s43 = sphi 0, %s45
    %s46 = sphi 0, %s43
    %s47 = sphi 0, %s46
    %s63 = sphi 0, %s47
    %s69 = sphi 0, %s71
    %s72 = sphi 0, %s69
    %s73 = sphi 0, %s72
    %s89 = sphi 0, %s73
    %s95 = sphi 0, %s97
    %s98 = sphi 0, %s95
    %s99 = sphi 0, %s98
    %s115 = sphi 0, %s99
    %s121 = sphi 0, %s123
    %s124 = sphi 0, %s121
    %s125 = sphi 0, %s124
    %s141 = sphi 0, %s125
    %s145 = sphi 0, %s145
    %s147 = sphi 0, %s145
    %s148 = sphi 0, %s147
    %s162 = sphi 0, %s148
    %s168 = sphi 0, %s170
    %s171 = sphi 0, %s168
    %s172 = sphi 0, %s171
    %s188 = sphi 0, %s172
  $region4: #{nn_forward.1} parent=0 // loop_header_branch
    %15 = sbr.rel (%p13) target = $region8
  $region5: #{nn_forward.1} parent=0 // loop_body
    %s17 = ssub.s32 %s12, 1
    %s18 = ssub.s32 %s12, 2
    %s19 = sadd.s32 %s12, 1
    %s21 = sadd.s32 %s20, 1
    %p24 = scmp.eq.s32.totalorder %s12, 3
    %p25 = scmp.ne.s32.totalorder %s20, %s22
    %p26 = scmp.eq.s32.totalorder %s12, 0
    %p27 = por %p25, %p26
    %p28 = scmp.ne.s32.totalorder %s20, %s22
    %p29 = scmp.eq.s32.totalorder %s17, 3
    %p30 = por %p28, %p29
    %p31 = scmp.ne.s32.totalorder %s22, %s23
    %p32 = scmp.eq.s32.totalorder %s17, 0
    %p33 = por %p31, %p32
    %p34 = scmp.ne.s32.totalorder %s22, %s23
    %p35 = scmp.eq.s32.totalorder %s18, 3
    %p36 = por %p34, %p35
    %p38 = scmp.ne.s32.totalorder %s23, %s37
    %p39 = scmp.eq.s32.totalorder %s18, 0
    %p40 = por %p38, %p39
    %s41 = ssub.s32 %s12, %s19
    %p42 = scmp.eq.s32.totalorder %s41, 0
    %s44 = sadd.s32 %s43, 1
    %s45 = scalar_select %p42, %s43, %s44
    %p48 = pneg %p42
    %p49 = scmp.eq.s32.totalorder %s12, 3
    %p50 = por %p48, %p49
    %p51 = scmp.ne.s32.totalorder %s43, %s46
    %p52 = scmp.eq.s32.totalorder %s12, 0
    %p53 = por %p51, %p52
    %p54 = scmp.ne.s32.totalorder %s43, %s46
    %p55 = scmp.eq.s32.totalorder %s17, 3
    %p56 = por %p54, %p55
    %p57 = scmp.ne.s32.totalorder %s46, %s47
    %p58 = scmp.eq.s32.totalorder %s17, 0
    %p59 = por %p57, %p58
    %p60 = scmp.ne.s32.totalorder %s46, %s47
    %p61 = scmp.eq.s32.totalorder %s18, 3
    %p62 = por %p60, %p61
    %p64 = scmp.ne.s32.totalorder %s47, %s63
    %p65 = scmp.eq.s32.totalorder %s18, 0
    %p66 = por %p64, %p65
    %s67 = ssub.s32 %s12, %s19
    %p68 = scmp.eq.s32.totalorder %s67, 0
    %s70 = sadd.s32 %s69, 1
    %s71 = scalar_select %p68, %s69, %s70
    %p74 = pneg %p68
    %p75 = scmp.eq.s32.totalorder %s12, 3
    %p76 = por %p74, %p75
    %p77 = scmp.ne.s32.totalorder %s69, %s72
    %p78 = scmp.eq.s32.totalorder %s12, 0
    %p79 = por %p77, %p78
    %p80 = scmp.ne.s32.totalorder %s69, %s72
    %p81 = scmp.eq.s32.totalorder %s17, 3
    %p82 = por %p80, %p81
    %p83 = scmp.ne.s32.totalorder %s72, %s73
    %p84 = scmp.eq.s32.totalorder %s17, 0
    %p85 = por %p83, %p84
    %p86 = scmp.ne.s32.totalorder %s72, %s73
    %p87 = scmp.eq.s32.totalorder %s18, 3
    %p88 = por %p86, %p87
    %p90 = scmp.ne.s32.totalorder %s73, %s89
    %p91 = scmp.eq.s32.totalorder %s18, 0
    %p92 = por %p90, %p91
    %s93 = ssub.s32 %s12, %s19
    %p94 = scmp.eq.s32.totalorder %s93, 0
    %s96 = sadd.s32 %s95, 1
    %s97 = scalar_select %p94, %s95, %s96
    %p100 = pneg %p94
    %p101 = scmp.eq.s32.totalorder %s12, 3
    %p102 = por %p100, %p101
    %p103 = scmp.ne.s32.totalorder %s95, %s98
    %p104 = scmp.eq.s32.totalorder %s12, 0
    %p105 = por %p103, %p104
    %p106 = scmp.ne.s32.totalorder %s95, %s98
    %p107 = scmp.eq.s32.totalorder %s17, 3
    %p108 = por %p106, %p107
    %p109 = scmp.ne.s32.totalorder %s98, %s99
    %p110 = scmp.eq.s32.totalorder %s17, 0
    %p111 = por %p109, %p110
    %p112 = scmp.ne.s32.totalorder %s98, %s99
    %p113 = scmp.eq.s32.totalorder %s18, 3
    %p114 = por %p112, %p113
    %p116 = scmp.ne.s32.totalorder %s99, %s115
    %p117 = scmp.eq.s32.totalorder %s18, 0
    %p118 = por %p116, %p117
    %s119 = ssub.s32 %s12, %s19
    %p120 = scmp.eq.s32.totalorder %s119, 0
    %s122 = sadd.s32 %s121, 1
    %s123 = scalar_select %p120, %s121, %s122
    %p126 = pneg %p120
    %p127 = scmp.eq.s32.totalorder %s12, 3
    %p128 = por %p126, %p127
    %p129 = scmp.ne.s32.totalorder %s121, %s124
    %p130 = scmp.eq.s32.totalorder %s12, 0
    %p131 = por %p129, %p130
    %p132 = scmp.ne.s32.totalorder %s121, %s124
    %p133 = scmp.eq.s32.totalorder %s17, 3
    %p134 = por %p132, %p133
    %p135 = scmp.ne.s32.totalorder %s124, %s125
    %p136 = scmp.eq.s32.totalorder %s17, 0
    %p137 = por %p135, %p136
    %p138 = scmp.ne.s32.totalorder %s124, %s125
    %p139 = scmp.eq.s32.totalorder %s18, 3
    %p140 = por %p138, %p139
    %p142 = scmp.ne.s32.totalorder %s125, %s141
    %p143 = scmp.eq.s32.totalorder %s18, 0
    %p144 = por %p142, %p143
    %s146 = sadd.s32 %s145, 1
    %p149 = scmp.eq.s32.totalorder %s12, 3
    %p150 = scmp.ne.s32.totalorder %s145, %s147
    %p151 = scmp.eq.s32.totalorder %s12, 0
    %p152 = por %p150, %p151
    %p153 = scmp.ne.s32.totalorder %s145, %s147
    %p154 = scmp.eq.s32.totalorder %s17, 3
    %p155 = por %p153, %p154
    %p156 = scmp.ne.s32.totalorder %s147, %s148
    %p157 = scmp.eq.s32.totalorder %s17, 0
    %p158 = por %p156, %p157
    %p159 = scmp.ne.s32.totalorder %s147, %s148
    %p160 = scmp.eq.s32.totalorder %s18, 3
    %p161 = por %p159, %p160
    %p163 = scmp.ne.s32.totalorder %s148, %s162
    %p164 = scmp.eq.s32.totalorder %s18, 0
    %p165 = por %p163, %p164
    %s166 = ssub.s32 %s12, %s19
    %p167 = scmp.eq.s32.totalorder %s166, 0
    %s169 = sadd.s32 %s168, 1
    %s170 = scalar_select %p167, %s168, %s169
    %p173 = pneg %p167
    %p174 = scmp.eq.s32.totalorder %s12, 3
    %p175 = por %p173, %p174
    %p176 = scmp.ne.s32.totalorder %s168, %s171
    %p177 = scmp.eq.s32.totalorder %s12, 0
    %p178 = por %p176, %p177
    %p179 = scmp.ne.s32.totalorder %s168, %s171
    %p180 = scmp.eq.s32.totalorder %s17, 3
    %p181 = por %p179, %p180
    %p182 = scmp.ne.s32.totalorder %s171, %s172
    %p183 = scmp.eq.s32.totalorder %s17, 0
    %p184 = por %p182, %p183
    %p185 = scmp.ne.s32.totalorder %s171, %s172
    %p186 = scmp.eq.s32.totalorder %s18, 3
    %p187 = por %p185, %p186
    %p189 = scmp.ne.s32.totalorder %s172, %s188
    %p190 = scmp.eq.s32.totalorder %s18, 0
    %p191 = por %p189, %p190
    %p192 = scmp.le.s32.totalorder 1, %s12
    %p193 = scmp.lt.s32.totalorder %s12, 5
    %p194 = pnand %p192, %p193
    %p195 = pneg %p194
    // Predicated region
    $region9: #{nn_forward.1} parent=5 // pred_check
      _
    $region10: #{nn_forward.1} parent=5 // pred_check_branch
      %197 = sbr.rel (%p194) target = $region12
    $region11: #{nn_forward.1} parent=5 // pred_region
      %s198 = ssub.s32 %s12, 1
      // Predicated region
      $region13: #{nn_forward.1} parent=11 // pred_check
        %p199 = pneg %p33
      $region14: #{nn_forward.1} parent=11 // pred_check_branch
        %201 = sbr.rel (%p199) target = $region16
      $region15: #{nn_forward.1} parent=11 // pred_region
        _
      $region16: #{nn_forward.1} parent=11 // pred_fallthru
        _
      // Predicated region
      $region17: #{nn_forward.1} parent=11 // pred_check
        %p202 = pneg %p158
      $region18: #{nn_forward.1} parent=11 // pred_check_branch
        %204 = sbr.rel (%p202) target = $region20
      $region19: #{nn_forward.1} parent=11 // pred_region
        _
      $region20: #{nn_forward.1} parent=11 // pred_fallthru
        _
    $region12: #{nn_forward.1} parent=5 // pred_fallthru
      _
    %p205 = scmp.lt.s32.totalorder %s12, 4
    // Predicated region
    $region21: #{nn_forward.1} parent=5 // pred_check
      %p206 = pneg %p205
    $region22: #{nn_forward.1} parent=5 // pred_check_branch
      %208 = sbr.rel (%p206) target = $region24
    $region23: #{nn_forward.1} parent=5 // pred_region
      // Predicated region
      $region25: #{nn_forward.1} parent=23 // pred_check
        %p209 = pneg %p53
      $region26: #{nn_forward.1} parent=23 // pred_check_branch
        %211 = sbr.rel (%p209) target = $region28
      $region27: #{nn_forward.1} parent=23 // pred_region
        %s212 = smul.u32 8, %s12
        %p213 = scmp.lt.s32.totalorder %s212, 31
        %s214 = scalar_select %p213, %s212, 31
        %s215 = smul.addr %s214, 60
        %s216 = smul.addr %s215, 4
        %s217 = scalar_lea.vmem %s1, %s216
        %s218 = smul.u32 8, %s12
      $region28: #{nn_forward.1} parent=23 // pred_fallthru
        _
      // Predicated region
      $region29: #{nn_forward.1} parent=23 // pred_check
        %p219 = pneg %p79
      $region30: #{nn_forward.1} parent=23 // pred_check_branch
        %221 = sbr.rel (%p219) target = $region32
      $region31: #{nn_forward.1} parent=23 // pred_region
        %s222 = smul.u32 8, %s12
        %p223 = scmp.lt.s32.totalorder %s222, 31
        %s224 = scalar_select %p223, %s222, 31
        %s225 = smul.addr %s224, 6
        %s226 = scalar_lea.vmem %s2, %s225
        %s227 = smul.u32 8, %s12
      $region32: #{nn_forward.1} parent=23 // pred_fallthru
        _
      // Predicated region
      $region33: #{nn_forward.1} parent=23 // pred_check
        %p228 = pneg %p105
      $region34: #{nn_forward.1} parent=23 // pred_check_branch
        %230 = sbr.rel (%p228) target = $region36
      $region35: #{nn_forward.1} parent=23 // pred_region
        %s231 = smul.u32 8, %s12
        %p232 = scmp.lt.s32.totalorder %s231, 31
        %s233 = scalar_select %p232, %s231, 31
        %s234 = smul.addr %s233, 95
        %s235 = smul.addr %s234, 4
        %s236 = scalar_lea.vmem %s3, %s235
        %s237 = smul.u32 8, %s12
      $region36: #{nn_forward.1} parent=23 // pred_fallthru
        _
      // Predicated region
      $region37: #{nn_forward.1} parent=23 // pred_check
        %p238 = pneg %p131
      $region38: #{nn_forward.1} parent=23 // pred_check_branch
        %240 = sbr.rel (%p238) target = $region40
      $region39: #{nn_forward.1} parent=23 // pred_region
        %s241 = smul.u32 8, %s12
        %p242 = scmp.lt.s32.totalorder %s241, 31
        %s243 = scalar_select %p242, %s241, 31
        %s244 = scalar_lea.vmem %s4, %s243
        %s245 = smul.u32 8, %s12
      $region40: #{nn_forward.1} parent=23 // pred_fallthru
        _
    $region24: #{nn_forward.1} parent=5 // pred_fallthru
      _
    %p246 = scmp.le.s32.totalorder 1, %s12
    %p247 = scmp.lt.s32.totalorder %s12, 5
    %p248 = pnand %p246, %p247
    %p249 = pneg %p248
    // Predicated region
    $region41: #{nn_forward.1} parent=5 // pred_check
      _
    $region42: #{nn_forward.1} parent=5 // pred_check_branch
      %251 = sbr.rel (%p248) target = $region44
    $region43: #{nn_forward.1} parent=5 // pred_region
      %s252 = ssub.s32 %s12, 1
      %p253 = pneg %p33
      %p254 = pneg %p30
      %s255 = smul.u32 8, %s17
      %p256 = scmp.lt.s32.totalorder %s255, 31
      %s257 = scalar_select %p256, %s255, 31
      %s258 = smul.addr %s257, 60
      %s259 = smul.addr %s258, 4
      %s260 = scalar_lea.vmem %s1, %s259
      %p261 = pneg %p59
      %p262 = pneg %p56
      %s263 = smul.u32 8, %s17
      %p264 = scmp.lt.s32.totalorder %s263, 31
      %s265 = scalar_select %p264, %s263, 31
      %s266 = smul.addr %s265, 6
      %s267 = scalar_lea.vmem %s2, %s266
      %p268 = pneg %p85
      %p269 = pneg %p82
      %s270 = smul.u32 8, %s17
      %p271 = scmp.lt.s32.totalorder %s270, 31
      %s272 = scalar_select %p271, %s270, 31
      %s273 = smul.addr %s272, 95
      %s274 = smul.addr %s273, 4
      %s275 = scalar_lea.vmem %s3, %s274
      %p276 = pneg %p111
      %p277 = pneg %p108
      %s278 = smul.u32 8, %s17
      %p279 = scmp.lt.s32.totalorder %s278, 31
      %s280 = scalar_select %p279, %s278, 31
      %s281 = scalar_lea.vmem %s4, %s280
      %p282 = pneg %p137
      %p283 = pneg %p134
      %p284 = pneg %p158
      %p285 = pneg %p155
      %p286 = pneg %p184
      %p287 = pneg %p181
      %s288 = smul.u32 8, %s17
      %p289 = scmp.lt.s32.totalorder %s288, 31
      %s290 = scalar_select %p289, %s288, 31
      %s291 = smul.addr %s290, 8
      %s292 = scalar_lea.vmem %s6, %s291
      %s293 = smul.u32 8, %s17
      %p294 = scmp.lt.s32.totalorder %s293, 31
      %s295 = scalar_select %p294, %s293, 31
      %s296 = smul.addr %s295, 60
      %s297 = smul.addr %s296, 4
      %s298 = scalar_lea.vmem %s1, %s297
      %s299 = smul.u32 8, %s17
      %s300 = smul.u32 8, %s17
      %p301 = scmp.lt.s32.totalorder %s300, 31
      %s302 = scalar_select %p301, %s300, 31
      %s303 = smul.addr %s302, 6
      %s304 = scalar_lea.vmem %s2, %s303
      %s305 = smul.u32 8, %s17
      %s306 = smul.u32 8, %s17
      %p307 = scmp.lt.s32.totalorder %s306, 31
      %s308 = scalar_select %p307, %s306, 31
      %s309 = smul.addr %s308, 95
      %s310 = smul.addr %s309, 4
      %s311 = scalar_lea.vmem %s3, %s310
      %s312 = smul.u32 8, %s17
      %s313 = smul.u32 8, %s17
      %p314 = scmp.lt.s32.totalorder %s313, 31
      %s315 = scalar_select %p314, %s313, 31
      %s316 = scalar_lea.vmem %s4, %s315
      %s317 = smul.u32 8, %s17
      %s318 = smul.u32 8, %s17
      %p319 = scmp.lt.s32.totalorder %s318, 31
      %s320 = scalar_select %p319, %s318, 31
      %s321 = smul.addr %s320, 8
      %s322 = scalar_lea.vmem %s6, %s321
      %s323 = smul.u32 8, %s17
      %v325 = vld [vmem:[%s0] sm:$0xff]
      %v326 = vpack.c.bf16 %v325, %v325
      %v327 = vld [vmem:[%s5] sm:$0x1]
      %v328 = vld [vmem:[%s298] sm:$0xff]
      %v329 = vld [vmem:[%s298 + $0x8] sm:$0xff]
      %v330 = vld [vmem:[%s298 + $0x10] sm:$0xff]
      %v331 = vld [vmem:[%s298 + $0x18] sm:$0xff]
      %v332 = vld [vmem:[%s298 + $0x20] sm:$0xff]
      %v333 = vld [vmem:[%s298 + $0x28] sm:$0xff]
      %v334 = vld [vmem:[%s298 + $0x30] sm:$0xff]
      %v335 = vld [vmem:[%s298 + $0x38] sm:$0xff]
      %v336 = vld [vmem:[%s298 + $0x40] sm:$0xff]
      %v337 = vld [vmem:[%s298 + $0x48] sm:$0xff]
      %v338 = vld [vmem:[%s298 + $0x50] sm:$0xff]
      %v339 = vld [vmem:[%s298 + $0x58] sm:$0xff]
      %v340 = vld [vmem:[%s298 + $0x60] sm:$0xff]
      %v341 = vld [vmem:[%s298 + $0x68] sm:$0xff]
      %v342 = vld [vmem:[%s298 + $0x70] sm:$0xff]
      %v343 = vld [vmem:[%s298 + $0x78] sm:$0xff]
      %v344 = vld [vmem:[%s298 + $0x80] sm:$0xff]
      %v345 = vld [vmem:[%s298 + $0x88] sm:$0xff]
      %v346 = vld [vmem:[%s298 + $0x90] sm:$0xff]
      %v347 = vld [vmem:[%s298 + $0x98] sm:$0xff]
      %v348 = vld [vmem:[%s298 + $0xa0] sm:$0xff]
      %v349 = vld [vmem:[%s298 + $0xa8] sm:$0xff]
      %v350 = vld [vmem:[%s298 + $0xb0] sm:$0xff]
      %v351 = vld [vmem:[%s298 + $0xb8] sm:$0xff]
      %v352 = vld [vmem:[%s298 + $0xc0] sm:$0xff]
      %v353 = vld [vmem:[%s298 + $0xc8] sm:$0xff]
      %v354 = vld [vmem:[%s298 + $0xd0] sm:$0xff]
      %v355 = vld [vmem:[%s298 + $0xd8] sm:$0x33]
      %v356 = vld [vmem:[%s298 + $0xe0] sm:$0x33]
      %v357 = vld [vmem:[%s298 + $0xe8] sm:$0x33]
      %v358 = vld [vmem:[%s304] sm:$0x3f]
      %v360 = vperm.slane %v358, 0
      %v361 = vperm.slane %v358, 1
      %v362 = vperm.slane %v358, 2
      %v363 = vperm.slane %v358, 3
      %v364 = vperm.slane %v358, 4
      %v365 = vperm.slane %v358, 5
      %v402 = vunpack.c.l.b16 %v328
      %v403 = vunpack.c.h.b16 %v328
      %v404 = vunpack.c.l.b16 %v329
      %v405 = vunpack.c.h.b16 %v329
      %v406 = vunpack.c.l.b16 %v330
      %v407 = vunpack.c.h.b16 %v330
      %v408 = vunpack.c.l.b16 %v331
      %v409 = vunpack.c.h.b16 %v331
      %v410 = vunpack.c.l.b16 %v332
      %v411 = vunpack.c.h.b16 %v332
      %v412 = vunpack.c.l.b16 %v333
      %v413 = vunpack.c.h.b16 %v333
      %v414 = vunpack.c.l.b16 %v334
      %v415 = vunpack.c.h.b16 %v334
      %v416 = vunpack.c.l.b16 %v335
      %v417 = vunpack.c.h.b16 %v335
      %v418 = vunpack.c.l.b16 %v336
      %v419 = vunpack.c.h.b16 %v336
      %v420 = vunpack.c.l.b16 %v337
      %v421 = vunpack.c.h.b16 %v337
      %v422 = vunpack.c.l.b16 %v338
      %v423 = vunpack.c.h.b16 %v338
      %v424 = vunpack.c.l.b16 %v339
      %v425 = vunpack.c.h.b16 %v339
      %v426 = vunpack.c.l.b16 %v340
      %v427 = vunpack.c.h.b16 %v340
      %v428 = vunpack.c.l.b16 %v341
      %v429 = vunpack.c.h.b16 %v341
      %v430 = vunpack.c.l.b16 %v342
      %v431 = vunpack.c.h.b16 %v342
      %v432 = vunpack.c.l.b16 %v343
      %v433 = vunpack.c.h.b16 %v343
      %v434 = vunpack.c.l.b16 %v344
      %v435 = vunpack.c.h.b16 %v344
      %v436 = vunpack.c.l.b16 %v345
      %v437 = vunpack.c.h.b16 %v345
      %v438 = vunpack.c.l.b16 %v346
      %v439 = vunpack.c.h.b16 %v346
      %v440 = vunpack.c.l.b16 %v347
      %v441 = vunpack.c.h.b16 %v347
      %v442 = vunpack.c.l.b16 %v348
      %v443 = vunpack.c.h.b16 %v348
      %v444 = vunpack.c.l.b16 %v349
      %v445 = vunpack.c.h.b16 %v349
      %v446 = vunpack.c.l.b16 %v350
      %v447 = vunpack.c.h.b16 %v350
      %v448 = vunpack.c.l.b16 %v351
      %v449 = vunpack.c.h.b16 %v351
      %v450 = vunpack.c.l.b16 %v352
      %v451 = vunpack.c.h.b16 %v352
      %v452 = vunpack.c.l.b16 %v353
      %v453 = vunpack.c.h.b16 %v353
      %v454 = vunpack.c.l.b16 %v354
      %v455 = vunpack.c.h.b16 %v354
      %v456 = vunpack.c.l.b16 %v355
      %v457 = vunpack.c.h.b16 %v355
      %v458 = vunpack.c.l.b16 %v356
      %v459 = vunpack.c.h.b16 %v356
      %v460 = vunpack.c.l.b16 %v357
      %v461 = vunpack.c.h.b16 %v357
      %v462 = vpack.c.b16 %v408, %v402
      %v463 = vpack.c.b16 %v409, %v403
      %v464 = vpack.c.b16 %v410, %v404
      %v465 = vpack.c.b16 %v411, %v405
      %v466 = vpack.c.b16 %v412, %v406
      %v467 = vpack.c.b16 %v413, %v407
      %v468 = vpack.c.b16 %v420, %v414
      %v469 = vpack.c.b16 %v421, %v415
      %v470 = vpack.c.b16 %v422, %v416
      %v471 = vpack.c.b16 %v423, %v417
      %v472 = vpack.c.b16 %v424, %v418
      %v473 = vpack.c.b16 %v425, %v419
      %v474 = vpack.c.b16 %v432, %v426
      %v475 = vpack.c.b16 %v433, %v427
      %v476 = vpack.c.b16 %v434, %v428
      %v477 = vpack.c.b16 %v435, %v429
      %v478 = vpack.c.b16 %v436, %v430
      %v479 = vpack.c.b16 %v437, %v431
      %v480 = vpack.c.b16 %v444, %v438
      %v481 = vpack.c.b16 %v445, %v439
      %v482 = vpack.c.b16 %v446, %v440
      %v483 = vpack.c.b16 %v447, %v441
      %v484 = vpack.c.b16 %v448, %v442
      %v485 = vpack.c.b16 %v449, %v443
      %v486 = vpack.c.b16 %v456, %v450
      %v487 = vpack.c.b16 %v457, %v451
      %v488 = vpack.c.b16 %v458, %v452
      %v489 = vpack.c.b16 %v459, %v453
      %v490 = vpack.c.b16 %v460, %v454
      %v491 = vpack.c.b16 %v461, %v455
      %vm516 = vcmask 621568
      %v518 = vsel %vm516, %v326, 0
      %vm520 = vcmask 1045504
      %v522 = vsel %vm520, %v486, 0
      %v525 = vsel %vm520, %v487, 0
      %v528 = vsel %vm520, %v488, 0
      %v531 = vsel %vm520, %v489, 0
      %v534 = vsel %vm520, %v490, 0
      %v537 = vsel %vm520, %v491, 0
      %539 = vmatpush.bf16.msra.mxu0 0
      %540 = vmatpush.bf16.msra.mxu0 0
      %541 = vmatpush.bf16.msra.mxu0 0
      %542 = vmatpush.bf16.msra.mxu0 %v522
      %543 = vmatpush.bf16.msra.mxu0 %v480
      %544 = vmatpush.bf16.msra.mxu0 %v474
      %545 = vmatpush.bf16.msra.mxu0 %v468
      %546 = vmatpush.bf16.msra.mxu0 %v462
      %547 = vmatmul.bf16.gmra.mxu0 %v518
      %v548 = vpop.f32.mrf.mxu0
      %v549 = vadd.f32 %v360, %v548
      %v550 = vpop.f32.mrf.mxu0
      %551 = vdwg.mxu0
      %552 = vmatpush.bf16.msra.mxu0 0
      %553 = vmatpush.bf16.msra.mxu0 0
      %554 = vmatpush.bf16.msra.mxu0 0
      %555 = vmatpush.bf16.msra.mxu0 %v525
      %556 = vmatpush.bf16.msra.mxu0 %v481
      %557 = vmatpush.bf16.msra.mxu0 %v475
      %558 = vmatpush.bf16.msra.mxu0 %v469
      %559 = vmatpush.bf16.msra.mxu0 %v463
      %560 = vmatmul.bf16.gmra.mxu0 %v518
      %v561 = vpop.f32.mrf.mxu0
      %v562 = vadd.f32 %v361, %v561
      %v563 = vpop.f32.mrf.mxu0
      %564 = vdwg.mxu0
      %565 = vmatpush.bf16.msra.mxu0 0
      %566 = vmatpush.bf16.msra.mxu0 0
      %567 = vmatpush.bf16.msra.mxu0 0
      %568 = vmatpush.bf16.msra.mxu0 %v528
      %569 = vmatpush.bf16.msra.mxu0 %v482
      %570 = vmatpush.bf16.msra.mxu0 %v476
      %571 = vmatpush.bf16.msra.mxu0 %v470
      %572 = vmatpush.bf16.msra.mxu0 %v464
      %573 = vmatmul.bf16.gmra.mxu0 %v518
      %v574 = vpop.f32.mrf.mxu0
      %v575 = vadd.f32 %v362, %v574
      %v576 = vpop.f32.mrf.mxu0
      %577 = vdwg.mxu0
      %578 = vmatpush.bf16.msra.mxu0 0
      %579 = vmatpush.bf16.msra.mxu0 0
      %580 = vmatpush.bf16.msra.mxu0 0
      %581 = vmatpush.bf16.msra.mxu0 %v531
      %582 = vmatpush.bf16.msra.mxu0 %v483
      %583 = vmatpush.bf16.msra.mxu0 %v477
      %584 = vmatpush.bf16.msra.mxu0 %v471
      %585 = vmatpush.bf16.msra.mxu0 %v465
      %586 = vmatmul.bf16.gmra.mxu0 %v518
      %v587 = vpop.f32.mrf.mxu0
      %v588 = vadd.f32 %v363, %v587
      %v589 = vpop.f32.mrf.mxu0
      %590 = vdwg.mxu0
      %591 = vmatpush.bf16.msra.mxu0 0
      %592 = vmatpush.bf16.msra.mxu0 0
      %593 = vmatpush.bf16.msra.mxu0 0
      %594 = vmatpush.bf16.msra.mxu0 %v534
      %595 = vmatpush.bf16.msra.mxu0 %v484
      %596 = vmatpush.bf16.msra.mxu0 %v478
      %597 = vmatpush.bf16.msra.mxu0 %v472
      %598 = vmatpush.bf16.msra.mxu0 %v466
      %599 = vmatmul.bf16.gmra.mxu0 %v518
      %v600 = vpop.f32.mrf.mxu0
      %v601 = vadd.f32 %v364, %v600
      %v602 = vpop.f32.mrf.mxu0
      %603 = vdwg.mxu0
      %604 = vmatpush.bf16.msra.mxu0 0
      %605 = vmatpush.bf16.msra.mxu0 0
      %606 = vmatpush.bf16.msra.mxu0 0
      %607 = vmatpush.bf16.msra.mxu0 %v537
      %608 = vmatpush.bf16.msra.mxu0 %v485
      %609 = vmatpush.bf16.msra.mxu0 %v479
      %610 = vmatpush.bf16.msra.mxu0 %v473
      %611 = vmatpush.bf16.msra.mxu0 %v467
      %612 = vmatmul.bf16.gmra.mxu0 %v518
      %v613 = vpop.f32.mrf.mxu0
      %v614 = vadd.f32 %v365, %v613
      %v615 = vpop.f32.mrf.mxu0
      %616 = vdwg.mxu0
      %v617 = vtanh.pop %v549
      %v618 = vtanh.pop %v562
      %v619 = vtanh.pop %v575
      %v620 = vtanh.pop %v588
      %v621 = vtanh.pop %v601
      %v622 = vtanh.pop %v614
      %v623 = vpack.c.bf16 %v617, %v617
      %v624 = vpack.c.bf16 %v618, %v618
      %v625 = vpack.c.bf16 %v619, %v619
      %v626 = vpack.c.bf16 %v620, %v620
      %v627 = vpack.c.bf16 %v621, %v621
      %v628 = vpack.c.bf16 %v622, %v622
      %v629 = vld [vmem:[%s311] sm:$0xf]
      %v630 = vld [vmem:[%s311 + $0x4] sm:$0xf]
      %v631 = vld [vmem:[%s311 + $0x8] sm:$0xf]
      %v632 = vld [vmem:[%s311 + $0xc] sm:$0xf]
      %v633 = vld [vmem:[%s311 + $0x10] sm:$0xf]
      %v634 = vld [vmem:[%s311 + $0x14] sm:$0xf]
      %v635 = vld [vmem:[%s311 + $0x18] sm:$0xf]
      %v636 = vld [vmem:[%s311 + $0x1c] sm:$0xf]
      %v637 = vld [vmem:[%s311 + $0x20] sm:$0xf]
      %v638 = vld [vmem:[%s311 + $0x24] sm:$0xf]
      %v639 = vld [vmem:[%s311 + $0x28] sm:$0xf]
      %v640 = vld [vmem:[%s311 + $0x2c] sm:$0xf]
      %v641 = vld [vmem:[%s311 + $0x30] sm:$0xf]
      %v642 = vld [vmem:[%s311 + $0x34] sm:$0xf]
      %v643 = vld [vmem:[%s311 + $0x38] sm:$0xf]
      %v644 = vld [vmem:[%s311 + $0x3c] sm:$0xf]
      %v645 = vld [vmem:[%s311 + $0x40] sm:$0xf]
      %v646 = vld [vmem:[%s311 + $0x44] sm:$0xf]
      %v647 = vld [vmem:[%s311 + $0x48] sm:$0xf]
      %v648 = vld [vmem:[%s311 + $0x4c] sm:$0xf]
      %v649 = vld [vmem:[%s311 + $0x50] sm:$0xf]
      %v650 = vld [vmem:[%s311 + $0x54] sm:$0xf]
      %v651 = vld [vmem:[%s311 + $0x58] sm:$0xf]
      %v652 = vld [vmem:[%s311 + $0x5c] sm:$0xf]
      %v653 = vld [vmem:[%s311 + $0x60] sm:$0xf]
      %v654 = vld [vmem:[%s311 + $0x64] sm:$0xf]
      %v655 = vld [vmem:[%s311 + $0x68] sm:$0xf]
      %v656 = vld [vmem:[%s311 + $0x6c] sm:$0xf]
      %v657 = vld [vmem:[%s311 + $0x70] sm:$0xf]
      %v658 = vld [vmem:[%s311 + $0x74] sm:$0xf]
      %v659 = vld [vmem:[%s311 + $0x78] sm:$0xf]
      %v660 = vld [vmem:[%s311 + $0x7c] sm:$0xf]
      %v661 = vld [vmem:[%s311 + $0x80] sm:$0xf]
      %v662 = vld [vmem:[%s311 + $0x84] sm:$0xf]
      %v663 = vld [vmem:[%s311 + $0x88] sm:$0xf]
      %v664 = vld [vmem:[%s311 + $0x8c] sm:$0xf]
      %v665 = vld [vmem:[%s311 + $0x90] sm:$0xf]
      %v666 = vld [vmem:[%s311 + $0x94] sm:$0xf]
      %v667 = vld [vmem:[%s311 + $0x98] sm:$0xf]
      %v668 = vld [vmem:[%s311 + $0x9c] sm:$0xf]
      %v669 = vld [vmem:[%s311 + $0xa0] sm:$0xf]
      %v670 = vld [vmem:[%s311 + $0xa4] sm:$0xf]
      %v671 = vld [vmem:[%s311 + $0xa8] sm:$0xf]
      %v672 = vld [vmem:[%s311 + $0xac] sm:$0xf]
      %v673 = vld [vmem:[%s311 + $0xb0] sm:$0xf]
      %v674 = vld [vmem:[%s311 + $0xb4] sm:$0xf]
      %v675 = vld [vmem:[%s311 + $0xb8] sm:$0xf]
      %v676 = vld [vmem:[%s311 + $0xbc] sm:$0xf]
      %v677 = vld [vmem:[%s311 + $0xc0] sm:$0xf]
      %v678 = vld [vmem:[%s311 + $0xc4] sm:$0xf]
      %v679 = vld [vmem:[%s311 + $0xc8] sm:$0xf]
      %v680 = vld [vmem:[%s311 + $0xcc] sm:$0xf]
      %v681 = vld [vmem:[%s311 + $0xd0] sm:$0xf]
      %v682 = vld [vmem:[%s311 + $0xd4] sm:$0xf]
      %v683 = vld [vmem:[%s311 + $0xd8] sm:$0xf]
      %v684 = vld [vmem:[%s311 + $0xdc] sm:$0xf]
      %v685 = vld [vmem:[%s311 + $0xe0] sm:$0xf]
      %v686 = vld [vmem:[%s311 + $0xe4] sm:$0xf]
      %v687 = vld [vmem:[%s311 + $0xe8] sm:$0xf]
      %v688 = vld [vmem:[%s311 + $0xec] sm:$0xf]
      %v689 = vld [vmem:[%s311 + $0xf0] sm:$0xf]
      %v690 = vld [vmem:[%s311 + $0xf4] sm:$0xf]
      %v691 = vld [vmem:[%s311 + $0xf8] sm:$0xf]
      %v692 = vld [vmem:[%s311 + $0xfc] sm:$0xf]
      %v693 = vld [vmem:[%s311 + $0x100] sm:$0xf]
      %v694 = vld [vmem:[%s311 + $0x104] sm:$0xf]
      %v695 = vld [vmem:[%s311 + $0x108] sm:$0xf]
      %v696 = vld [vmem:[%s311 + $0x10c] sm:$0xf]
      %v697 = vld [vmem:[%s311 + $0x110] sm:$0xf]
      %v698 = vld [vmem:[%s311 + $0x114] sm:$0xf]
      %v699 = vld [vmem:[%s311 + $0x118] sm:$0xf]
      %v700 = vld [vmem:[%s311 + $0x11c] sm:$0xf]
      %v701 = vld [vmem:[%s311 + $0x120] sm:$0xf]
      %v702 = vld [vmem:[%s311 + $0x124] sm:$0xf]
      %v703 = vld [vmem:[%s311 + $0x128] sm:$0xf]
      %v704 = vld [vmem:[%s311 + $0x12c] sm:$0xf]
      %v705 = vld [vmem:[%s311 + $0x130] sm:$0xf]
      %v706 = vld [vmem:[%s311 + $0x134] sm:$0xf]
      %v707 = vld [vmem:[%s311 + $0x138] sm:$0xf]
      %v708 = vld [vmem:[%s311 + $0x13c] sm:$0xf]
      %v709 = vld [vmem:[%s311 + $0x140] sm:$0xf]
      %v710 = vld [vmem:[%s311 + $0x144] sm:$0xf]
      %v711 = vld [vmem:[%s311 + $0x148] sm:$0xf]
      %v712 = vld [vmem:[%s311 + $0x14c] sm:$0xf]
      %v713 = vld [vmem:[%s311 + $0x150] sm:$0xf]
      %v714 = vld [vmem:[%s311 + $0x154] sm:$0xf]
      %v715 = vld [vmem:[%s311 + $0x158] sm:$0xf]
      %v716 = vld [vmem:[%s311 + $0x15c] sm:$0xf]
      %v717 = vld [vmem:[%s311 + $0x160] sm:$0xf]
      %v718 = vld [vmem:[%s311 + $0x164] sm:$0xf]
      %v719 = vld [vmem:[%s311 + $0x168] sm:$0xf]
      %v720 = vld [vmem:[%s311 + $0x16c] sm:$0xf]
      %v721 = vld [vmem:[%s311 + $0x170] sm:$0xf]
      %v722 = vld [vmem:[%s311 + $0x174] sm:$0xf]
      %v723 = vld [vmem:[%s311 + $0x178] sm:$0xf]
      %v724 = vld [vmem:[%s316] sm:$0x1]
      %v726 = vperm.slane %v724, 0
      %v823 = vunpack.c.l.b16 %v629
      %v824 = vunpack.c.l.b16 %v630
      %v825 = vunpack.c.l.b16 %v631
      %v826 = vunpack.c.l.b16 %v632
      %v827 = vunpack.c.l.b16 %v633
      %v828 = vunpack.c.l.b16 %v634
      %v829 = vunpack.c.l.b16 %v635
      %v830 = vunpack.c.l.b16 %v636
      %v831 = vunpack.c.l.b16 %v637
      %v832 = vunpack.c.l.b16 %v638
      %v833 = vunpack.c.l.b16 %v639
      %v834 = vunpack.c.l.b16 %v640
      %v835 = vunpack.c.l.b16 %v641
      %v836 = vunpack.c.l.b16 %v642
      %v837 = vunpack.c.l.b16 %v643
      %v838 = vunpack.c.l.b16 %v644
      %v839 = vunpack.c.l.b16 %v645
      %v840 = vunpack.c.l.b16 %v646
      %v841 = vunpack.c.l.b16 %v647
      %v842 = vunpack.c.l.b16 %v648
      %v843 = vunpack.c.l.b16 %v649
      %v844 = vunpack.c.l.b16 %v650
      %v845 = vunpack.c.l.b16 %v651
      %v846 = vunpack.c.l.b16 %v652
      %v847 = vunpack.c.l.b16 %v653
      %v848 = vunpack.c.l.b16 %v654
      %v849 = vunpack.c.l.b16 %v655
      %v850 = vunpack.c.l.b16 %v656
      %v851 = vunpack.c.l.b16 %v657
      %v852 = vunpack.c.l.b16 %v658
      %v853 = vunpack.c.l.b16 %v659
      %v854 = vunpack.c.l.b16 %v660
      %v855 = vunpack.c.l.b16 %v661
      %v856 = vunpack.c.l.b16 %v662
      %v857 = vunpack.c.l.b16 %v663
      %v858 = vunpack.c.l.b16 %v664
      %v859 = vunpack.c.l.b16 %v665
      %v860 = vunpack.c.l.b16 %v666
      %v861 = vunpack.c.l.b16 %v667
      %v862 = vunpack.c.l.b16 %v668
      %v863 = vunpack.c.l.b16 %v669
      %v864 = vunpack.c.l.b16 %v670
      %v865 = vunpack.c.l.b16 %v671
      %v866 = vunpack.c.l.b16 %v672
      %v867 = vunpack.c.l.b16 %v673
      %v868 = vunpack.c.l.b16 %v674
      %v869 = vunpack.c.l.b16 %v675
      %v870 = vunpack.c.l.b16 %v676
      %v871 = vunpack.c.l.b16 %v677
      %v872 = vunpack.c.l.b16 %v678
      %v873 = vunpack.c.l.b16 %v679
      %v874 = vunpack.c.l.b16 %v680
      %v875 = vunpack.c.l.b16 %v681
      %v876 = vunpack.c.l.b16 %v682
      %v877 = vunpack.c.l.b16 %v683
      %v878 = vunpack.c.l.b16 %v684
      %v879 = vunpack.c.l.b16 %v685
      %v880 = vunpack.c.l.b16 %v686
      %v881 = vunpack.c.l.b16 %v687
      %v882 = vunpack.c.l.b16 %v688
      %v883 = vunpack.c.l.b16 %v689
      %v884 = vunpack.c.l.b16 %v690
      %v885 = vunpack.c.l.b16 %v691
      %v886 = vunpack.c.l.b16 %v692
      %v887 = vunpack.c.l.b16 %v693
      %v888 = vunpack.c.l.b16 %v694
      %v889 = vunpack.c.l.b16 %v695
      %v890 = vunpack.c.l.b16 %v696
      %v891 = vunpack.c.l.b16 %v697
      %v892 = vunpack.c.l.b16 %v698
      %v893 = vunpack.c.l.b16 %v699
      %v894 = vunpack.c.l.b16 %v700
      %v895 = vunpack.c.l.b16 %v701
      %v896 = vunpack.c.l.b16 %v702
      %v897 = vunpack.c.l.b16 %v703
      %v898 = vunpack.c.l.b16 %v704
      %v899 = vunpack.c.l.b16 %v705
      %v900 = vunpack.c.l.b16 %v706
      %v901 = vunpack.c.l.b16 %v707
      %v902 = vunpack.c.l.b16 %v708
      %v903 = vunpack.c.l.b16 %v709
      %v904 = vunpack.c.l.b16 %v710
      %v905 = vunpack.c.l.b16 %v711
      %v906 = vunpack.c.l.b16 %v712
      %v907 = vunpack.c.l.b16 %v713
      %v908 = vunpack.c.l.b16 %v714
      %v909 = vunpack.c.l.b16 %v715
      %v910 = vunpack.c.l.b16 %v716
      %v911 = vunpack.c.l.b16 %v717
      %v912 = vunpack.c.l.b16 %v718
      %v913 = vunpack.c.l.b16 %v719
      %v914 = vunpack.c.l.b16 %v720
      %v915 = vunpack.c.l.b16 %v721
      %v916 = vunpack.c.l.b16 %v722
      %v917 = vunpack.c.l.b16 %v723
      %v918 = vpack.c.b16 %v824, %v823
      %v919 = vpack.c.b16 %v826, %v825
      %v920 = vpack.c.b16 %v828, %v827
      %v921 = vpack.c.b16 %v830, %v829
      %v922 = vpack.c.b16 %v832, %v831
      %v923 = vpack.c.b16 %v834, %v833
      %v924 = vpack.c.b16 %v836, %v835
      %v925 = vpack.c.b16 %v838, %v837
      %v926 = vpack.c.b16 %v840, %v839
      %v927 = vpack.c.b16 %v842, %v841
      %v928 = vpack.c.b16 %v844, %v843
      %v929 = vpack.c.b16 %v846, %v845
      %v930 = vpack.c.b16 %v848, %v847
      %v931 = vpack.c.b16 %v850, %v849
      %v932 = vpack.c.b16 %v852, %v851
      %v933 = vpack.c.b16 %v854, %v853
      %v934 = vpack.c.b16 %v856, %v855
      %v935 = vpack.c.b16 %v858, %v857
      %v936 = vpack.c.b16 %v860, %v859
      %v937 = vpack.c.b16 %v862, %v861
      %v938 = vpack.c.b16 %v864, %v863
      %v939 = vpack.c.b16 %v866, %v865
      %v940 = vpack.c.b16 %v868, %v867
      %v941 = vpack.c.b16 %v870, %v869
      %v942 = vpack.c.b16 %v872, %v871
      %v943 = vpack.c.b16 %v874, %v873
      %v944 = vpack.c.b16 %v876, %v875
      %v945 = vpack.c.b16 %v878, %v877
      %v946 = vpack.c.b16 %v880, %v879
      %v947 = vpack.c.b16 %v882, %v881
      %v948 = vpack.c.b16 %v884, %v883
      %v949 = vpack.c.b16 %v886, %v885
      %v950 = vpack.c.b16 %v888, %v887
      %v951 = vpack.c.b16 %v890, %v889
      %v952 = vpack.c.b16 %v892, %v891
      %v953 = vpack.c.b16 %v894, %v893
      %v954 = vpack.c.b16 %v896, %v895
      %v955 = vpack.c.b16 %v898, %v897
      %v956 = vpack.c.b16 %v900, %v899
      %v957 = vpack.c.b16 %v902, %v901
      %v958 = vpack.c.b16 %v904, %v903
      %v959 = vpack.c.b16 %v906, %v905
      %v960 = vpack.c.b16 %v908, %v907
      %v961 = vpack.c.b16 %v910, %v909
      %v962 = vpack.c.b16 %v912, %v911
      %v963 = vpack.c.b16 %v914, %v913
      %v964 = vpack.c.b16 %v916, %v915
      %v965 = vpack.c.b16 %v917, %v917
      %vm1013 = vcmask 982016
      %v1015 = vsel %vm1013, %v628, 0
      %vm1017 = vcmask 1043456
      %v1019 = vsel %vm1017, %v965, 0
      %1021 = vmatpush.bf16.msra.mxu0 %v925
      %1022 = vmatpush.bf16.msra.mxu0 %v924
      %1023 = vmatpush.bf16.msra.mxu0 %v923
      %1024 = vmatpush.bf16.msra.mxu0 %v922
      %1025 = vmatpush.bf16.msra.mxu0 %v921
      %1026 = vmatpush.bf16.msra.mxu0 %v920
      %1027 = vmatpush.bf16.msra.mxu0 %v919
      %1028 = vmatpush.bf16.msra.mxu0 %v918
      %1029 = vmatmul.bf16.gmra.mxu0 %v623
      %v1030 = vpop.f32.mrf.mxu0
      %v1031 = vadd.f32 %v726, %v1030
      %v1032 = vpop.f32.mrf.mxu0
      %1033 = vdwg.mxu0
      %1034 = vmatpush.bf16.msra.mxu0 %v933
      %1035 = vmatpush.bf16.msra.mxu0 %v932
      %1036 = vmatpush.bf16.msra.mxu0 %v931
      %1037 = vmatpush.bf16.msra.mxu0 %v930
      %1038 = vmatpush.bf16.msra.mxu0 %v929
      %1039 = vmatpush.bf16.msra.mxu0 %v928
      %1040 = vmatpush.bf16.msra.mxu0 %v927
      %1041 = vmatpush.bf16.msra.mxu0 %v926
      %1042 = vmatmul.bf16.gmra.mxu0 %v624
      %v1043 = vpop.f32.mrf.mxu0
      %v1044 = vadd.f32 %v1031, %v1043
      %v1045 = vpop.f32.mrf.mxu0
      %1046 = vdwg.mxu0
      %1047 = vmatpush.bf16.msra.mxu0 %v941
      %1048 = vmatpush.bf16.msra.mxu0 %v940
      %1049 = vmatpush.bf16.msra.mxu0 %v939
      %1050 = vmatpush.bf16.msra.mxu0 %v938
      %1051 = vmatpush.bf16.msra.mxu0 %v937
      %1052 = vmatpush.bf16.msra.mxu0 %v936
      %1053 = vmatpush.bf16.msra.mxu0 %v935
      %1054 = vmatpush.bf16.msra.mxu0 %v934
      %1055 = vmatmul.bf16.gmra.mxu0 %v625
      %v1056 = vpop.f32.mrf.mxu0
      %v1057 = vadd.f32 %v1044, %v1056
      %v1058 = vpop.f32.mrf.mxu0
      %1059 = vdwg.mxu0
      %1060 = vmatpush.bf16.msra.mxu0 %v949
      %1061 = vmatpush.bf16.msra.mxu0 %v948
      %1062 = vmatpush.bf16.msra.mxu0 %v947
      %1063 = vmatpush.bf16.msra.mxu0 %v946
      %1064 = vmatpush.bf16.msra.mxu0 %v945
      %1065 = vmatpush.bf16.msra.mxu0 %v944
      %1066 = vmatpush.bf16.msra.mxu0 %v943
      %1067 = vmatpush.bf16.msra.mxu0 %v942
      %1068 = vmatmul.bf16.gmra.mxu0 %v626
      %v1069 = vpop.f32.mrf.mxu0
      %v1070 = vadd.f32 %v1057, %v1069
      %v1071 = vpop.f32.mrf.mxu0
      %1072 = vdwg.mxu0
      %1073 = vmatpush.bf16.msra.mxu0 %v957
      %1074 = vmatpush.bf16.msra.mxu0 %v956
      %1075 = vmatpush.bf16.msra.mxu0 %v955
      %1076 = vmatpush.bf16.msra.mxu0 %v954
      %1077 = vmatpush.bf16.msra.mxu0 %v953
      %1078 = vmatpush.bf16.msra.mxu0 %v952
      %1079 = vmatpush.bf16.msra.mxu0 %v951
      %1080 = vmatpush.bf16.msra.mxu0 %v950
      %1081 = vmatmul.bf16.gmra.mxu0 %v627
      %v1082 = vpop.f32.mrf.mxu0
      %v1083 = vadd.f32 %v1070, %v1082
      %v1084 = vpop.f32.mrf.mxu0
      %1085 = vdwg.mxu0
      %1086 = vmatpush.bf16.msra.mxu0 %v1019
      %1087 = vmatpush.bf16.msra.mxu0 %v964
      %1088 = vmatpush.bf16.msra.mxu0 %v963
      %1089 = vmatpush.bf16.msra.mxu0 %v962
      %1090 = vmatpush.bf16.msra.mxu0 %v961
      %1091 = vmatpush.bf16.msra.mxu0 %v960
      %1092 = vmatpush.bf16.msra.mxu0 %v959
      %1093 = vmatpush.bf16.msra.mxu0 %v958
      %1094 = vmatmul.bf16.gmra.mxu0 %v1015
      %v1095 = vpop.f32.mrf.mxu0
      %v1096 = vadd.f32 %v1083, %v1095
      %v1097 = vpop.f32.mrf.mxu0
      %1098 = vdwg.mxu0
      %v1099 = vmax.f32 %v1096, 0.0
      %v1101 = vperm.slane %v327, 0
      %v1103 = vmul.f32 %v1099, %v1101
      %v1104 = vsel %vm516, %v1103, 0.0
      %1105 = vadd.xlane.f32.xlu0 %v1104
      %v1106 = vpop.xlane.xlu0 %1105
      %v1107 = vrcp.pop %v1106
      %v1108 = vmul.f32 %v1099, %v1107
      %1109 = vst.msk [vmem:[%s322] sm:$0xff] %vm516, %v1108
      %s1110 = scalar_lea.vmem %s298, 240
      %v1111 = vld [vmem:[%s1110] sm:$0xff]
      %v1112 = vld [vmem:[%s1110 + $0x8] sm:$0xff]
      %v1113 = vld [vmem:[%s1110 + $0x10] sm:$0xff]
      %v1114 = vld [vmem:[%s1110 + $0x18] sm:$0xff]
      %v1115 = vld [vmem:[%s1110 + $0x20] sm:$0xff]
      %v1116 = vld [vmem:[%s1110 + $0x28] sm:$0xff]
      %v1117 = vld [vmem:[%s1110 + $0x30] sm:$0xff]
      %v1118 = vld [vmem:[%s1110 + $0x38] sm:$0xff]
      %v1119 = vld [vmem:[%s1110 + $0x40] sm:$0xff]
      %v1120 = vld [vmem:[%s1110 + $0x48] sm:$0xff]
      %v1121 = vld [vmem:[%s1110 + $0x50] sm:$0xff]
      %v1122 = vld [vmem:[%s1110 + $0x58] sm:$0xff]
      %v1123 = vld [vmem:[%s1110 + $0x60] sm:$0xff]
      %v1124 = vld [vmem:[%s1110 + $0x68] sm:$0xff]
      %v1125 = vld [vmem:[%s1110 + $0x70] sm:$0xff]
      %v1126 = vld [vmem:[%s1110 + $0x78] sm:$0xff]
      %v1127 = vld [vmem:[%s1110 + $0x80] sm:$0xff]
      %v1128 = vld [vmem:[%s1110 + $0x88] sm:$0xff]
      %v1129 = vld [vmem:[%s1110 + $0x90] sm:$0xff]
      %v1130 = vld [vmem:[%s1110 + $0x98] sm:$0xff]
      %v1131 = vld [vmem:[%s1110 + $0xa0] sm:$0xff]
      %v1132 = vld [vmem:[%s1110 + $0xa8] sm:$0xff]
      %v1133 = vld [vmem:[%s1110 + $0xb0] sm:$0xff]
      %v1134 = vld [vmem:[%s1110 + $0xb8] sm:$0xff]
      %v1135 = vld [vmem:[%s1110 + $0xc0] sm:$0xff]
      %v1136 = vld [vmem:[%s1110 + $0xc8] sm:$0xff]
      %v1137 = vld [vmem:[%s1110 + $0xd0] sm:$0xff]
      %v1138 = vld [vmem:[%s1110 + $0xd8] sm:$0x33]
      %v1139 = vld [vmem:[%s1110 + $0xe0] sm:$0x33]
      %v1140 = vld [vmem:[%s1110 + $0xe8] sm:$0x33]
      %s1141 = scalar_lea.vmem %s304, 6
      %v1142 = vld [vmem:[%s1141] sm:$0x3f]
      %v1144 = vperm.slane %v1142, 0
      %v1145 = vperm.slane %v1142, 1
      %v1146 = vperm.slane %v1142, 2
      %v1147 = vperm.slane %v1142, 3
      %v1148 = vperm.slane %v1142, 4
      %v1149 = vperm.slane %v1142, 5
      %v1186 = vunpack.c.l.b16 %v1111
      %v1187 = vunpack.c.h.b16 %v1111
      %v1188 = vunpack.c.l.b16 %v1112
      %v1189 = vunpack.c.h.b16 %v1112
      %v1190 = vunpack.c.l.b16 %v1113
      %v1191 = vunpack.c.h.b16 %v1113
      %v1192 = vunpack.c.l.b16 %v1114
      %v1193 = vunpack.c.h.b16 %v1114
      %v1194 = vunpack.c.l.b16 %v1115
      %v1195 = vunpack.c.h.b16 %v1115
      %v1196 = vunpack.c.l.b16 %v1116
      %v1197 = vunpack.c.h.b16 %v1116
      %v1198 = vunpack.c.l.b16 %v1117
      %v1199 = vunpack.c.h.b16 %v1117
      %v1200 = vunpack.c.l.b16 %v1118
      %v1201 = vunpack.c.h.b16 %v1118
      %v1202 = vunpack.c.l.b16 %v1119
      %v1203 = vunpack.c.h.b16 %v1119
      %v1204 = vunpack.c.l.b16 %v1120
      %v1205 = vunpack.c.h.b16 %v1120
      %v1206 = vunpack.c.l.b16 %v1121
      %v1207 = vunpack.c.h.b16 %v1121
      %v1208 = vunpack.c.l.b16 %v1122
      %v1209 = vunpack.c.h.b16 %v1122
      %v1210 = vunpack.c.l.b16 %v1123
      %v1211 = vunpack.c.h.b16 %v1123
      %v1212 = vunpack.c.l.b16 %v1124
      %v1213 = vunpack.c.h.b16 %v1124
      %v1214 = vunpack.c.l.b16 %v1125
      %v1215 = vunpack.c.h.b16 %v1125
      %v1216 = vunpack.c.l.b16 %v1126
      %v1217 = vunpack.c.h.b16 %v1126
      %v1218 = vunpack.c.l.b16 %v1127
      %v1219 = vunpack.c.h.b16 %v1127
      %v1220 = vunpack.c.l.b16 %v1128
      %v1221 = vunpack.c.h.b16 %v1128
      %v1222 = vunpack.c.l.b16 %v1129
      %v1223 = vunpack.c.h.b16 %v1129
      %v1224 = vunpack.c.l.b16 %v1130
      %v1225 = vunpack.c.h.b16 %v1130
      %v1226 = vunpack.c.l.b16 %v1131
      %v1227 = vunpack.c.h.b16 %v1131
      %v1228 = vunpack.c.l.b16 %v1132
      %v1229 = vunpack.c.h.b16 %v1132
      %v1230 = vunpack.c.l.b16 %v1133
      %v1231 = vunpack.c.h.b16 %v1133
      %v1232 = vunpack.c.l.b16 %v1134
      %v1233 = vunpack.c.h.b16 %v1134
      %v1234 = vunpack.c.l.b16 %v1135
      %v1235 = vunpack.c.h.b16 %v1135
      %v1236 = vunpack.c.l.b16 %v1136
      %v1237 = vunpack.c.h.b16 %v1136
      %v1238 = vunpack.c.l.b16 %v1137
      %v1239 = vunpack.c.h.b16 %v1137
      %v1240 = vunpack.c.l.b16 %v1138
      %v1241 = vunpack.c.h.b16 %v1138
      %v1242 = vunpack.c.l.b16 %v1139
      %v1243 = vunpack.c.h.b16 %v1139
      %v1244 = vunpack.c.l.b16 %v1140
      %v1245 = vunpack.c.h.b16 %v1140
      %v1246 = vpack.c.b16 %v1192, %v1186
      %v1247 = vpack.c.b16 %v1193, %v1187
      %v1248 = vpack.c.b16 %v1194, %v1188
      %v1249 = vpack.c.b16 %v1195, %v1189
      %v1250 = vpack.c.b16 %v1196, %v1190
      %v1251 = vpack.c.b16 %v1197, %v1191
      %v1252 = vpack.c.b16 %v1204, %v1198
      %v1253 = vpack.c.b16 %v1205, %v1199
      %v1254 = vpack.c.b16 %v1206, %v1200
      %v1255 = vpack.c.b16 %v1207, %v1201
      %v1256 = vpack.c.b16 %v1208, %v1202
      %v1257 = vpack.c.b16 %v1209, %v1203
      %v1258 = vpack.c.b16 %v1216, %v1210
      %v1259 = vpack.c.b16 %v1217, %v1211
      %v1260 = vpack.c.b16 %v1218, %v1212
      %v1261 = vpack.c.b16 %v1219, %v1213
      %v1262 = vpack.c.b16 %v1220, %v1214
      %v1263 = vpack.c.b16 %v1221, %v1215
      %v1264 = vpack.c.b16 %v1228, %v1222
      %v1265 = vpack.c.b16 %v1229, %v1223
      %v1266 = vpack.c.b16 %v1230, %v1224
      %v1267 = vpack.c.b16 %v1231, %v1225
      %v1268 = vpack.c.b16 %v1232, %v1226
      %v1269 = vpack.c.b16 %v1233, %v1227
      %v1270 = vpack.c.b16 %v1240, %v1234
      %v1271 = vpack.c.b16 %v1241, %v1235
      %v1272 = vpack.c.b16 %v1242, %v1236
      %v1273 = vpack.c.b16 %v1243, %v1237
      %v1274 = vpack.c.b16 %v1244, %v1238
      %v1275 = vpack.c.b16 %v1245, %v1239
      %v1301 = vsel %vm520, %v1270, 0
      %v1304 = vsel %vm520, %v1271, 0
      %v1307 = vsel %vm520, %v1272, 0
      %v1310 = vsel %vm520, %v1273, 0
      %v1313 = vsel %vm520, %v1274, 0
      %v1316 = vsel %vm520, %v1275, 0
      %1318 = vmatpush.bf16.msra.mxu0 0
      %1319 = vmatpush.bf16.msra.mxu0 0
      %1320 = vmatpush.bf16.msra.mxu0 0
      %1321 = vmatpush.bf16.msra.mxu0 %v1301
      %1322 = vmatpush.bf16.msra.mxu0 %v1264
      %1323 = vmatpush.bf16.msra.mxu0 %v1258
      %1324 = vmatpush.bf16.msra.mxu0 %v1252
      %1325 = vmatpush.bf16.msra.mxu0 %v1246
      %1326 = vmatmul.bf16.gmra.mxu0 %v518
      %v1327 = vpop.f32.mrf.mxu0
      %v1328 = vadd.f32 %v1144, %v1327
      %v1329 = vpop.f32.mrf.mxu0
      %1330 = vdwg.mxu0
      %1331 = vmatpush.bf16.msra.mxu0 0
      %1332 = vmatpush.bf16.msra.mxu0 0
      %1333 = vmatpush.bf16.msra.mxu0 0
      %1334 = vmatpush.bf16.msra.mxu0 %v1304
      %1335 = vmatpush.bf16.msra.mxu0 %v1265
      %1336 = vmatpush.bf16.msra.mxu0 %v1259
      %1337 = vmatpush.bf16.msra.mxu0 %v1253
      %1338 = vmatpush.bf16.msra.mxu0 %v1247
      %1339 = vmatmul.bf16.gmra.mxu0 %v518
      %v1340 = vpop.f32.mrf.mxu0
      %v1341 = vadd.f32 %v1145, %v1340
      %v1342 = vpop.f32.mrf.mxu0
      %1343 = vdwg.mxu0
      %1344 = vmatpush.bf16.msra.mxu0 0
      %1345 = vmatpush.bf16.msra.mxu0 0
      %1346 = vmatpush.bf16.msra.mxu0 0
      %1347 = vmatpush.bf16.msra.mxu0 %v1307
      %1348 = vmatpush.bf16.msra.mxu0 %v1266
      %1349 = vmatpush.bf16.msra.mxu0 %v1260
      %1350 = vmatpush.bf16.msra.mxu0 %v1254
      %1351 = vmatpush.bf16.msra.mxu0 %v1248
      %1352 = vmatmul.bf16.gmra.mxu0 %v518
      %v1353 = vpop.f32.mrf.mxu0
      %v1354 = vadd.f32 %v1146, %v1353
      %v1355 = vpop.f32.mrf.mxu0
      %1356 = vdwg.mxu0
      %1357 = vmatpush.bf16.msra.mxu0 0
      %1358 = vmatpush.bf16.msra.mxu0 0
      %1359 = vmatpush.bf16.msra.mxu0 0
      %1360 = vmatpush.bf16.msra.mxu0 %v1310
      %1361 = vmatpush.bf16.msra.mxu0 %v1267
      %1362 = vmatpush.bf16.msra.mxu0 %v1261
      %1363 = vmatpush.bf16.msra.mxu0 %v1255
      %1364 = vmatpush.bf16.msra.mxu0 %v1249
      %1365 = vmatmul.bf16.gmra.mxu0 %v518
      %v1366 = vpop.f32.mrf.mxu0
      %v1367 = vadd.f32 %v1147, %v1366
      %v1368 = vpop.f32.mrf.mxu0
      %1369 = vdwg.mxu0
      %1370 = vmatpush.bf16.msra.mxu0 0
      %1371 = vmatpush.bf16.msra.mxu0 0
      %1372 = vmatpush.bf16.msra.mxu0 0
      %1373 = vmatpush.bf16.msra.mxu0 %v1313
      %1374 = vmatpush.bf16.msra.mxu0 %v1268
      %1375 = vmatpush.bf16.msra.mxu0 %v1262
      %1376 = vmatpush.bf16.msra.mxu0 %v1256
      %1377 = vmatpush.bf16.msra.mxu0 %v1250
      %1378 = vmatmul.bf16.gmra.mxu0 %v518
      %v1379 = vpop.f32.mrf.mxu0
      %v1380 = vadd.f32 %v1148, %v1379
      %v1381 = vpop.f32.mrf.mxu0
      %1382 = vdwg.mxu0
      %1383 = vmatpush.bf16.msra.mxu0 0
      %1384 = vmatpush.bf16.msra.mxu0 0
      %1385 = vmatpush.bf16.msra.mxu0 0
      %1386 = vmatpush.bf16.msra.mxu0 %v1316
      %1387 = vmatpush.bf16.msra.mxu0 %v1269
      %1388 = vmatpush.bf16.msra.mxu0 %v1263
      %1389 = vmatpush.bf16.msra.mxu0 %v1257
      %1390 = vmatpush.bf16.msra.mxu0 %v1251
      %1391 = vmatmul.bf16.gmra.mxu0 %v518
      %v1392 = vpop.f32.mrf.mxu0
      %v1393 = vadd.f32 %v1149, %v1392
      %v1394 = vpop.f32.mrf.mxu0
      %1395 = vdwg.mxu0
      %v1396 = vtanh.pop %v1328
      %v1397 = vtanh.pop %v1341
      %v1398 = vtanh.pop %v1354
      %v1399 = vtanh.pop %v1367
      %v1400 = vtanh.pop %v1380
      %v1401 = vtanh.pop %v1393
      %v1402 = vpack.c.bf16 %v1396, %v1396
      %v1403 = vpack.c.bf16 %v1397, %v1397
      %v1404 = vpack.c.bf16 %v1398, %v1398
      %v1405 = vpack.c.bf16 %v1399, %v1399
      %v1406 = vpack.c.bf16 %v1400, %v1400
      %v1407 = vpack.c.bf16 %v1401, %v1401
      %s1408 = scalar_lea.vmem %s311, 380
      %v1409 = vld [vmem:[%s1408] sm:$0xf]
      %v1410 = vld [vmem:[%s1408 + $0x4] sm:$0xf]
      %v1411 = vld [vmem:[%s1408 + $0x8] sm:$0xf]
      %v1412 = vld [vmem:[%s1408 + $0xc] sm:$0xf]
      %v1413 = vld [vmem:[%s1408 + $0x10] sm:$0xf]
      %v1414 = vld [vmem:[%s1408 + $0x14] sm:$0xf]
      %v1415 = vld [vmem:[%s1408 + $0x18] sm:$0xf]
      %v1416 = vld [vmem:[%s1408 + $0x1c] sm:$0xf]
      %v1417 = vld [vmem:[%s1408 + $0x20] sm:$0xf]
      %v1418 = vld [vmem:[%s1408 + $0x24] sm:$0xf]
      %v1419 = vld [vmem:[%s1408 + $0x28] sm:$0xf]
      %v1420 = vld [vmem:[%s1408 + $0x2c] sm:$0xf]
      %v1421 = vld [vmem:[%s1408 + $0x30] sm:$0xf]
      %v1422 = vld [vmem:[%s1408 + $0x34] sm:$0xf]
      %v1423 = vld [vmem:[%s1408 + $0x38] sm:$0xf]
      %v1424 = vld [vmem:[%s1408 + $0x3c] sm:$0xf]
      %v1425 = vld [vmem:[%s1408 + $0x40] sm:$0xf]
      %v1426 = vld [vmem:[%s1408 + $0x44] sm:$0xf]
      %v1427 = vld [vmem:[%s1408 + $0x48] sm:$0xf]
      %v1428 = vld [vmem:[%s1408 + $0x4c] sm:$0xf]
      %v1429 = vld [vmem:[%s1408 + $0x50] sm:$0xf]
      %v1430 = vld [vmem:[%s1408 + $0x54] sm:$0xf]
      %v1431 = vld [vmem:[%s1408 + $0x58] sm:$0xf]
      %v1432 = vld [vmem:[%s1408 + $0x5c] sm:$0xf]
      %v1433 = vld [vmem:[%s1408 + $0x60] sm:$0xf]
      %v1434 = vld [vmem:[%s1408 + $0x64] sm:$0xf]
      %v1435 = vld [vmem:[%s1408 + $0x68] sm:$0xf]
      %v1436 = vld [vmem:[%s1408 + $0x6c] sm:$0xf]
      %v1437 = vld [vmem:[%s1408 + $0x70] sm:$0xf]
      %v1438 = vld [vmem:[%s1408 + $0x74] sm:$0xf]
      %v1439 = vld [vmem:[%s1408 + $0x78] sm:$0xf]
      %v1440 = vld [vmem:[%s1408 + $0x7c] sm:$0xf]
      %v1441 = vld [vmem:[%s1408 + $0x80] sm:$0xf]
      %v1442 = vld [vmem:[%s1408 + $0x84] sm:$0xf]
      %v1443 = vld [vmem:[%s1408 + $0x88] sm:$0xf]
      %v1444 = vld [vmem:[%s1408 + $0x8c] sm:$0xf]
      %v1445 = vld [vmem:[%s1408 + $0x90] sm:$0xf]
      %v1446 = vld [vmem:[%s1408 + $0x94] sm:$0xf]
      %v1447 = vld [vmem:[%s1408 + $0x98] sm:$0xf]
      %v1448 = vld [vmem:[%s1408 + $0x9c] sm:$0xf]
      %v1449 = vld [vmem:[%s1408 + $0xa0] sm:$0xf]
      %v1450 = vld [vmem:[%s1408 + $0xa4] sm:$0xf]
      %v1451 = vld [vmem:[%s1408 + $0xa8] sm:$0xf]
      %v1452 = vld [vmem:[%s1408 + $0xac] sm:$0xf]
      %v1453 = vld [vmem:[%s1408 + $0xb0] sm:$0xf]
      %v1454 = vld [vmem:[%s1408 + $0xb4] sm:$0xf]
      %v1455 = vld [vmem:[%s1408 + $0xb8] sm:$0xf]
      %v1456 = vld [vmem:[%s1408 + $0xbc] sm:$0xf]
      %v1457 = vld [vmem:[%s1408 + $0xc0] sm:$0xf]
      %v1458 = vld [vmem:[%s1408 + $0xc4] sm:$0xf]
      %v1459 = vld [vmem:[%s1408 + $0xc8] sm:$0xf]
      %v1460 = vld [vmem:[%s1408 + $0xcc] sm:$0xf]
      %v1461 = vld [vmem:[%s1408 + $0xd0] sm:$0xf]
      %v1462 = vld [vmem:[%s1408 + $0xd4] sm:$0xf]
      %v1463 = vld [vmem:[%s1408 + $0xd8] sm:$0xf]
      %v1464 = vld [vmem:[%s1408 + $0xdc] sm:$0xf]
      %v1465 = vld [vmem:[%s1408 + $0xe0] sm:$0xf]
      %v1466 = vld [vmem:[%s1408 + $0xe4] sm:$0xf]
      %v1467 = vld [vmem:[%s1408 + $0xe8] sm:$0xf]
      %v1468 = vld [vmem:[%s1408 + $0xec] sm:$0xf]
      %v1469 = vld [vmem:[%s1408 + $0xf0] sm:$0xf]
      %v1470 = vld [vmem:[%s1408 + $0xf4] sm:$0xf]
      %v1471 = vld [vmem:[%s1408 + $0xf8] sm:$0xf]
      %v1472 = vld [vmem:[%s1408 + $0xfc] sm:$0xf]
      %v1473 = vld [vmem:[%s1408 + $0x100] sm:$0xf]
      %v1474 = vld [vmem:[%s1408 + $0x104] sm:$0xf]
      %v1475 = vld [vmem:[%s1408 + $0x108] sm:$0xf]
      %v1476 = vld [vmem:[%s1408 + $0x10c] sm:$0xf]
      %v1477 = vld [vmem:[%s1408 + $0x110] sm:$0xf]
      %v1478 = vld [vmem:[%s1408 + $0x114] sm:$0xf]
      %v1479 = vld [vmem:[%s1408 + $0x118] sm:$0xf]
      %v1480 = vld [vmem:[%s1408 + $0x11c] sm:$0xf]
      %v1481 = vld [vmem:[%s1408 + $0x120] sm:$0xf]
      %v1482 = vld [vmem:[%s1408 + $0x124] sm:$0xf]
      %v1483 = vld [vmem:[%s1408 + $0x128] sm:$0xf]
      %v1484 = vld [vmem:[%s1408 + $0x12c] sm:$0xf]
      %v1485 = vld [vmem:[%s1408 + $0x130] sm:$0xf]
      %v1486 = vld [vmem:[%s1408 + $0x134] sm:$0xf]
      %v1487 = vld [vmem:[%s1408 + $0x138] sm:$0xf]
      %v1488 = vld [vmem:[%s1408 + $0x13c] sm:$0xf]
      %v1489 = vld [vmem:[%s1408 + $0x140] sm:$0xf]
      %v1490 = vld [vmem:[%s1408 + $0x144] sm:$0xf]
      %v1491 = vld [vmem:[%s1408 + $0x148] sm:$0xf]
      %v1492 = vld [vmem:[%s1408 + $0x14c] sm:$0xf]
      %v1493 = vld [vmem:[%s1408 + $0x150] sm:$0xf]
      %v1494 = vld [vmem:[%s1408 + $0x154] sm:$0xf]
      %v1495 = vld [vmem:[%s1408 + $0x158] sm:$0xf]
      %v1496 = vld [vmem:[%s1408 + $0x15c] sm:$0xf]
      %v1497 = vld [vmem:[%s1408 + $0x160] sm:$0xf]
      %v1498 = vld [vmem:[%s1408 + $0x164] sm:$0xf]
      %v1499 = vld [vmem:[%s1408 + $0x168] sm:$0xf]
      %v1500 = vld [vmem:[%s1408 + $0x16c] sm:$0xf]
      %v1501 = vld [vmem:[%s1408 + $0x170] sm:$0xf]
      %v1502 = vld [vmem:[%s1408 + $0x174] sm:$0xf]
      %v1503 = vld [vmem:[%s1408 + $0x178] sm:$0xf]
      %s1504 = scalar_lea.vmem %s316, 1
      %v1505 = vld [vmem:[%s1504] sm:$0x1]
      %v1507 = vperm.slane %v1505, 0
      %v1604 = vunpack.c.l.b16 %v1409
      %v1605 = vunpack.c.l.b16 %v1410
      %v1606 = vunpack.c.l.b16 %v1411
      %v1607 = vunpack.c.l.b16 %v1412
      %v1608 = vunpack.c.l.b16 %v1413
      %v1609 = vunpack.c.l.b16 %v1414
      %v1610 = vunpack.c.l.b16 %v1415
      %v1611 = vunpack.c.l.b16 %v1416
      %v1612 = vunpack.c.l.b16 %v1417
      %v1613 = vunpack.c.l.b16 %v1418
      %v1614 = vunpack.c.l.b16 %v1419
      %v1615 = vunpack.c.l.b16 %v1420
      %v1616 = vunpack.c.l.b16 %v1421
      %v1617 = vunpack.c.l.b16 %v1422
      %v1618 = vunpack.c.l.b16 %v1423
      %v1619 = vunpack.c.l.b16 %v1424
      %v1620 = vunpack.c.l.b16 %v1425
      %v1621 = vunpack.c.l.b16 %v1426
      %v1622 = vunpack.c.l.b16 %v1427
      %v1623 = vunpack.c.l.b16 %v1428
      %v1624 = vunpack.c.l.b16 %v1429
      %v1625 = vunpack.c.l.b16 %v1430
      %v1626 = vunpack.c.l.b16 %v1431
      %v1627 = vunpack.c.l.b16 %v1432
      %v1628 = vunpack.c.l.b16 %v1433
      %v1629 = vunpack.c.l.b16 %v1434
      %v1630 = vunpack.c.l.b16 %v1435
      %v1631 = vunpack.c.l.b16 %v1436
      %v1632 = vunpack.c.l.b16 %v1437
      %v1633 = vunpack.c.l.b16 %v1438
      %v1634 = vunpack.c.l.b16 %v1439
      %v1635 = vunpack.c.l.b16 %v1440
      %v1636 = vunpack.c.l.b16 %v1441
      %v1637 = vunpack.c.l.b16 %v1442
      %v1638 = vunpack.c.l.b16 %v1443
      %v1639 = vunpack.c.l.b16 %v1444
      %v1640 = vunpack.c.l.b16 %v1445
      %v1641 = vunpack.c.l.b16 %v1446
      %v1642 = vunpack.c.l.b16 %v1447
      %v1643 = vunpack.c.l.b16 %v1448
      %v1644 = vunpack.c.l.b16 %v1449
      %v1645 = vunpack.c.l.b16 %v1450
      %v1646 = vunpack.c.l.b16 %v1451
      %v1647 = vunpack.c.l.b16 %v1452
      %v1648 = vunpack.c.l.b16 %v1453
      %v1649 = vunpack.c.l.b16 %v1454
      %v1650 = vunpack.c.l.b16 %v1455
      %v1651 = vunpack.c.l.b16 %v1456
      %v1652 = vunpack.c.l.b16 %v1457
      %v1653 = vunpack.c.l.b16 %v1458
      %v1654 = vunpack.c.l.b16 %v1459
      %v1655 = vunpack.c.l.b16 %v1460
      %v1656 = vunpack.c.l.b16 %v1461
      %v1657 = vunpack.c.l.b16 %v1462
      %v1658 = vunpack.c.l.b16 %v1463
      %v1659 = vunpack.c.l.b16 %v1464
      %v1660 = vunpack.c.l.b16 %v1465
      %v1661 = vunpack.c.l.b16 %v1466
      %v1662 = vunpack.c.l.b16 %v1467
      %v1663 = vunpack.c.l.b16 %v1468
      %v1664 = vunpack.c.l.b16 %v1469
      %v1665 = vunpack.c.l.b16 %v1470
      %v1666 = vunpack.c.l.b16 %v1471
      %v1667 = vunpack.c.l.b16 %v1472
      %v1668 = vunpack.c.l.b16 %v1473
      %v1669 = vunpack.c.l.b16 %v1474
      %v1670 = vunpack.c.l.b16 %v1475
      %v1671 = vunpack.c.l.b16 %v1476
      %v1672 = vunpack.c.l.b16 %v1477
      %v1673 = vunpack.c.l.b16 %v1478
      %v1674 = vunpack.c.l.b16 %v1479
      %v1675 = vunpack.c.l.b16 %v1480
      %v1676 = vunpack.c.l.b16 %v1481
      %v1677 = vunpack.c.l.b16 %v1482
      %v1678 = vunpack.c.l.b16 %v1483
      %v1679 = vunpack.c.l.b16 %v1484
      %v1680 = vunpack.c.l.b16 %v1485
      %v1681 = vunpack.c.l.b16 %v1486
      %v1682 = vunpack.c.l.b16 %v1487
      %v1683 = vunpack.c.l.b16 %v1488
      %v1684 = vunpack.c.l.b16 %v1489
      %v1685 = vunpack.c.l.b16 %v1490
      %v1686 = vunpack.c.l.b16 %v1491
      %v1687 = vunpack.c.l.b16 %v1492
      %v1688 = vunpack.c.l.b16 %v1493
      %v1689 = vunpack.c.l.b16 %v1494
      %v1690 = vunpack.c.l.b16 %v1495
      %v1691 = vunpack.c.l.b16 %v1496
      %v1692 = vunpack.c.l.b16 %v1497
      %v1693 = vunpack.c.l.b16 %v1498
      %v1694 = vunpack.c.l.b16 %v1499
      %v1695 = vunpack.c.l.b16 %v1500
      %v1696 = vunpack.c.l.b16 %v1501
      %v1697 = vunpack.c.l.b16 %v1502
      %v1698 = vunpack.c.l.b16 %v1503
      %v1699 = vpack.c.b16 %v1605, %v1604
      %v1700 = vpack.c.b16 %v1607, %v1606
      %v1701 = vpack.c.b16 %v1609, %v1608
      %v1702 = vpack.c.b16 %v1611, %v1610
      %v1703 = vpack.c.b16 %v1613, %v1612
      %v1704 = vpack.c.b16 %v1615, %v1614
      %v1705 = vpack.c.b16 %v1617, %v1616
      %v1706 = vpack.c.b16 %v1619, %v1618
      %v1707 = vpack.c.b16 %v1621, %v1620
      %v1708 = vpack.c.b16 %v1623, %v1622
      %v1709 = vpack.c.b16 %v1625, %v1624
      %v1710 = vpack.c.b16 %v1627, %v1626
      %v1711 = vpack.c.b16 %v1629, %v1628
      %v1712 = vpack.c.b16 %v1631, %v1630
      %v1713 = vpack.c.b16 %v1633, %v1632
      %v1714 = vpack.c.b16 %v1635, %v1634
      %v1715 = vpack.c.b16 %v1637, %v1636
      %v1716 = vpack.c.b16 %v1639, %v1638
      %v1717 = vpack.c.b16 %v1641, %v1640
      %v1718 = vpack.c.b16 %v1643, %v1642
      %v1719 = vpack.c.b16 %v1645, %v1644
      %v1720 = vpack.c.b16 %v1647, %v1646
      %v1721 = vpack.c.b16 %v1649, %v1648
      %v1722 = vpack.c.b16 %v1651, %v1650
      %v1723 = vpack.c.b16 %v1653, %v1652
      %v1724 = vpack.c.b16 %v1655, %v1654
      %v1725 = vpack.c.b16 %v1657, %v1656
      %v1726 = vpack.c.b16 %v1659, %v1658
      %v1727 = vpack.c.b16 %v1661, %v1660
      %v1728 = vpack.c.b16 %v1663, %v1662
      %v1729 = vpack.c.b16 %v1665, %v1664
      %v1730 = vpack.c.b16 %v1667, %v1666
      %v1731 = vpack.c.b16 %v1669, %v1668
      %v1732 = vpack.c.b16 %v1671, %v1670
      %v1733 = vpack.c.b16 %v1673, %v1672
      %v1734 = vpack.c.b16 %v1675, %v1674
      %v1735 = vpack.c.b16 %v1677, %v1676
      %v1736 = vpack.c.b16 %v1679, %v1678
      %v1737 = vpack.c.b16 %v1681, %v1680
      %v1738 = vpack.c.b16 %v1683, %v1682
      %v1739 = vpack.c.b16 %v1685, %v1684
      %v1740 = vpack.c.b16 %v1687, %v1686
      %v1741 = vpack.c.b16 %v1689, %v1688
      %v1742 = vpack.c.b16 %v1691, %v1690
      %v1743 = vpack.c.b16 %v1693, %v1692
      %v1744 = vpack.c.b16 %v1695, %v1694
      %v1745 = vpack.c.b16 %v1697, %v1696
      %v1746 = vpack.c.b16 %v1698, %v1698
      %v1795 = vsel %vm1013, %v1407, 0
      %v1798 = vsel %vm1017, %v1746, 0
      %1800 = vmatpush.bf16.msra.mxu0 %v1706
      %1801 = vmatpush.bf16.msra.mxu0 %v1705
      %1802 = vmatpush.bf16.msra.mxu0 %v1704
      %1803 = vmatpush.bf16.msra.mxu0 %v1703
      %1804 = vmatpush.bf16.msra.mxu0 %v1702
      %1805 = vmatpush.bf16.msra.mxu0 %v1701
      %1806 = vmatpush.bf16.msra.mxu0 %v1700
      %1807 = vmatpush.bf16.msra.mxu0 %v1699
      %1808 = vmatmul.bf16.gmra.mxu0 %v1402
      %v1809 = vpop.f32.mrf.mxu0
      %v1810 = vadd.f32 %v1507, %v1809
      %v1811 = vpop.f32.mrf.mxu0
      %1812 = vdwg.mxu0
      %1813 = vmatpush.bf16.msra.mxu0 %v1714
      %1814 = vmatpush.bf16.msra.mxu0 %v1713
      %1815 = vmatpush.bf16.msra.mxu0 %v1712
      %1816 = vmatpush.bf16.msra.mxu0 %v1711
      %1817 = vmatpush.bf16.msra.mxu0 %v1710
      %1818 = vmatpush.bf16.msra.mxu0 %v1709
      %1819 = vmatpush.bf16.msra.mxu0 %v1708
      %1820 = vmatpush.bf16.msra.mxu0 %v1707
      %1821 = vmatmul.bf16.gmra.mxu0 %v1403
      %v1822 = vpop.f32.mrf.mxu0
      %v1823 = vadd.f32 %v1810, %v1822
      %v1824 = vpop.f32.mrf.mxu0
      %1825 = vdwg.mxu0
      %1826 = vmatpush.bf16.msra.mxu0 %v1722
      %1827 = vmatpush.bf16.msra.mxu0 %v1721
      %1828 = vmatpush.bf16.msra.mxu0 %v1720
      %1829 = vmatpush.bf16.msra.mxu0 %v1719
      %1830 = vmatpush.bf16.msra.mxu0 %v1718
      %1831 = vmatpush.bf16.msra.mxu0 %v1717
      %1832 = vmatpush.bf16.msra.mxu0 %v1716
      %1833 = vmatpush.bf16.msra.mxu0 %v1715
      %1834 = vmatmul.bf16.gmra.mxu0 %v1404
      %v1835 = vpop.f32.mrf.mxu0
      %v1836 = vadd.f32 %v1823, %v1835
      %v1837 = vpop.f32.mrf.mxu0
      %1838 = vdwg.mxu0
      %1839 = vmatpush.bf16.msra.mxu0 %v1730
      %1840 = vmatpush.bf16.msra.mxu0 %v1729
      %1841 = vmatpush.bf16.msra.mxu0 %v1728
      %1842 = vmatpush.bf16.msra.mxu0 %v1727
      %1843 = vmatpush.bf16.msra.mxu0 %v1726
      %1844 = vmatpush.bf16.msra.mxu0 %v1725
      %1845 = vmatpush.bf16.msra.mxu0 %v1724
      %1846 = vmatpush.bf16.msra.mxu0 %v1723
      %1847 = vmatmul.bf16.gmra.mxu0 %v1405
      %v1848 = vpop.f32.mrf.mxu0
      %v1849 = vadd.f32 %v1836, %v1848
      %v1850 = vpop.f32.mrf.mxu0
      %1851 = vdwg.mxu0
      %1852 = vmatpush.bf16.msra.mxu0 %v1738
      %1853 = vmatpush.bf16.msra.mxu0 %v1737
      %1854 = vmatpush.bf16.msra.mxu0 %v1736
      %1855 = vmatpush.bf16.msra.mxu0 %v1735
      %1856 = vmatpush.bf16.msra.mxu0 %v1734
      %1857 = vmatpush.bf16.msra.mxu0 %v1733
      %1858 = vmatpush.bf16.msra.mxu0 %v1732
      %1859 = vmatpush.bf16.msra.mxu0 %v1731
      %1860 = vmatmul.bf16.gmra.mxu0 %v1406
      %v1861 = vpop.f32.mrf.mxu0
      %v1862 = vadd.f32 %v1849, %v1861
      %v1863 = vpop.f32.mrf.mxu0
      %1864 = vdwg.mxu0
      %1865 = vmatpush.bf16.msra.mxu0 %v1798
      %1866 = vmatpush.bf16.msra.mxu0 %v1745
      %1867 = vmatpush.bf16.msra.mxu0 %v1744
      %1868 = vmatpush.bf16.msra.mxu0 %v1743
      %1869 = vmatpush.bf16.msra.mxu0 %v1742
      %1870 = vmatpush.bf16.msra.mxu0 %v1741
      %1871 = vmatpush.bf16.msra.mxu0 %v1740
      %1872 = vmatpush.bf16.msra.mxu0 %v1739
      %1873 = vmatmul.bf16.gmra.mxu0 %v1795
      %v1874 = vpop.f32.mrf.mxu0
      %v1875 = vadd.f32 %v1862, %v1874
      %v1876 = vpop.f32.mrf.mxu0
      %1877 = vdwg.mxu0
      %v1878 = vmax.f32 %v1875, 0.0
      %v1879 = vmul.f32 %v1878, %v1101
      %v1880 = vsel %vm516, %v1879, 0.0
      %1881 = vadd.xlane.f32.xlu0 %v1880
      %v1882 = vpop.xlane.xlu0 %1881
      %v1883 = vrcp.pop %v1882
      %v1884 = vmul.f32 %v1878, %v1883
      %s1885 = scalar_lea.vmem %s322, 8
      %1886 = vst.msk [vmem:[%s1885] sm:$0xff] %vm516, %v1884
      %s1887 = scalar_lea.vmem %s298, 480
      %v1888 = vld [vmem:[%s1887] sm:$0xff]
      %v1889 = vld [vmem:[%s1887 + $0x8] sm:$0xff]
      %v1890 = vld [vmem:[%s1887 + $0x10] sm:$0xff]
      %v1891 = vld [vmem:[%s1887 + $0x18] sm:$0xff]
      %v1892 = vld [vmem:[%s1887 + $0x20] sm:$0xff]
      %v1893 = vld [vmem:[%s1887 + $0x28] sm:$0xff]
      %v1894 = vld [vmem:[%s1887 + $0x30] sm:$0xff]
      %v1895 = vld [vmem:[%s1887 + $0x38] sm:$0xff]
      %v1896 = vld [vmem:[%s1887 + $0x40] sm:$0xff]
      %v1897 = vld [vmem:[%s1887 + $0x48] sm:$0xff]
      %v1898 = vld [vmem:[%s1887 + $0x50] sm:$0xff]
      %v1899 = vld [vmem:[%s1887 + $0x58] sm:$0xff]
      %v1900 = vld [vmem:[%s1887 + $0x60] sm:$0xff]
      %v1901 = vld [vmem:[%s1887 + $0x68] sm:$0xff]
      %v1902 = vld [vmem:[%s1887 + $0x70] sm:$0xff]
      %v1903 = vld [vmem:[%s1887 + $0x78] sm:$0xff]
      %v1904 = vld [vmem:[%s1887 + $0x80] sm:$0xff]
      %v1905 = vld [vmem:[%s1887 + $0x88] sm:$0xff]
      %v1906 = vld [vmem:[%s1887 + $0x90] sm:$0xff]
      %v1907 = vld [vmem:[%s1887 + $0x98] sm:$0xff]
      %v1908 = vld [vmem:[%s1887 + $0xa0] sm:$0xff]
      %v1909 = vld [vmem:[%s1887 + $0xa8] sm:$0xff]
      %v1910 = vld [vmem:[%s1887 + $0xb0] sm:$0xff]
      %v1911 = vld [vmem:[%s1887 + $0xb8] sm:$0xff]
      %v1912 = vld [vmem:[%s1887 + $0xc0] sm:$0xff]
      %v1913 = vld [vmem:[%s1887 + $0xc8] sm:$0xff]
      %v1914 = vld [vmem:[%s1887 + $0xd0] sm:$0xff]
      %v1915 = vld [vmem:[%s1887 + $0xd8] sm:$0x33]
      %v1916 = vld [vmem:[%s1887 + $0xe0] sm:$0x33]
      %v1917 = vld [vmem:[%s1887 + $0xe8] sm:$0x33]
      %s1918 = scalar_lea.vmem %s304, 12
      %v1919 = vld [vmem:[%s1918] sm:$0x3f]
      %v1921 = vperm.slane %v1919, 0
      %v1922 = vperm.slane %v1919, 1
      %v1923 = vperm.slane %v1919, 2
      %v1924 = vperm.slane %v1919, 3
      %v1925 = vperm.slane %v1919, 4
      %v1926 = vperm.slane %v1919, 5
      %v1963 = vunpack.c.l.b16 %v1888
      %v1964 = vunpack.c.h.b16 %v1888
      %v1965 = vunpack.c.l.b16 %v1889
      %v1966 = vunpack.c.h.b16 %v1889
      %v1967 = vunpack.c.l.b16 %v1890
      %v1968 = vunpack.c.h.b16 %v1890
      %v1969 = vunpack.c.l.b16 %v1891
      %v1970 = vunpack.c.h.b16 %v1891
      %v1971 = vunpack.c.l.b16 %v1892
      %v1972 = vunpack.c.h.b16 %v1892
      %v1973 = vunpack.c.l.b16 %v1893
      %v1974 = vunpack.c.h.b16 %v1893
      %v1975 = vunpack.c.l.b16 %v1894
      %v1976 = vunpack.c.h.b16 %v1894
      %v1977 = vunpack.c.l.b16 %v1895
      %v1978 = vunpack.c.h.b16 %v1895
      %v1979 = vunpack.c.l.b16 %v1896
      %v1980 = vunpack.c.h.b16 %v1896
      %v1981 = vunpack.c.l.b16 %v1897
      %v1982 = vunpack.c.h.b16 %v1897
      %v1983 = vunpack.c.l.b16 %v1898
      %v1984 = vunpack.c.h.b16 %v1898
      %v1985 = vunpack.c.l.b16 %v1899
      %v1986 = vunpack.c.h.b16 %v1899
      %v1987 = vunpack.c.l.b16 %v1900
      %v1988 = vunpack.c.h.b16 %v1900
      %v1989 = vunpack.c.l.b16 %v1901
      %v1990 = vunpack.c.h.b16 %v1901
      %v1991 = vunpack.c.l.b16 %v1902
      %v1992 = vunpack.c.h.b16 %v1902
      %v1993 = vunpack.c.l.b16 %v1903
      %v1994 = vunpack.c.h.b16 %v1903
      %v1995 = vunpack.c.l.b16 %v1904
      %v1996 = vunpack.c.h.b16 %v1904
      %v1997 = vunpack.c.l.b16 %v1905
      %v1998 = vunpack.c.h.b16 %v1905
      %v1999 = vunpack.c.l.b16 %v1906
      %v2000 = vunpack.c.h.b16 %v1906
      %v2001 = vunpack.c.l.b16 %v1907
      %v2002 = vunpack.c.h.b16 %v1907
      %v2003 = vunpack.c.l.b16 %v1908
      %v2004 = vunpack.c.h.b16 %v1908
      %v2005 = vunpack.c.l.b16 %v1909
      %v2006 = vunpack.c.h.b16 %v1909
      %v2007 = vunpack.c.l.b16 %v1910
      %v2008 = vunpack.c.h.b16 %v1910
      %v2009 = vunpack.c.l.b16 %v1911
      %v2010 = vunpack.c.h.b16 %v1911
      %v2011 = vunpack.c.l.b16 %v1912
      %v2012 = vunpack.c.h.b16 %v1912
      %v2013 = vunpack.c.l.b16 %v1913
      %v2014 = vunpack.c.h.b16 %v1913
      %v2015 = vunpack.c.l.b16 %v1914
      %v2016 = vunpack.c.h.b16 %v1914
      %v2017 = vunpack.c.l.b16 %v1915
      %v2018 = vunpack.c.h.b16 %v1915
      %v2019 = vunpack.c.l.b16 %v1916
      %v2020 = vunpack.c.h.b16 %v1916
      %v2021 = vunpack.c.l.b16 %v1917
      %v2022 = vunpack.c.h.b16 %v1917
      %v2023 = vpack.c.b16 %v1969, %v1963
      %v2024 = vpack.c.b16 %v1970, %v1964
      %v2025 = vpack.c.b16 %v1971, %v1965
      %v2026 = vpack.c.b16 %v1972, %v1966
      %v2027 = vpack.c.b16 %v1973, %v1967
      %v2028 = vpack.c.b16 %v1974, %v1968
      %v2029 = vpack.c.b16 %v1981, %v1975
      %v2030 = vpack.c.b16 %v1982, %v1976
      %v2031 = vpack.c.b16 %v1983, %v1977
      %v2032 = vpack.c.b16 %v1984, %v1978
      %v2033 = vpack.c.b16 %v1985, %v1979
      %v2034 = vpack.c.b16 %v1986, %v1980
      %v2035 = vpack.c.b16 %v1993, %v1987
      %v2036 = vpack.c.b16 %v1994, %v1988
      %v2037 = vpack.c.b16 %v1995, %v1989
      %v2038 = vpack.c.b16 %v1996, %v1990
      %v2039 = vpack.c.b16 %v1997, %v1991
      %v2040 = vpack.c.b16 %v1998, %v1992
      %v2041 = vpack.c.b16 %v2005, %v1999
      %v2042 = vpack.c.b16 %v2006, %v2000
      %v2043 = vpack.c.b16 %v2007, %v2001
      %v2044 = vpack.c.b16 %v2008, %v2002
      %v2045 = vpack.c.b16 %v2009, %v2003
      %v2046 = vpack.c.b16 %v2010, %v2004
      %v2047 = vpack.c.b16 %v2017, %v2011
      %v2048 = vpack.c.b16 %v2018, %v2012
      %v2049 = vpack.c.b16 %v2019, %v2013
      %v2050 = vpack.c.b16 %v2020, %v2014
      %v2051 = vpack.c.b16 %v2021, %v2015
      %v2052 = vpack.c.b16 %v2022, %v2016
      %v2078 = vsel %vm520, %v2047, 0
      %v2081 = vsel %vm520, %v2048, 0
      %v2084 = vsel %vm520, %v2049, 0
      %v2087 = vsel %vm520, %v2050, 0
      %v2090 = vsel %vm520, %v2051, 0
      %v2093 = vsel %vm520, %v2052, 0
      %2095 = vmatpush.bf16.msra.mxu0 0
      %2096 = vmatpush.bf16.msra.mxu0 0
      %2097 = vmatpush.bf16.msra.mxu0 0
      %2098 = vmatpush.bf16.msra.mxu0 %v2078
      %2099 = vmatpush.bf16.msra.mxu0 %v2041
      %2100 = vmatpush.bf16.msra.mxu0 %v2035
      %2101 = vmatpush.bf16.msra.mxu0 %v2029
      %2102 = vmatpush.bf16.msra.mxu0 %v2023
      %2103 = vmatmul.bf16.gmra.mxu0 %v518
      %v2104 = vpop.f32.mrf.mxu0
      %v2105 = vadd.f32 %v1921, %v2104
      %v2106 = vpop.f32.mrf.mxu0
      %2107 = vdwg.mxu0
      %2108 = vmatpush.bf16.msra.mxu0 0
      %2109 = vmatpush.bf16.msra.mxu0 0
      %2110 = vmatpush.bf16.msra.mxu0 0
      %2111 = vmatpush.bf16.msra.mxu0 %v2081
      %2112 = vmatpush.bf16.msra.mxu0 %v2042
      %2113 = vmatpush.bf16.msra.mxu0 %v2036
      %2114 = vmatpush.bf16.msra.mxu0 %v2030
      %2115 = vmatpush.bf16.msra.mxu0 %v2024
      %2116 = vmatmul.bf16.gmra.mxu0 %v518
      %v2117 = vpop.f32.mrf.mxu0
      %v2118 = vadd.f32 %v1922, %v2117
      %v2119 = vpop.f32.mrf.mxu0
      %2120 = vdwg.mxu0
      %2121 = vmatpush.bf16.msra.mxu0 0
      %2122 = vmatpush.bf16.msra.mxu0 0
      %2123 = vmatpush.bf16.msra.mxu0 0
      %2124 = vmatpush.bf16.msra.mxu0 %v2084
      %2125 = vmatpush.bf16.msra.mxu0 %v2043
      %2126 = vmatpush.bf16.msra.mxu0 %v2037
      %2127 = vmatpush.bf16.msra.mxu0 %v2031
      %2128 = vmatpush.bf16.msra.mxu0 %v2025
      %2129 = vmatmul.bf16.gmra.mxu0 %v518
      %v2130 = vpop.f32.mrf.mxu0
      %v2131 = vadd.f32 %v1923, %v2130
      %v2132 = vpop.f32.mrf.mxu0
      %2133 = vdwg.mxu0
      %2134 = vmatpush.bf16.msra.mxu0 0
      %2135 = vmatpush.bf16.msra.mxu0 0
      %2136 = vmatpush.bf16.msra.mxu0 0
      %2137 = vmatpush.bf16.msra.mxu0 %v2087
      %2138 = vmatpush.bf16.msra.mxu0 %v2044
      %2139 = vmatpush.bf16.msra.mxu0 %v2038
      %2140 = vmatpush.bf16.msra.mxu0 %v2032
      %2141 = vmatpush.bf16.msra.mxu0 %v2026
      %2142 = vmatmul.bf16.gmra.mxu0 %v518
      %v2143 = vpop.f32.mrf.mxu0
      %v2144 = vadd.f32 %v1924, %v2143
      %v2145 = vpop.f32.mrf.mxu0
      %2146 = vdwg.mxu0
      %2147 = vmatpush.bf16.msra.mxu0 0
      %2148 = vmatpush.bf16.msra.mxu0 0
      %2149 = vmatpush.bf16.msra.mxu0 0
      %2150 = vmatpush.bf16.msra.mxu0 %v2090
      %2151 = vmatpush.bf16.msra.mxu0 %v2045
      %2152 = vmatpush.bf16.msra.mxu0 %v2039
      %2153 = vmatpush.bf16.msra.mxu0 %v2033
      %2154 = vmatpush.bf16.msra.mxu0 %v2027
      %2155 = vmatmul.bf16.gmra.mxu0 %v518
      %v2156 = vpop.f32.mrf.mxu0
      %v2157 = vadd.f32 %v1925, %v2156
      %v2158 = vpop.f32.mrf.mxu0
      %2159 = vdwg.mxu0
      %2160 = vmatpush.bf16.msra.mxu0 0
      %2161 = vmatpush.bf16.msra.mxu0 0
      %2162 = vmatpush.bf16.msra.mxu0 0
      %2163 = vmatpush.bf16.msra.mxu0 %v2093
      %2164 = vmatpush.bf16.msra.mxu0 %v2046
      %2165 = vmatpush.bf16.msra.mxu0 %v2040
      %2166 = vmatpush.bf16.msra.mxu0 %v2034
      %2167 = vmatpush.bf16.msra.mxu0 %v2028
      %2168 = vmatmul.bf16.gmra.mxu0 %v518
      %v2169 = vpop.f32.mrf.mxu0
      %v2170 = vadd.f32 %v1926, %v2169
      %v2171 = vpop.f32.mrf.mxu0
      %2172 = vdwg.mxu0
      %v2173 = vtanh.pop %v2105
      %v2174 = vtanh.pop %v2118
      %v2175 = vtanh.pop %v2131
      %v2176 = vtanh.pop %v2144
      %v2177 = vtanh.pop %v2157
      %v2178 = vtanh.pop %v2170
      %v2179 = vpack.c.bf16 %v2173, %v2173
      %v2180 = vpack.c.bf16 %v2174, %v2174
      %v2181 = vpack.c.bf16 %v2175, %v2175
      %v2182 = vpack.c.bf16 %v2176, %v2176
      %v2183 = vpack.c.bf16 %v2177, %v2177
      %v2184 = vpack.c.bf16 %v2178, %v2178
      %s2185 = scalar_lea.vmem %s311, 760
      %v2186 = vld [vmem:[%s2185] sm:$0xf]
      %v2187 = vld [vmem:[%s2185 + $0x4] sm:$0xf]
      %v2188 = vld [vmem:[%s2185 + $0x8] sm:$0xf]
      %v2189 = vld [vmem:[%s2185 + $0xc] sm:$0xf]
      %v2190 = vld [vmem:[%s2185 + $0x10] sm:$0xf]
      %v2191 = vld [vmem:[%s2185 + $0x14] sm:$0xf]
      %v2192 = vld [vmem:[%s2185 + $0x18] sm:$0xf]
      %v2193 = vld [vmem:[%s2185 + $0x1c] sm:$0xf]
      %v2194 = vld [vmem:[%s2185 + $0x20] sm:$0xf]
      %v2195 = vld [vmem:[%s2185 + $0x24] sm:$0xf]
      %v2196 = vld [vmem:[%s2185 + $0x28] sm:$0xf]
      %v2197 = vld [vmem:[%s2185 + $0x2c] sm:$0xf]
      %v2198 = vld [vmem:[%s2185 + $0x30] sm:$0xf]
      %v2199 = vld [vmem:[%s2185 + $0x34] sm:$0xf]
      %v2200 = vld [vmem:[%s2185 + $0x38] sm:$0xf]
      %v2201 = vld [vmem:[%s2185 + $0x3c] sm:$0xf]
      %v2202 = vld [vmem:[%s2185 + $0x40] sm:$0xf]
      %v2203 = vld [vmem:[%s2185 + $0x44] sm:$0xf]
      %v2204 = vld [vmem:[%s2185 + $0x48] sm:$0xf]
      %v2205 = vld [vmem:[%s2185 + $0x4c] sm:$0xf]
      %v2206 = vld [vmem:[%s2185 + $0x50] sm:$0xf]
      %v2207 = vld [vmem:[%s2185 + $0x54] sm:$0xf]
      %v2208 = vld [vmem:[%s2185 + $0x58] sm:$0xf]
      %v2209 = vld [vmem:[%s2185 + $0x5c] sm:$0xf]
      %v2210 = vld [vmem:[%s2185 + $0x60] sm:$0xf]
      %v2211 = vld [vmem:[%s2185 + $0x64] sm:$0xf]
      %v2212 = vld [vmem:[%s2185 + $0x68] sm:$0xf]
      %v2213 = vld [vmem:[%s2185 + $0x6c] sm:$0xf]
      %v2214 = vld [vmem:[%s2185 + $0x70] sm:$0xf]
      %v2215 = vld [vmem:[%s2185 + $0x74] sm:$0xf]
      %v2216 = vld [vmem:[%s2185 + $0x78] sm:$0xf]
      %v2217 = vld [vmem:[%s2185 + $0x7c] sm:$0xf]
      %v2218 = vld [vmem:[%s2185 + $0x80] sm:$0xf]
      %v2219 = vld [vmem:[%s2185 + $0x84] sm:$0xf]
      %v2220 = vld [vmem:[%s2185 + $0x88] sm:$0xf]
      %v2221 = vld [vmem:[%s2185 + $0x8c] sm:$0xf]
      %v2222 = vld [vmem:[%s2185 + $0x90] sm:$0xf]
      %v2223 = vld [vmem:[%s2185 + $0x94] sm:$0xf]
      %v2224 = vld [vmem:[%s2185 + $0x98] sm:$0xf]
      %v2225 = vld [vmem:[%s2185 + $0x9c] sm:$0xf]
      %v2226 = vld [vmem:[%s2185 + $0xa0] sm:$0xf]
      %v2227 = vld [vmem:[%s2185 + $0xa4] sm:$0xf]
      %v2228 = vld [vmem:[%s2185 + $0xa8] sm:$0xf]
      %v2229 = vld [vmem:[%s2185 + $0xac] sm:$0xf]
      %v2230 = vld [vmem:[%s2185 + $0xb0] sm:$0xf]
      %v2231 = vld [vmem:[%s2185 + $0xb4] sm:$0xf]
      %v2232 = vld [vmem:[%s2185 + $0xb8] sm:$0xf]
      %v2233 = vld [vmem:[%s2185 + $0xbc] sm:$0xf]
      %v2234 = vld [vmem:[%s2185 + $0xc0] sm:$0xf]
      %v2235 = vld [vmem:[%s2185 + $0xc4] sm:$0xf]
      %v2236 = vld [vmem:[%s2185 + $0xc8] sm:$0xf]
      %v2237 = vld [vmem:[%s2185 + $0xcc] sm:$0xf]
      %v2238 = vld [vmem:[%s2185 + $0xd0] sm:$0xf]
      %v2239 = vld [vmem:[%s2185 + $0xd4] sm:$0xf]
      %v2240 = vld [vmem:[%s2185 + $0xd8] sm:$0xf]
      %v2241 = vld [vmem:[%s2185 + $0xdc] sm:$0xf]
      %v2242 = vld [vmem:[%s2185 + $0xe0] sm:$0xf]
      %v2243 = vld [vmem:[%s2185 + $0xe4] sm:$0xf]
      %v2244 = vld [vmem:[%s2185 + $0xe8] sm:$0xf]
      %v2245 = vld [vmem:[%s2185 + $0xec] sm:$0xf]
      %v2246 = vld [vmem:[%s2185 + $0xf0] sm:$0xf]
      %v2247 = vld [vmem:[%s2185 + $0xf4] sm:$0xf]
      %v2248 = vld [vmem:[%s2185 + $0xf8] sm:$0xf]
      %v2249 = vld [vmem:[%s2185 + $0xfc] sm:$0xf]
      %v2250 = vld [vmem:[%s2185 + $0x100] sm:$0xf]
      %v2251 = vld [vmem:[%s2185 + $0x104] sm:$0xf]
      %v2252 = vld [vmem:[%s2185 + $0x108] sm:$0xf]
      %v2253 = vld [vmem:[%s2185 + $0x10c] sm:$0xf]
      %v2254 = vld [vmem:[%s2185 + $0x110] sm:$0xf]
      %v2255 = vld [vmem:[%s2185 + $0x114] sm:$0xf]
      %v2256 = vld [vmem:[%s2185 + $0x118] sm:$0xf]
      %v2257 = vld [vmem:[%s2185 + $0x11c] sm:$0xf]
      %v2258 = vld [vmem:[%s2185 + $0x120] sm:$0xf]
      %v2259 = vld [vmem:[%s2185 + $0x124] sm:$0xf]
      %v2260 = vld [vmem:[%s2185 + $0x128] sm:$0xf]
      %v2261 = vld [vmem:[%s2185 + $0x12c] sm:$0xf]
      %v2262 = vld [vmem:[%s2185 + $0x130] sm:$0xf]
      %v2263 = vld [vmem:[%s2185 + $0x134] sm:$0xf]
      %v2264 = vld [vmem:[%s2185 + $0x138] sm:$0xf]
      %v2265 = vld [vmem:[%s2185 + $0x13c] sm:$0xf]
      %v2266 = vld [vmem:[%s2185 + $0x140] sm:$0xf]
      %v2267 = vld [vmem:[%s2185 + $0x144] sm:$0xf]
      %v2268 = vld [vmem:[%s2185 + $0x148] sm:$0xf]
      %v2269 = vld [vmem:[%s2185 + $0x14c] sm:$0xf]
      %v2270 = vld [vmem:[%s2185 + $0x150] sm:$0xf]
      %v2271 = vld [vmem:[%s2185 + $0x154] sm:$0xf]
      %v2272 = vld [vmem:[%s2185 + $0x158] sm:$0xf]
      %v2273 = vld [vmem:[%s2185 + $0x15c] sm:$0xf]
      %v2274 = vld [vmem:[%s2185 + $0x160] sm:$0xf]
      %v2275 = vld [vmem:[%s2185 + $0x164] sm:$0xf]
      %v2276 = vld [vmem:[%s2185 + $0x168] sm:$0xf]
      %v2277 = vld [vmem:[%s2185 + $0x16c] sm:$0xf]
      %v2278 = vld [vmem:[%s2185 + $0x170] sm:$0xf]
      %v2279 = vld [vmem:[%s2185 + $0x174] sm:$0xf]
      %v2280 = vld [vmem:[%s2185 + $0x178] sm:$0xf]
      %s2281 = scalar_lea.vmem %s316, 2
      %v2282 = vld [vmem:[%s2281] sm:$0x1]
      %v2284 = vperm.slane %v2282, 0
      %v2381 = vunpack.c.l.b16 %v2186
      %v2382 = vunpack.c.l.b16 %v2187
      %v2383 = vunpack.c.l.b16 %v2188
      %v2384 = vunpack.c.l.b16 %v2189
      %v2385 = vunpack.c.l.b16 %v2190
      %v2386 = vunpack.c.l.b16 %v2191
      %v2387 = vunpack.c.l.b16 %v2192
      %v2388 = vunpack.c.l.b16 %v2193
      %v2389 = vunpack.c.l.b16 %v2194
      %v2390 = vunpack.c.l.b16 %v2195
      %v2391 = vunpack.c.l.b16 %v2196
      %v2392 = vunpack.c.l.b16 %v2197
      %v2393 = vunpack.c.l.b16 %v2198
      %v2394 = vunpack.c.l.b16 %v2199
      %v2395 = vunpack.c.l.b16 %v2200
      %v2396 = vunpack.c.l.b16 %v2201
      %v2397 = vunpack.c.l.b16 %v2202
      %v2398 = vunpack.c.l.b16 %v2203
      %v2399 = vunpack.c.l.b16 %v2204
      %v2400 = vunpack.c.l.b16 %v2205
      %v2401 = vunpack.c.l.b16 %v2206
      %v2402 = vunpack.c.l.b16 %v2207
      %v2403 = vunpack.c.l.b16 %v2208
      %v2404 = vunpack.c.l.b16 %v2209
      %v2405 = vunpack.c.l.b16 %v2210
      %v2406 = vunpack.c.l.b16 %v2211
      %v2407 = vunpack.c.l.b16 %v2212
      %v2408 = vunpack.c.l.b16 %v2213
      %v2409 = vunpack.c.l.b16 %v2214
      %v2410 = vunpack.c.l.b16 %v2215
      %v2411 = vunpack.c.l.b16 %v2216
      %v2412 = vunpack.c.l.b16 %v2217
      %v2413 = vunpack.c.l.b16 %v2218
      %v2414 = vunpack.c.l.b16 %v2219
      %v2415 = vunpack.c.l.b16 %v2220
      %v2416 = vunpack.c.l.b16 %v2221
      %v2417 = vunpack.c.l.b16 %v2222
      %v2418 = vunpack.c.l.b16 %v2223
      %v2419 = vunpack.c.l.b16 %v2224
      %v2420 = vunpack.c.l.b16 %v2225
      %v2421 = vunpack.c.l.b16 %v2226
      %v2422 = vunpack.c.l.b16 %v2227
      %v2423 = vunpack.c.l.b16 %v2228
      %v2424 = vunpack.c.l.b16 %v2229
      %v2425 = vunpack.c.l.b16 %v2230
      %v2426 = vunpack.c.l.b16 %v2231
      %v2427 = vunpack.c.l.b16 %v2232
      %v2428 = vunpack.c.l.b16 %v2233
      %v2429 = vunpack.c.l.b16 %v2234
      %v2430 = vunpack.c.l.b16 %v2235
      %v2431 = vunpack.c.l.b16 %v2236
      %v2432 = vunpack.c.l.b16 %v2237
      %v2433 = vunpack.c.l.b16 %v2238
      %v2434 = vunpack.c.l.b16 %v2239
      %v2435 = vunpack.c.l.b16 %v2240
      %v2436 = vunpack.c.l.b16 %v2241
      %v2437 = vunpack.c.l.b16 %v2242
      %v2438 = vunpack.c.l.b16 %v2243
      %v2439 = vunpack.c.l.b16 %v2244
      %v2440 = vunpack.c.l.b16 %v2245
      %v2441 = vunpack.c.l.b16 %v2246
      %v2442 = vunpack.c.l.b16 %v2247
      %v2443 = vunpack.c.l.b16 %v2248
      %v2444 = vunpack.c.l.b16 %v2249
      %v2445 = vunpack.c.l.b16 %v2250
      %v2446 = vunpack.c.l.b16 %v2251
      %v2447 = vunpack.c.l.b16 %v2252
      %v2448 = vunpack.c.l.b16 %v2253
      %v2449 = vunpack.c.l.b16 %v2254
      %v2450 = vunpack.c.l.b16 %v2255
      %v2451 = vunpack.c.l.b16 %v2256
      %v2452 = vunpack.c.l.b16 %v2257
      %v2453 = vunpack.c.l.b16 %v2258
      %v2454 = vunpack.c.l.b16 %v2259
      %v2455 = vunpack.c.l.b16 %v2260
      %v2456 = vunpack.c.l.b16 %v2261
      %v2457 = vunpack.c.l.b16 %v2262
      %v2458 = vunpack.c.l.b16 %v2263
      %v2459 = vunpack.c.l.b16 %v2264
      %v2460 = vunpack.c.l.b16 %v2265
      %v2461 = vunpack.c.l.b16 %v2266
      %v2462 = vunpack.c.l.b16 %v2267
      %v2463 = vunpack.c.l.b16 %v2268
      %v2464 = vunpack.c.l.b16 %v2269
      %v2465 = vunpack.c.l.b16 %v2270
      %v2466 = vunpack.c.l.b16 %v2271
      %v2467 = vunpack.c.l.b16 %v2272
      %v2468 = vunpack.c.l.b16 %v2273
      %v2469 = vunpack.c.l.b16 %v2274
      %v2470 = vunpack.c.l.b16 %v2275
      %v2471 = vunpack.c.l.b16 %v2276
      %v2472 = vunpack.c.l.b16 %v2277
      %v2473 = vunpack.c.l.b16 %v2278
      %v2474 = vunpack.c.l.b16 %v2279
      %v2475 = vunpack.c.l.b16 %v2280
      %v2476 = vpack.c.b16 %v2382, %v2381
      %v2477 = vpack.c.b16 %v2384, %v2383
      %v2478 = vpack.c.b16 %v2386, %v2385
      %v2479 = vpack.c.b16 %v2388, %v2387
      %v2480 = vpack.c.b16 %v2390, %v2389
      %v2481 = vpack.c.b16 %v2392, %v2391
      %v2482 = vpack.c.b16 %v2394, %v2393
      %v2483 = vpack.c.b16 %v2396, %v2395
      %v2484 = vpack.c.b16 %v2398, %v2397
      %v2485 = vpack.c.b16 %v2400, %v2399
      %v2486 = vpack.c.b16 %v2402, %v2401
      %v2487 = vpack.c.b16 %v2404, %v2403
      %v2488 = vpack.c.b16 %v2406, %v2405
      %v2489 = vpack.c.b16 %v2408, %v2407
      %v2490 = vpack.c.b16 %v2410, %v2409
      %v2491 = vpack.c.b16 %v2412, %v2411
      %v2492 = vpack.c.b16 %v2414, %v2413
      %v2493 = vpack.c.b16 %v2416, %v2415
      %v2494 = vpack.c.b16 %v2418, %v2417
      %v2495 = vpack.c.b16 %v2420, %v2419
      %v2496 = vpack.c.b16 %v2422, %v2421
      %v2497 = vpack.c.b16 %v2424, %v2423
      %v2498 = vpack.c.b16 %v2426, %v2425
      %v2499 = vpack.c.b16 %v2428, %v2427
      %v2500 = vpack.c.b16 %v2430, %v2429
      %v2501 = vpack.c.b16 %v2432, %v2431
      %v2502 = vpack.c.b16 %v2434, %v2433
      %v2503 = vpack.c.b16 %v2436, %v2435
      %v2504 = vpack.c.b16 %v2438, %v2437
      %v2505 = vpack.c.b16 %v2440, %v2439
      %v2506 = vpack.c.b16 %v2442, %v2441
      %v2507 = vpack.c.b16 %v2444, %v2443
      %v2508 = vpack.c.b16 %v2446, %v2445
      %v2509 = vpack.c.b16 %v2448, %v2447
      %v2510 = vpack.c.b16 %v2450, %v2449
      %v2511 = vpack.c.b16 %v2452, %v2451
      %v2512 = vpack.c.b16 %v2454, %v2453
      %v2513 = vpack.c.b16 %v2456, %v2455
      %v2514 = vpack.c.b16 %v2458, %v2457
      %v2515 = vpack.c.b16 %v2460, %v2459
      %v2516 = vpack.c.b16 %v2462, %v2461
      %v2517 = vpack.c.b16 %v2464, %v2463
      %v2518 = vpack.c.b16 %v2466, %v2465
      %v2519 = vpack.c.b16 %v2468, %v2467
      %v2520 = vpack.c.b16 %v2470, %v2469
      %v2521 = vpack.c.b16 %v2472, %v2471
      %v2522 = vpack.c.b16 %v2474, %v2473
      %v2523 = vpack.c.b16 %v2475, %v2475
      %v2572 = vsel %vm1013, %v2184, 0
      %v2575 = vsel %vm1017, %v2523, 0
      %2577 = vmatpush.bf16.msra.mxu0 %v2483
      %2578 = vmatpush.bf16.msra.mxu0 %v2482
      %2579 = vmatpush.bf16.msra.mxu0 %v2481
      %2580 = vmatpush.bf16.msra.mxu0 %v2480
      %2581 = vmatpush.bf16.msra.mxu0 %v2479
      %2582 = vmatpush.bf16.msra.mxu0 %v2478
      %2583 = vmatpush.bf16.msra.mxu0 %v2477
      %2584 = vmatpush.bf16.msra.mxu0 %v2476
      %2585 = vmatmul.bf16.gmra.mxu0 %v2179
      %v2586 = vpop.f32.mrf.mxu0
      %v2587 = vadd.f32 %v2284, %v2586
      %v2588 = vpop.f32.mrf.mxu0
      %2589 = vdwg.mxu0
      %2590 = vmatpush.bf16.msra.mxu0 %v2491
      %2591 = vmatpush.bf16.msra.mxu0 %v2490
      %2592 = vmatpush.bf16.msra.mxu0 %v2489
      %2593 = vmatpush.bf16.msra.mxu0 %v2488
      %2594 = vmatpush.bf16.msra.mxu0 %v2487
      %2595 = vmatpush.bf16.msra.mxu0 %v2486
      %2596 = vmatpush.bf16.msra.mxu0 %v2485
      %2597 = vmatpush.bf16.msra.mxu0 %v2484
      %2598 = vmatmul.bf16.gmra.mxu0 %v2180
      %v2599 = vpop.f32.mrf.mxu0
      %v2600 = vadd.f32 %v2587, %v2599
      %v2601 = vpop.f32.mrf.mxu0
      %2602 = vdwg.mxu0
      %2603 = vmatpush.bf16.msra.mxu0 %v2499
      %2604 = vmatpush.bf16.msra.mxu0 %v2498
      %2605 = vmatpush.bf16.msra.mxu0 %v2497
      %2606 = vmatpush.bf16.msra.mxu0 %v2496
      %2607 = vmatpush.bf16.msra.mxu0 %v2495
      %2608 = vmatpush.bf16.msra.mxu0 %v2494
      %2609 = vmatpush.bf16.msra.mxu0 %v2493
      %2610 = vmatpush.bf16.msra.mxu0 %v2492
      %2611 = vmatmul.bf16.gmra.mxu0 %v2181
      %v2612 = vpop.f32.mrf.mxu0
      %v2613 = vadd.f32 %v2600, %v2612
      %v2614 = vpop.f32.mrf.mxu0
      %2615 = vdwg.mxu0
      %2616 = vmatpush.bf16.msra.mxu0 %v2507
      %2617 = vmatpush.bf16.msra.mxu0 %v2506
      %2618 = vmatpush.bf16.msra.mxu0 %v2505
      %2619 = vmatpush.bf16.msra.mxu0 %v2504
      %2620 = vmatpush.bf16.msra.mxu0 %v2503
      %2621 = vmatpush.bf16.msra.mxu0 %v2502
      %2622 = vmatpush.bf16.msra.mxu0 %v2501
      %2623 = vmatpush.bf16.msra.mxu0 %v2500
      %2624 = vmatmul.bf16.gmra.mxu0 %v2182
      %v2625 = vpop.f32.mrf.mxu0
      %v2626 = vadd.f32 %v2613, %v2625
      %v2627 = vpop.f32.mrf.mxu0
      %2628 = vdwg.mxu0
      %2629 = vmatpush.bf16.msra.mxu0 %v2515
      %2630 = vmatpush.bf16.msra.mxu0 %v2514
      %2631 = vmatpush.bf16.msra.mxu0 %v2513
      %2632 = vmatpush.bf16.msra.mxu0 %v2512
      %2633 = vmatpush.bf16.msra.mxu0 %v2511
      %2634 = vmatpush.bf16.msra.mxu0 %v2510
      %2635 = vmatpush.bf16.msra.mxu0 %v2509
      %2636 = vmatpush.bf16.msra.mxu0 %v2508
      %2637 = vmatmul.bf16.gmra.mxu0 %v2183
      %v2638 = vpop.f32.mrf.mxu0
      %v2639 = vadd.f32 %v2626, %v2638
      %v2640 = vpop.f32.mrf.mxu0
      %2641 = vdwg.mxu0
      %2642 = vmatpush.bf16.msra.mxu0 %v2575
      %2643 = vmatpush.bf16.msra.mxu0 %v2522
      %2644 = vmatpush.bf16.msra.mxu0 %v2521
      %2645 = vmatpush.bf16.msra.mxu0 %v2520
      %2646 = vmatpush.bf16.msra.mxu0 %v2519
      %2647 = vmatpush.bf16.msra.mxu0 %v2518
      %2648 = vmatpush.bf16.msra.mxu0 %v2517
      %2649 = vmatpush.bf16.msra.mxu0 %v2516
      %2650 = vmatmul.bf16.gmra.mxu0 %v2572
      %v2651 = vpop.f32.mrf.mxu0
      %v2652 = vadd.f32 %v2639, %v2651
      %v2653 = vpop.f32.mrf.mxu0
      %2654 = vdwg.mxu0
      %v2655 = vmax.f32 %v2652, 0.0
      %v2656 = vmul.f32 %v2655, %v1101
      %v2657 = vsel %vm516, %v2656, 0.0
      %2658 = vadd.xlane.f32.xlu0 %v2657
      %v2659 = vpop.xlane.xlu0 %2658
      %v2660 = vrcp.pop %v2659
      %v2661 = vmul.f32 %v2655, %v2660
      %s2662 = scalar_lea.vmem %s322, 16
      %2663 = vst.msk [vmem:[%s2662] sm:$0xff] %vm516, %v2661
      %s2664 = scalar_lea.vmem %s298, 720
      %v2665 = vld [vmem:[%s2664] sm:$0xff]
      %v2666 = vld [vmem:[%s2664 + $0x8] sm:$0xff]
      %v2667 = vld [vmem:[%s2664 + $0x10] sm:$0xff]
      %v2668 = vld [vmem:[%s2664 + $0x18] sm:$0xff]
      %v2669 = vld [vmem:[%s2664 + $0x20] sm:$0xff]
      %v2670 = vld [vmem:[%s2664 + $0x28] sm:$0xff]
      %v2671 = vld [vmem:[%s2664 + $0x30] sm:$0xff]
      %v2672 = vld [vmem:[%s2664 + $0x38] sm:$0xff]
      %v2673 = vld [vmem:[%s2664 + $0x40] sm:$0xff]
      %v2674 = vld [vmem:[%s2664 + $0x48] sm:$0xff]
      %v2675 = vld [vmem:[%s2664 + $0x50] sm:$0xff]
      %v2676 = vld [vmem:[%s2664 + $0x58] sm:$0xff]
      %v2677 = vld [vmem:[%s2664 + $0x60] sm:$0xff]
      %v2678 = vld [vmem:[%s2664 + $0x68] sm:$0xff]
      %v2679 = vld [vmem:[%s2664 + $0x70] sm:$0xff]
      %v2680 = vld [vmem:[%s2664 + $0x78] sm:$0xff]
      %v2681 = vld [vmem:[%s2664 + $0x80] sm:$0xff]
      %v2682 = vld [vmem:[%s2664 + $0x88] sm:$0xff]
      %v2683 = vld [vmem:[%s2664 + $0x90] sm:$0xff]
      %v2684 = vld [vmem:[%s2664 + $0x98] sm:$0xff]
      %v2685 = vld [vmem:[%s2664 + $0xa0] sm:$0xff]
      %v2686 = vld [vmem:[%s2664 + $0xa8] sm:$0xff]
      %v2687 = vld [vmem:[%s2664 + $0xb0] sm:$0xff]
      %v2688 = vld [vmem:[%s2664 + $0xb8] sm:$0xff]
      %v2689 = vld [vmem:[%s2664 + $0xc0] sm:$0xff]
      %v2690 = vld [vmem:[%s2664 + $0xc8] sm:$0xff]
      %v2691 = vld [vmem:[%s2664 + $0xd0] sm:$0xff]
      %v2692 = vld [vmem:[%s2664 + $0xd8] sm:$0x33]
      %v2693 = vld [vmem:[%s2664 + $0xe0] sm:$0x33]
      %v2694 = vld [vmem:[%s2664 + $0xe8] sm:$0x33]
      %s2695 = scalar_lea.vmem %s304, 18
      %v2696 = vld [vmem:[%s2695] sm:$0x3f]
      %v2698 = vperm.slane %v2696, 0
      %v2699 = vperm.slane %v2696, 1
      %v2700 = vperm.slane %v2696, 2
      %v2701 = vperm.slane %v2696, 3
      %v2702 = vperm.slane %v2696, 4
      %v2703 = vperm.slane %v2696, 5
      %v2740 = vunpack.c.l.b16 %v2665
      %v2741 = vunpack.c.h.b16 %v2665
      %v2742 = vunpack.c.l.b16 %v2666
      %v2743 = vunpack.c.h.b16 %v2666
      %v2744 = vunpack.c.l.b16 %v2667
      %v2745 = vunpack.c.h.b16 %v2667
      %v2746 = vunpack.c.l.b16 %v2668
      %v2747 = vunpack.c.h.b16 %v2668
      %v2748 = vunpack.c.l.b16 %v2669
      %v2749 = vunpack.c.h.b16 %v2669
      %v2750 = vunpack.c.l.b16 %v2670
      %v2751 = vunpack.c.h.b16 %v2670
      %v2752 = vunpack.c.l.b16 %v2671
      %v2753 = vunpack.c.h.b16 %v2671
      %v2754 = vunpack.c.l.b16 %v2672
      %v2755 = vunpack.c.h.b16 %v2672
      %v2756 = vunpack.c.l.b16 %v2673
      %v2757 = vunpack.c.h.b16 %v2673
      %v2758 = vunpack.c.l.b16 %v2674
      %v2759 = vunpack.c.h.b16 %v2674
      %v2760 = vunpack.c.l.b16 %v2675
      %v2761 = vunpack.c.h.b16 %v2675
      %v2762 = vunpack.c.l.b16 %v2676
      %v2763 = vunpack.c.h.b16 %v2676
      %v2764 = vunpack.c.l.b16 %v2677
      %v2765 = vunpack.c.h.b16 %v2677
      %v2766 = vunpack.c.l.b16 %v2678
      %v2767 = vunpack.c.h.b16 %v2678
      %v2768 = vunpack.c.l.b16 %v2679
      %v2769 = vunpack.c.h.b16 %v2679
      %v2770 = vunpack.c.l.b16 %v2680
      %v2771 = vunpack.c.h.b16 %v2680
      %v2772 = vunpack.c.l.b16 %v2681
      %v2773 = vunpack.c.h.b16 %v2681
      %v2774 = vunpack.c.l.b16 %v2682
      %v2775 = vunpack.c.h.b16 %v2682
      %v2776 = vunpack.c.l.b16 %v2683
      %v2777 = vunpack.c.h.b16 %v2683
      %v2778 = vunpack.c.l.b16 %v2684
      %v2779 = vunpack.c.h.b16 %v2684
      %v2780 = vunpack.c.l.b16 %v2685
      %v2781 = vunpack.c.h.b16 %v2685
      %v2782 = vunpack.c.l.b16 %v2686
      %v2783 = vunpack.c.h.b16 %v2686
      %v2784 = vunpack.c.l.b16 %v2687
      %v2785 = vunpack.c.h.b16 %v2687
      %v2786 = vunpack.c.l.b16 %v2688
      %v2787 = vunpack.c.h.b16 %v2688
      %v2788 = vunpack.c.l.b16 %v2689
      %v2789 = vunpack.c.h.b16 %v2689
      %v2790 = vunpack.c.l.b16 %v2690
      %v2791 = vunpack.c.h.b16 %v2690
      %v2792 = vunpack.c.l.b16 %v2691
      %v2793 = vunpack.c.h.b16 %v2691
      %v2794 = vunpack.c.l.b16 %v2692
      %v2795 = vunpack.c.h.b16 %v2692
      %v2796 = vunpack.c.l.b16 %v2693
      %v2797 = vunpack.c.h.b16 %v2693
      %v2798 = vunpack.c.l.b16 %v2694
      %v2799 = vunpack.c.h.b16 %v2694
      %v2800 = vpack.c.b16 %v2746, %v2740
      %v2801 = vpack.c.b16 %v2747, %v2741
      %v2802 = vpack.c.b16 %v2748, %v2742
      %v2803 = vpack.c.b16 %v2749, %v2743
      %v2804 = vpack.c.b16 %v2750, %v2744
      %v2805 = vpack.c.b16 %v2751, %v2745
      %v2806 = vpack.c.b16 %v2758, %v2752
      %v2807 = vpack.c.b16 %v2759, %v2753
      %v2808 = vpack.c.b16 %v2760, %v2754
      %v2809 = vpack.c.b16 %v2761, %v2755
      %v2810 = vpack.c.b16 %v2762, %v2756
      %v2811 = vpack.c.b16 %v2763, %v2757
      %v2812 = vpack.c.b16 %v2770, %v2764
      %v2813 = vpack.c.b16 %v2771, %v2765
      %v2814 = vpack.c.b16 %v2772, %v2766
      %v2815 = vpack.c.b16 %v2773, %v2767
      %v2816 = vpack.c.b16 %v2774, %v2768
      %v2817 = vpack.c.b16 %v2775, %v2769
      %v2818 = vpack.c.b16 %v2782, %v2776
      %v2819 = vpack.c.b16 %v2783, %v2777
      %v2820 = vpack.c.b16 %v2784, %v2778
      %v2821 = vpack.c.b16 %v2785, %v2779
      %v2822 = vpack.c.b16 %v2786, %v2780
      %v2823 = vpack.c.b16 %v2787, %v2781
      %v2824 = vpack.c.b16 %v2794, %v2788
      %v2825 = vpack.c.b16 %v2795, %v2789
      %v2826 = vpack.c.b16 %v2796, %v2790
      %v2827 = vpack.c.b16 %v2797, %v2791
      %v2828 = vpack.c.b16 %v2798, %v2792
      %v2829 = vpack.c.b16 %v2799, %v2793
      %v2855 = vsel %vm520, %v2824, 0
      %v2858 = vsel %vm520, %v2825, 0
      %v2861 = vsel %vm520, %v2826, 0
      %v2864 = vsel %vm520, %v2827, 0
      %v2867 = vsel %vm520, %v2828, 0
      %v2870 = vsel %vm520, %v2829, 0
      %2872 = vmatpush.bf16.msra.mxu0 0
      %2873 = vmatpush.bf16.msra.mxu0 0
      %2874 = vmatpush.bf16.msra.mxu0 0
      %2875 = vmatpush.bf16.msra.mxu0 %v2855
      %2876 = vmatpush.bf16.msra.mxu0 %v2818
      %2877 = vmatpush.bf16.msra.mxu0 %v2812
      %2878 = vmatpush.bf16.msra.mxu0 %v2806
      %2879 = vmatpush.bf16.msra.mxu0 %v2800
      %2880 = vmatmul.bf16.gmra.mxu0 %v518
      %v2881 = vpop.f32.mrf.mxu0
      %v2882 = vadd.f32 %v2698, %v2881
      %v2883 = vpop.f32.mrf.mxu0
      %2884 = vdwg.mxu0
      %2885 = vmatpush.bf16.msra.mxu0 0
      %2886 = vmatpush.bf16.msra.mxu0 0
      %2887 = vmatpush.bf16.msra.mxu0 0
      %2888 = vmatpush.bf16.msra.mxu0 %v2858
      %2889 = vmatpush.bf16.msra.mxu0 %v2819
      %2890 = vmatpush.bf16.msra.mxu0 %v2813
      %2891 = vmatpush.bf16.msra.mxu0 %v2807
      %2892 = vmatpush.bf16.msra.mxu0 %v2801
      %2893 = vmatmul.bf16.gmra.mxu0 %v518
      %v2894 = vpop.f32.mrf.mxu0
      %v2895 = vadd.f32 %v2699, %v2894
      %v2896 = vpop.f32.mrf.mxu0
      %2897 = vdwg.mxu0
      %2898 = vmatpush.bf16.msra.mxu0 0
      %2899 = vmatpush.bf16.msra.mxu0 0
      %2900 = vmatpush.bf16.msra.mxu0 0
      %2901 = vmatpush.bf16.msra.mxu0 %v2861
      %2902 = vmatpush.bf16.msra.mxu0 %v2820
      %2903 = vmatpush.bf16.msra.mxu0 %v2814
      %2904 = vmatpush.bf16.msra.mxu0 %v2808
      %2905 = vmatpush.bf16.msra.mxu0 %v2802
      %2906 = vmatmul.bf16.gmra.mxu0 %v518
      %v2907 = vpop.f32.mrf.mxu0
      %v2908 = vadd.f32 %v2700, %v2907
      %v2909 = vpop.f32.mrf.mxu0
      %2910 = vdwg.mxu0
      %2911 = vmatpush.bf16.msra.mxu0 0
      %2912 = vmatpush.bf16.msra.mxu0 0
      %2913 = vmatpush.bf16.msra.mxu0 0
      %2914 = vmatpush.bf16.msra.mxu0 %v2864
      %2915 = vmatpush.bf16.msra.mxu0 %v2821
      %2916 = vmatpush.bf16.msra.mxu0 %v2815
      %2917 = vmatpush.bf16.msra.mxu0 %v2809
      %2918 = vmatpush.bf16.msra.mxu0 %v2803
      %2919 = vmatmul.bf16.gmra.mxu0 %v518
      %v2920 = vpop.f32.mrf.mxu0
      %v2921 = vadd.f32 %v2701, %v2920
      %v2922 = vpop.f32.mrf.mxu0
      %2923 = vdwg.mxu0
      %2924 = vmatpush.bf16.msra.mxu0 0
      %2925 = vmatpush.bf16.msra.mxu0 0
      %2926 = vmatpush.bf16.msra.mxu0 0
      %2927 = vmatpush.bf16.msra.mxu0 %v2867
      %2928 = vmatpush.bf16.msra.mxu0 %v2822
      %2929 = vmatpush.bf16.msra.mxu0 %v2816
      %2930 = vmatpush.bf16.msra.mxu0 %v2810
      %2931 = vmatpush.bf16.msra.mxu0 %v2804
      %2932 = vmatmul.bf16.gmra.mxu0 %v518
      %v2933 = vpop.f32.mrf.mxu0
      %v2934 = vadd.f32 %v2702, %v2933
      %v2935 = vpop.f32.mrf.mxu0
      %2936 = vdwg.mxu0
      %2937 = vmatpush.bf16.msra.mxu0 0
      %2938 = vmatpush.bf16.msra.mxu0 0
      %2939 = vmatpush.bf16.msra.mxu0 0
      %2940 = vmatpush.bf16.msra.mxu0 %v2870
      %2941 = vmatpush.bf16.msra.mxu0 %v2823
      %2942 = vmatpush.bf16.msra.mxu0 %v2817
      %2943 = vmatpush.bf16.msra.mxu0 %v2811
      %2944 = vmatpush.bf16.msra.mxu0 %v2805
      %2945 = vmatmul.bf16.gmra.mxu0 %v518
      %v2946 = vpop.f32.mrf.mxu0
      %v2947 = vadd.f32 %v2703, %v2946
      %v2948 = vpop.f32.mrf.mxu0
      %2949 = vdwg.mxu0
      %v2950 = vtanh.pop %v2882
      %v2951 = vtanh.pop %v2895
      %v2952 = vtanh.pop %v2908
      %v2953 = vtanh.pop %v2921
      %v2954 = vtanh.pop %v2934
      %v2955 = vtanh.pop %v2947
      %v2956 = vpack.c.bf16 %v2950, %v2950
      %v2957 = vpack.c.bf16 %v2951, %v2951
      %v2958 = vpack.c.bf16 %v2952, %v2952
      %v2959 = vpack.c.bf16 %v2953, %v2953
      %v2960 = vpack.c.bf16 %v2954, %v2954
      %v2961 = vpack.c.bf16 %v2955, %v2955
      %s2962 = scalar_lea.vmem %s311, 1140
      %v2963 = vld [vmem:[%s2962] sm:$0xf]
      %v2964 = vld [vmem:[%s2962 + $0x4] sm:$0xf]
      %v2965 = vld [vmem:[%s2962 + $0x8] sm:$0xf]
      %v2966 = vld [vmem:[%s2962 + $0xc] sm:$0xf]
      %v2967 = vld [vmem:[%s2962 + $0x10] sm:$0xf]
      %v2968 = vld [vmem:[%s2962 + $0x14] sm:$0xf]
      %v2969 = vld [vmem:[%s2962 + $0x18] sm:$0xf]
      %v2970 = vld [vmem:[%s2962 + $0x1c] sm:$0xf]
      %v2971 = vld [vmem:[%s2962 + $0x20] sm:$0xf]
      %v2972 = vld [vmem:[%s2962 + $0x24] sm:$0xf]
      %v2973 = vld [vmem:[%s2962 + $0x28] sm:$0xf]
      %v2974 = vld [vmem:[%s2962 + $0x2c] sm:$0xf]
      %v2975 = vld [vmem:[%s2962 + $0x30] sm:$0xf]
      %v2976 = vld [vmem:[%s2962 + $0x34] sm:$0xf]
      %v2977 = vld [vmem:[%s2962 + $0x38] sm:$0xf]
      %v2978 = vld [vmem:[%s2962 + $0x3c] sm:$0xf]
      %v2979 = vld [vmem:[%s2962 + $0x40] sm:$0xf]
      %v2980 = vld [vmem:[%s2962 + $0x44] sm:$0xf]
      %v2981 = vld [vmem:[%s2962 + $0x48] sm:$0xf]
      %v2982 = vld [vmem:[%s2962 + $0x4c] sm:$0xf]
      %v2983 = vld [vmem:[%s2962 + $0x50] sm:$0xf]
      %v2984 = vld [vmem:[%s2962 + $0x54] sm:$0xf]
      %v2985 = vld [vmem:[%s2962 + $0x58] sm:$0xf]
      %v2986 = vld [vmem:[%s2962 + $0x5c] sm:$0xf]
      %v2987 = vld [vmem:[%s2962 + $0x60] sm:$0xf]
      %v2988 = vld [vmem:[%s2962 + $0x64] sm:$0xf]
      %v2989 = vld [vmem:[%s2962 + $0x68] sm:$0xf]
      %v2990 = vld [vmem:[%s2962 + $0x6c] sm:$0xf]
      %v2991 = vld [vmem:[%s2962 + $0x70] sm:$0xf]
      %v2992 = vld [vmem:[%s2962 + $0x74] sm:$0xf]
      %v2993 = vld [vmem:[%s2962 + $0x78] sm:$0xf]
      %v2994 = vld [vmem:[%s2962 + $0x7c] sm:$0xf]
      %v2995 = vld [vmem:[%s2962 + $0x80] sm:$0xf]
      %v2996 = vld [vmem:[%s2962 + $0x84] sm:$0xf]
      %v2997 = vld [vmem:[%s2962 + $0x88] sm:$0xf]
      %v2998 = vld [vmem:[%s2962 + $0x8c] sm:$0xf]
      %v2999 = vld [vmem:[%s2962 + $0x90] sm:$0xf]
      %v3000 = vld [vmem:[%s2962 + $0x94] sm:$0xf]
      %v3001 = vld [vmem:[%s2962 + $0x98] sm:$0xf]
      %v3002 = vld [vmem:[%s2962 + $0x9c] sm:$0xf]
      %v3003 = vld [vmem:[%s2962 + $0xa0] sm:$0xf]
      %v3004 = vld [vmem:[%s2962 + $0xa4] sm:$0xf]
      %v3005 = vld [vmem:[%s2962 + $0xa8] sm:$0xf]
      %v3006 = vld [vmem:[%s2962 + $0xac] sm:$0xf]
      %v3007 = vld [vmem:[%s2962 + $0xb0] sm:$0xf]
      %v3008 = vld [vmem:[%s2962 + $0xb4] sm:$0xf]
      %v3009 = vld [vmem:[%s2962 + $0xb8] sm:$0xf]
      %v3010 = vld [vmem:[%s2962 + $0xbc] sm:$0xf]
      %v3011 = vld [vmem:[%s2962 + $0xc0] sm:$0xf]
      %v3012 = vld [vmem:[%s2962 + $0xc4] sm:$0xf]
      %v3013 = vld [vmem:[%s2962 + $0xc8] sm:$0xf]
      %v3014 = vld [vmem:[%s2962 + $0xcc] sm:$0xf]
      %v3015 = vld [vmem:[%s2962 + $0xd0] sm:$0xf]
      %v3016 = vld [vmem:[%s2962 + $0xd4] sm:$0xf]
      %v3017 = vld [vmem:[%s2962 + $0xd8] sm:$0xf]
      %v3018 = vld [vmem:[%s2962 + $0xdc] sm:$0xf]
      %v3019 = vld [vmem:[%s2962 + $0xe0] sm:$0xf]
      %v3020 = vld [vmem:[%s2962 + $0xe4] sm:$0xf]
      %v3021 = vld [vmem:[%s2962 + $0xe8] sm:$0xf]
      %v3022 = vld [vmem:[%s2962 + $0xec] sm:$0xf]
      %v3023 = vld [vmem:[%s2962 + $0xf0] sm:$0xf]
      %v3024 = vld [vmem:[%s2962 + $0xf4] sm:$0xf]
      %v3025 = vld [vmem:[%s2962 + $0xf8] sm:$0xf]
      %v3026 = vld [vmem:[%s2962 + $0xfc] sm:$0xf]
      %v3027 = vld [vmem:[%s2962 + $0x100] sm:$0xf]
      %v3028 = vld [vmem:[%s2962 + $0x104] sm:$0xf]
      %v3029 = vld [vmem:[%s2962 + $0x108] sm:$0xf]
      %v3030 = vld [vmem:[%s2962 + $0x10c] sm:$0xf]
      %v3031 = vld [vmem:[%s2962 + $0x110] sm:$0xf]
      %v3032 = vld [vmem:[%s2962 + $0x114] sm:$0xf]
      %v3033 = vld [vmem:[%s2962 + $0x118] sm:$0xf]
      %v3034 = vld [vmem:[%s2962 + $0x11c] sm:$0xf]
      %v3035 = vld [vmem:[%s2962 + $0x120] sm:$0xf]
      %v3036 = vld [vmem:[%s2962 + $0x124] sm:$0xf]
      %v3037 = vld [vmem:[%s2962 + $0x128] sm:$0xf]
      %v3038 = vld [vmem:[%s2962 + $0x12c] sm:$0xf]
      %v3039 = vld [vmem:[%s2962 + $0x130] sm:$0xf]
      %v3040 = vld [vmem:[%s2962 + $0x134] sm:$0xf]
      %v3041 = vld [vmem:[%s2962 + $0x138] sm:$0xf]
      %v3042 = vld [vmem:[%s2962 + $0x13c] sm:$0xf]
      %v3043 = vld [vmem:[%s2962 + $0x140] sm:$0xf]
      %v3044 = vld [vmem:[%s2962 + $0x144] sm:$0xf]
      %v3045 = vld [vmem:[%s2962 + $0x148] sm:$0xf]
      %v3046 = vld [vmem:[%s2962 + $0x14c] sm:$0xf]
      %v3047 = vld [vmem:[%s2962 + $0x150] sm:$0xf]
      %v3048 = vld [vmem:[%s2962 + $0x154] sm:$0xf]
      %v3049 = vld [vmem:[%s2962 + $0x158] sm:$0xf]
      %v3050 = vld [vmem:[%s2962 + $0x15c] sm:$0xf]
      %v3051 = vld [vmem:[%s2962 + $0x160] sm:$0xf]
      %v3052 = vld [vmem:[%s2962 + $0x164] sm:$0xf]
      %v3053 = vld [vmem:[%s2962 + $0x168] sm:$0xf]
      %v3054 = vld [vmem:[%s2962 + $0x16c] sm:$0xf]
      %v3055 = vld [vmem:[%s2962 + $0x170] sm:$0xf]
      %v3056 = vld [vmem:[%s2962 + $0x174] sm:$0xf]
      %v3057 = vld [vmem:[%s2962 + $0x178] sm:$0xf]
      %s3058 = scalar_lea.vmem %s316, 3
      %v3059 = vld [vmem:[%s3058] sm:$0x1]
      %v3061 = vperm.slane %v3059, 0
      %v3158 = vunpack.c.l.b16 %v2963
      %v3159 = vunpack.c.l.b16 %v2964
      %v3160 = vunpack.c.l.b16 %v2965
      %v3161 = vunpack.c.l.b16 %v2966
      %v3162 = vunpack.c.l.b16 %v2967
      %v3163 = vunpack.c.l.b16 %v2968
      %v3164 = vunpack.c.l.b16 %v2969
      %v3165 = vunpack.c.l.b16 %v2970
      %v3166 = vunpack.c.l.b16 %v2971
      %v3167 = vunpack.c.l.b16 %v2972
      %v3168 = vunpack.c.l.b16 %v2973
      %v3169 = vunpack.c.l.b16 %v2974
      %v3170 = vunpack.c.l.b16 %v2975
      %v3171 = vunpack.c.l.b16 %v2976
      %v3172 = vunpack.c.l.b16 %v2977
      %v3173 = vunpack.c.l.b16 %v2978
      %v3174 = vunpack.c.l.b16 %v2979
      %v3175 = vunpack.c.l.b16 %v2980
      %v3176 = vunpack.c.l.b16 %v2981
      %v3177 = vunpack.c.l.b16 %v2982
      %v3178 = vunpack.c.l.b16 %v2983
      %v3179 = vunpack.c.l.b16 %v2984
      %v3180 = vunpack.c.l.b16 %v2985
      %v3181 = vunpack.c.l.b16 %v2986
      %v3182 = vunpack.c.l.b16 %v2987
      %v3183 = vunpack.c.l.b16 %v2988
      %v3184 = vunpack.c.l.b16 %v2989
      %v3185 = vunpack.c.l.b16 %v2990
      %v3186 = vunpack.c.l.b16 %v2991
      %v3187 = vunpack.c.l.b16 %v2992
      %v3188 = vunpack.c.l.b16 %v2993
      %v3189 = vunpack.c.l.b16 %v2994
      %v3190 = vunpack.c.l.b16 %v2995
      %v3191 = vunpack.c.l.b16 %v2996
      %v3192 = vunpack.c.l.b16 %v2997
      %v3193 = vunpack.c.l.b16 %v2998
      %v3194 = vunpack.c.l.b16 %v2999
      %v3195 = vunpack.c.l.b16 %v3000
      %v3196 = vunpack.c.l.b16 %v3001
      %v3197 = vunpack.c.l.b16 %v3002
      %v3198 = vunpack.c.l.b16 %v3003
      %v3199 = vunpack.c.l.b16 %v3004
      %v3200 = vunpack.c.l.b16 %v3005
      %v3201 = vunpack.c.l.b16 %v3006
      %v3202 = vunpack.c.l.b16 %v3007
      %v3203 = vunpack.c.l.b16 %v3008
      %v3204 = vunpack.c.l.b16 %v3009
      %v3205 = vunpack.c.l.b16 %v3010
      %v3206 = vunpack.c.l.b16 %v3011
      %v3207 = vunpack.c.l.b16 %v3012
      %v3208 = vunpack.c.l.b16 %v3013
      %v3209 = vunpack.c.l.b16 %v3014
      %v3210 = vunpack.c.l.b16 %v3015
      %v3211 = vunpack.c.l.b16 %v3016
      %v3212 = vunpack.c.l.b16 %v3017
      %v3213 = vunpack.c.l.b16 %v3018
      %v3214 = vunpack.c.l.b16 %v3019
      %v3215 = vunpack.c.l.b16 %v3020
      %v3216 = vunpack.c.l.b16 %v3021
      %v3217 = vunpack.c.l.b16 %v3022
      %v3218 = vunpack.c.l.b16 %v3023
      %v3219 = vunpack.c.l.b16 %v3024
      %v3220 = vunpack.c.l.b16 %v3025
      %v3221 = vunpack.c.l.b16 %v3026
      %v3222 = vunpack.c.l.b16 %v3027
      %v3223 = vunpack.c.l.b16 %v3028
      %v3224 = vunpack.c.l.b16 %v3029
      %v3225 = vunpack.c.l.b16 %v3030
      %v3226 = vunpack.c.l.b16 %v3031
      %v3227 = vunpack.c.l.b16 %v3032
      %v3228 = vunpack.c.l.b16 %v3033
      %v3229 = vunpack.c.l.b16 %v3034
      %v3230 = vunpack.c.l.b16 %v3035
      %v3231 = vunpack.c.l.b16 %v3036
      %v3232 = vunpack.c.l.b16 %v3037
      %v3233 = vunpack.c.l.b16 %v3038
      %v3234 = vunpack.c.l.b16 %v3039
      %v3235 = vunpack.c.l.b16 %v3040
      %v3236 = vunpack.c.l.b16 %v3041
      %v3237 = vunpack.c.l.b16 %v3042
      %v3238 = vunpack.c.l.b16 %v3043
      %v3239 = vunpack.c.l.b16 %v3044
      %v3240 = vunpack.c.l.b16 %v3045
      %v3241 = vunpack.c.l.b16 %v3046
      %v3242 = vunpack.c.l.b16 %v3047
      %v3243 = vunpack.c.l.b16 %v3048
      %v3244 = vunpack.c.l.b16 %v3049
      %v3245 = vunpack.c.l.b16 %v3050
      %v3246 = vunpack.c.l.b16 %v3051
      %v3247 = vunpack.c.l.b16 %v3052
      %v3248 = vunpack.c.l.b16 %v3053
      %v3249 = vunpack.c.l.b16 %v3054
      %v3250 = vunpack.c.l.b16 %v3055
      %v3251 = vunpack.c.l.b16 %v3056
      %v3252 = vunpack.c.l.b16 %v3057
      %v3253 = vpack.c.b16 %v3159, %v3158
      %v3254 = vpack.c.b16 %v3161, %v3160
      %v3255 = vpack.c.b16 %v3163, %v3162
      %v3256 = vpack.c.b16 %v3165, %v3164
      %v3257 = vpack.c.b16 %v3167, %v3166
      %v3258 = vpack.c.b16 %v3169, %v3168
      %v3259 = vpack.c.b16 %v3171, %v3170
      %v3260 = vpack.c.b16 %v3173, %v3172
      %v3261 = vpack.c.b16 %v3175, %v3174
      %v3262 = vpack.c.b16 %v3177, %v3176
      %v3263 = vpack.c.b16 %v3179, %v3178
      %v3264 = vpack.c.b16 %v3181, %v3180
      %v3265 = vpack.c.b16 %v3183, %v3182
      %v3266 = vpack.c.b16 %v3185, %v3184
      %v3267 = vpack.c.b16 %v3187, %v3186
      %v3268 = vpack.c.b16 %v3189, %v3188
      %v3269 = vpack.c.b16 %v3191, %v3190
      %v3270 = vpack.c.b16 %v3193, %v3192
      %v3271 = vpack.c.b16 %v3195, %v3194
      %v3272 = vpack.c.b16 %v3197, %v3196
      %v3273 = vpack.c.b16 %v3199, %v3198
      %v3274 = vpack.c.b16 %v3201, %v3200
      %v3275 = vpack.c.b16 %v3203, %v3202
      %v3276 = vpack.c.b16 %v3205, %v3204
      %v3277 = vpack.c.b16 %v3207, %v3206
      %v3278 = vpack.c.b16 %v3209, %v3208
      %v3279 = vpack.c.b16 %v3211, %v3210
      %v3280 = vpack.c.b16 %v3213, %v3212
      %v3281 = vpack.c.b16 %v3215, %v3214
      %v3282 = vpack.c.b16 %v3217, %v3216
      %v3283 = vpack.c.b16 %v3219, %v3218
      %v3284 = vpack.c.b16 %v3221, %v3220
      %v3285 = vpack.c.b16 %v3223, %v3222
      %v3286 = vpack.c.b16 %v3225, %v3224
      %v3287 = vpack.c.b16 %v3227, %v3226
      %v3288 = vpack.c.b16 %v3229, %v3228
      %v3289 = vpack.c.b16 %v3231, %v3230
      %v3290 = vpack.c.b16 %v3233, %v3232
      %v3291 = vpack.c.b16 %v3235, %v3234
      %v3292 = vpack.c.b16 %v3237, %v3236
      %v3293 = vpack.c.b16 %v3239, %v3238
      %v3294 = vpack.c.b16 %v3241, %v3240
      %v3295 = vpack.c.b16 %v3243, %v3242
      %v3296 = vpack.c.b16 %v3245, %v3244
      %v3297 = vpack.c.b16 %v3247, %v3246
      %v3298 = vpack.c.b16 %v3249, %v3248
      %v3299 = vpack.c.b16 %v3251, %v3250
      %v3300 = vpack.c.b16 %v3252, %v3252
      %v3349 = vsel %vm1013, %v2961, 0
      %v3352 = vsel %vm1017, %v3300, 0
      %3354 = vmatpush.bf16.msra.mxu0 %v3260
      %3355 = vmatpush.bf16.msra.mxu0 %v3259
      %3356 = vmatpush.bf16.msra.mxu0 %v3258
      %3357 = vmatpush.bf16.msra.mxu0 %v3257
      %3358 = vmatpush.bf16.msra.mxu0 %v3256
      %3359 = vmatpush.bf16.msra.mxu0 %v3255
      %3360 = vmatpush.bf16.msra.mxu0 %v3254
      %3361 = vmatpush.bf16.msra.mxu0 %v3253
      %3362 = vmatmul.bf16.gmra.mxu0 %v2956
      %v3363 = vpop.f32.mrf.mxu0
      %v3364 = vadd.f32 %v3061, %v3363
      %v3365 = vpop.f32.mrf.mxu0
      %3366 = vdwg.mxu0
      %3367 = vmatpush.bf16.msra.mxu0 %v3268
      %3368 = vmatpush.bf16.msra.mxu0 %v3267
      %3369 = vmatpush.bf16.msra.mxu0 %v3266
      %3370 = vmatpush.bf16.msra.mxu0 %v3265
      %3371 = vmatpush.bf16.msra.mxu0 %v3264
      %3372 = vmatpush.bf16.msra.mxu0 %v3263
      %3373 = vmatpush.bf16.msra.mxu0 %v3262
      %3374 = vmatpush.bf16.msra.mxu0 %v3261
      %3375 = vmatmul.bf16.gmra.mxu0 %v2957
      %v3376 = vpop.f32.mrf.mxu0
      %v3377 = vadd.f32 %v3364, %v3376
      %v3378 = vpop.f32.mrf.mxu0
      %3379 = vdwg.mxu0
      %3380 = vmatpush.bf16.msra.mxu0 %v3276
      %3381 = vmatpush.bf16.msra.mxu0 %v3275
      %3382 = vmatpush.bf16.msra.mxu0 %v3274
      %3383 = vmatpush.bf16.msra.mxu0 %v3273
      %3384 = vmatpush.bf16.msra.mxu0 %v3272
      %3385 = vmatpush.bf16.msra.mxu0 %v3271
      %3386 = vmatpush.bf16.msra.mxu0 %v3270
      %3387 = vmatpush.bf16.msra.mxu0 %v3269
      %3388 = vmatmul.bf16.gmra.mxu0 %v2958
      %v3389 = vpop.f32.mrf.mxu0
      %v3390 = vadd.f32 %v3377, %v3389
      %v3391 = vpop.f32.mrf.mxu0
      %3392 = vdwg.mxu0
      %3393 = vmatpush.bf16.msra.mxu0 %v3284
      %3394 = vmatpush.bf16.msra.mxu0 %v3283
      %3395 = vmatpush.bf16.msra.mxu0 %v3282
      %3396 = vmatpush.bf16.msra.mxu0 %v3281
      %3397 = vmatpush.bf16.msra.mxu0 %v3280
      %3398 = vmatpush.bf16.msra.mxu0 %v3279
      %3399 = vmatpush.bf16.msra.mxu0 %v3278
      %3400 = vmatpush.bf16.msra.mxu0 %v3277
      %3401 = vmatmul.bf16.gmra.mxu0 %v2959
      %v3402 = vpop.f32.mrf.mxu0
      %v3403 = vadd.f32 %v3390, %v3402
      %v3404 = vpop.f32.mrf.mxu0
      %3405 = vdwg.mxu0
      %3406 = vmatpush.bf16.msra.mxu0 %v3292
      %3407 = vmatpush.bf16.msra.mxu0 %v3291
      %3408 = vmatpush.bf16.msra.mxu0 %v3290
      %3409 = vmatpush.bf16.msra.mxu0 %v3289
      %3410 = vmatpush.bf16.msra.mxu0 %v3288
      %3411 = vmatpush.bf16.msra.mxu0 %v3287
      %3412 = vmatpush.bf16.msra.mxu0 %v3286
      %3413 = vmatpush.bf16.msra.mxu0 %v3285
      %3414 = vmatmul.bf16.gmra.mxu0 %v2960
      %v3415 = vpop.f32.mrf.mxu0
      %v3416 = vadd.f32 %v3403, %v3415
      %v3417 = vpop.f32.mrf.mxu0
      %3418 = vdwg.mxu0
      %3419 = vmatpush.bf16.msra.mxu0 %v3352
      %3420 = vmatpush.bf16.msra.mxu0 %v3299
      %3421 = vmatpush.bf16.msra.mxu0 %v3298
      %3422 = vmatpush.bf16.msra.mxu0 %v3297
      %3423 = vmatpush.bf16.msra.mxu0 %v3296
      %3424 = vmatpush.bf16.msra.mxu0 %v3295
      %3425 = vmatpush.bf16.msra.mxu0 %v3294
      %3426 = vmatpush.bf16.msra.mxu0 %v3293
      %3427 = vmatmul.bf16.gmra.mxu0 %v3349
      %v3428 = vpop.f32.mrf.mxu0
      %v3429 = vadd.f32 %v3416, %v3428
      %v3430 = vpop.f32.mrf.mxu0
      %3431 = vdwg.mxu0
      %v3432 = vmax.f32 %v3429, 0.0
      %v3433 = vmul.f32 %v3432, %v1101
      %v3434 = vsel %vm516, %v3433, 0.0
      %3435 = vadd.xlane.f32.xlu0 %v3434
      %v3436 = vpop.xlane.xlu0 %3435
      %v3437 = vrcp.pop %v3436
      %v3438 = vmul.f32 %v3432, %v3437
      %s3439 = scalar_lea.vmem %s322, 24
      %3440 = vst.msk [vmem:[%s3439] sm:$0xff] %vm516, %v3438
      %s3441 = scalar_lea.vmem %s298, 960
      %v3442 = vld [vmem:[%s3441] sm:$0xff]
      %v3443 = vld [vmem:[%s3441 + $0x8] sm:$0xff]
      %v3444 = vld [vmem:[%s3441 + $0x10] sm:$0xff]
      %v3445 = vld [vmem:[%s3441 + $0x18] sm:$0xff]
      %v3446 = vld [vmem:[%s3441 + $0x20] sm:$0xff]
      %v3447 = vld [vmem:[%s3441 + $0x28] sm:$0xff]
      %v3448 = vld [vmem:[%s3441 + $0x30] sm:$0xff]
      %v3449 = vld [vmem:[%s3441 + $0x38] sm:$0xff]
      %v3450 = vld [vmem:[%s3441 + $0x40] sm:$0xff]
      %v3451 = vld [vmem:[%s3441 + $0x48] sm:$0xff]
      %v3452 = vld [vmem:[%s3441 + $0x50] sm:$0xff]
      %v3453 = vld [vmem:[%s3441 + $0x58] sm:$0xff]
      %v3454 = vld [vmem:[%s3441 + $0x60] sm:$0xff]
      %v3455 = vld [vmem:[%s3441 + $0x68] sm:$0xff]
      %v3456 = vld [vmem:[%s3441 + $0x70] sm:$0xff]
      %v3457 = vld [vmem:[%s3441 + $0x78] sm:$0xff]
      %v3458 = vld [vmem:[%s3441 + $0x80] sm:$0xff]
      %v3459 = vld [vmem:[%s3441 + $0x88] sm:$0xff]
      %v3460 = vld [vmem:[%s3441 + $0x90] sm:$0xff]
      %v3461 = vld [vmem:[%s3441 + $0x98] sm:$0xff]
      %v3462 = vld [vmem:[%s3441 + $0xa0] sm:$0xff]
      %v3463 = vld [vmem:[%s3441 + $0xa8] sm:$0xff]
      %v3464 = vld [vmem:[%s3441 + $0xb0] sm:$0xff]
      %v3465 = vld [vmem:[%s3441 + $0xb8] sm:$0xff]
      %v3466 = vld [vmem:[%s3441 + $0xc0] sm:$0xff]
      %v3467 = vld [vmem:[%s3441 + $0xc8] sm:$0xff]
      %v3468 = vld [vmem:[%s3441 + $0xd0] sm:$0xff]
      %v3469 = vld [vmem:[%s3441 + $0xd8] sm:$0x33]
      %v3470 = vld [vmem:[%s3441 + $0xe0] sm:$0x33]
      %v3471 = vld [vmem:[%s3441 + $0xe8] sm:$0x33]
      %s3472 = scalar_lea.vmem %s304, 24
      %v3473 = vld [vmem:[%s3472] sm:$0x3f]
      %v3475 = vperm.slane %v3473, 0
      %v3476 = vperm.slane %v3473, 1
      %v3477 = vperm.slane %v3473, 2
      %v3478 = vperm.slane %v3473, 3
      %v3479 = vperm.slane %v3473, 4
      %v3480 = vperm.slane %v3473, 5
      %v3517 = vunpack.c.l.b16 %v3442
      %v3518 = vunpack.c.h.b16 %v3442
      %v3519 = vunpack.c.l.b16 %v3443
      %v3520 = vunpack.c.h.b16 %v3443
      %v3521 = vunpack.c.l.b16 %v3444
      %v3522 = vunpack.c.h.b16 %v3444
      %v3523 = vunpack.c.l.b16 %v3445
      %v3524 = vunpack.c.h.b16 %v3445
      %v3525 = vunpack.c.l.b16 %v3446
      %v3526 = vunpack.c.h.b16 %v3446
      %v3527 = vunpack.c.l.b16 %v3447
      %v3528 = vunpack.c.h.b16 %v3447
      %v3529 = vunpack.c.l.b16 %v3448
      %v3530 = vunpack.c.h.b16 %v3448
      %v3531 = vunpack.c.l.b16 %v3449
      %v3532 = vunpack.c.h.b16 %v3449
      %v3533 = vunpack.c.l.b16 %v3450
      %v3534 = vunpack.c.h.b16 %v3450
      %v3535 = vunpack.c.l.b16 %v3451
      %v3536 = vunpack.c.h.b16 %v3451
      %v3537 = vunpack.c.l.b16 %v3452
      %v3538 = vunpack.c.h.b16 %v3452
      %v3539 = vunpack.c.l.b16 %v3453
      %v3540 = vunpack.c.h.b16 %v3453
      %v3541 = vunpack.c.l.b16 %v3454
      %v3542 = vunpack.c.h.b16 %v3454
      %v3543 = vunpack.c.l.b16 %v3455
      %v3544 = vunpack.c.h.b16 %v3455
      %v3545 = vunpack.c.l.b16 %v3456
      %v3546 = vunpack.c.h.b16 %v3456
      %v3547 = vunpack.c.l.b16 %v3457
      %v3548 = vunpack.c.h.b16 %v3457
      %v3549 = vunpack.c.l.b16 %v3458
      %v3550 = vunpack.c.h.b16 %v3458
      %v3551 = vunpack.c.l.b16 %v3459
      %v3552 = vunpack.c.h.b16 %v3459
      %v3553 = vunpack.c.l.b16 %v3460
      %v3554 = vunpack.c.h.b16 %v3460
      %v3555 = vunpack.c.l.b16 %v3461
      %v3556 = vunpack.c.h.b16 %v3461
      %v3557 = vunpack.c.l.b16 %v3462
      %v3558 = vunpack.c.h.b16 %v3462
      %v3559 = vunpack.c.l.b16 %v3463
      %v3560 = vunpack.c.h.b16 %v3463
      %v3561 = vunpack.c.l.b16 %v3464
      %v3562 = vunpack.c.h.b16 %v3464
      %v3563 = vunpack.c.l.b16 %v3465
      %v3564 = vunpack.c.h.b16 %v3465
      %v3565 = vunpack.c.l.b16 %v3466
      %v3566 = vunpack.c.h.b16 %v3466
      %v3567 = vunpack.c.l.b16 %v3467
      %v3568 = vunpack.c.h.b16 %v3467
      %v3569 = vunpack.c.l.b16 %v3468
      %v3570 = vunpack.c.h.b16 %v3468
      %v3571 = vunpack.c.l.b16 %v3469
      %v3572 = vunpack.c.h.b16 %v3469
      %v3573 = vunpack.c.l.b16 %v3470
      %v3574 = vunpack.c.h.b16 %v3470
      %v3575 = vunpack.c.l.b16 %v3471
      %v3576 = vunpack.c.h.b16 %v3471
      %v3577 = vpack.c.b16 %v3523, %v3517
      %v3578 = vpack.c.b16 %v3524, %v3518
      %v3579 = vpack.c.b16 %v3525, %v3519
      %v3580 = vpack.c.b16 %v3526, %v3520
      %v3581 = vpack.c.b16 %v3527, %v3521
      %v3582 = vpack.c.b16 %v3528, %v3522
      %v3583 = vpack.c.b16 %v3535, %v3529
      %v3584 = vpack.c.b16 %v3536, %v3530
      %v3585 = vpack.c.b16 %v3537, %v3531
      %v3586 = vpack.c.b16 %v3538, %v3532
      %v3587 = vpack.c.b16 %v3539, %v3533
      %v3588 = vpack.c.b16 %v3540, %v3534
      %v3589 = vpack.c.b16 %v3547, %v3541
      %v3590 = vpack.c.b16 %v3548, %v3542
      %v3591 = vpack.c.b16 %v3549, %v3543
      %v3592 = vpack.c.b16 %v3550, %v3544
      %v3593 = vpack.c.b16 %v3551, %v3545
      %v3594 = vpack.c.b16 %v3552, %v3546
      %v3595 = vpack.c.b16 %v3559, %v3553
      %v3596 = vpack.c.b16 %v3560, %v3554
      %v3597 = vpack.c.b16 %v3561, %v3555
      %v3598 = vpack.c.b16 %v3562, %v3556
      %v3599 = vpack.c.b16 %v3563, %v3557
      %v3600 = vpack.c.b16 %v3564, %v3558
      %v3601 = vpack.c.b16 %v3571, %v3565
      %v3602 = vpack.c.b16 %v3572, %v3566
      %v3603 = vpack.c.b16 %v3573, %v3567
      %v3604 = vpack.c.b16 %v3574, %v3568
      %v3605 = vpack.c.b16 %v3575, %v3569
      %v3606 = vpack.c.b16 %v3576, %v3570
      %v3632 = vsel %vm520, %v3601, 0
      %v3635 = vsel %vm520, %v3602, 0
      %v3638 = vsel %vm520, %v3603, 0
      %v3641 = vsel %vm520, %v3604, 0
      %v3644 = vsel %vm520, %v3605, 0
      %v3647 = vsel %vm520, %v3606, 0
      %3649 = vmatpush.bf16.msra.mxu0 0
      %3650 = vmatpush.bf16.msra.mxu0 0
      %3651 = vmatpush.bf16.msra.mxu0 0
      %3652 = vmatpush.bf16.msra.mxu0 %v3632
      %3653 = vmatpush.bf16.msra.mxu0 %v3595
      %3654 = vmatpush.bf16.msra.mxu0 %v3589
      %3655 = vmatpush.bf16.msra.mxu0 %v3583
      %3656 = vmatpush.bf16.msra.mxu0 %v3577
      %3657 = vmatmul.bf16.gmra.mxu0 %v518
      %v3658 = vpop.f32.mrf.mxu0
      %v3659 = vadd.f32 %v3475, %v3658
      %v3660 = vpop.f32.mrf.mxu0
      %3661 = vdwg.mxu0
      %3662 = vmatpush.bf16.msra.mxu0 0
      %3663 = vmatpush.bf16.msra.mxu0 0
      %3664 = vmatpush.bf16.msra.mxu0 0
      %3665 = vmatpush.bf16.msra.mxu0 %v3635
      %3666 = vmatpush.bf16.msra.mxu0 %v3596
      %3667 = vmatpush.bf16.msra.mxu0 %v3590
      %3668 = vmatpush.bf16.msra.mxu0 %v3584
      %3669 = vmatpush.bf16.msra.mxu0 %v3578
      %3670 = vmatmul.bf16.gmra.mxu0 %v518
      %v3671 = vpop.f32.mrf.mxu0
      %v3672 = vadd.f32 %v3476, %v3671
      %v3673 = vpop.f32.mrf.mxu0
      %3674 = vdwg.mxu0
      %3675 = vmatpush.bf16.msra.mxu0 0
      %3676 = vmatpush.bf16.msra.mxu0 0
      %3677 = vmatpush.bf16.msra.mxu0 0
      %3678 = vmatpush.bf16.msra.mxu0 %v3638
      %3679 = vmatpush.bf16.msra.mxu0 %v3597
      %3680 = vmatpush.bf16.msra.mxu0 %v3591
      %3681 = vmatpush.bf16.msra.mxu0 %v3585
      %3682 = vmatpush.bf16.msra.mxu0 %v3579
      %3683 = vmatmul.bf16.gmra.mxu0 %v518
      %v3684 = vpop.f32.mrf.mxu0
      %v3685 = vadd.f32 %v3477, %v3684
      %v3686 = vpop.f32.mrf.mxu0
      %3687 = vdwg.mxu0
      %3688 = vmatpush.bf16.msra.mxu0 0
      %3689 = vmatpush.bf16.msra.mxu0 0
      %3690 = vmatpush.bf16.msra.mxu0 0
      %3691 = vmatpush.bf16.msra.mxu0 %v3641
      %3692 = vmatpush.bf16.msra.mxu0 %v3598
      %3693 = vmatpush.bf16.msra.mxu0 %v3592
      %3694 = vmatpush.bf16.msra.mxu0 %v3586
      %3695 = vmatpush.bf16.msra.mxu0 %v3580
      %3696 = vmatmul.bf16.gmra.mxu0 %v518
      %v3697 = vpop.f32.mrf.mxu0
      %v3698 = vadd.f32 %v3478, %v3697
      %v3699 = vpop.f32.mrf.mxu0
      %3700 = vdwg.mxu0
      %3701 = vmatpush.bf16.msra.mxu0 0
      %3702 = vmatpush.bf16.msra.mxu0 0
      %3703 = vmatpush.bf16.msra.mxu0 0
      %3704 = vmatpush.bf16.msra.mxu0 %v3644
      %3705 = vmatpush.bf16.msra.mxu0 %v3599
      %3706 = vmatpush.bf16.msra.mxu0 %v3593
      %3707 = vmatpush.bf16.msra.mxu0 %v3587
      %3708 = vmatpush.bf16.msra.mxu0 %v3581
      %3709 = vmatmul.bf16.gmra.mxu0 %v518
      %v3710 = vpop.f32.mrf.mxu0
      %v3711 = vadd.f32 %v3479, %v3710
      %v3712 = vpop.f32.mrf.mxu0
      %3713 = vdwg.mxu0
      %3714 = vmatpush.bf16.msra.mxu0 0
      %3715 = vmatpush.bf16.msra.mxu0 0
      %3716 = vmatpush.bf16.msra.mxu0 0
      %3717 = vmatpush.bf16.msra.mxu0 %v3647
      %3718 = vmatpush.bf16.msra.mxu0 %v3600
      %3719 = vmatpush.bf16.msra.mxu0 %v3594
      %3720 = vmatpush.bf16.msra.mxu0 %v3588
      %3721 = vmatpush.bf16.msra.mxu0 %v3582
      %3722 = vmatmul.bf16.gmra.mxu0 %v518
      %v3723 = vpop.f32.mrf.mxu0
      %v3724 = vadd.f32 %v3480, %v3723
      %v3725 = vpop.f32.mrf.mxu0
      %3726 = vdwg.mxu0
      %v3727 = vtanh.pop %v3659
      %v3728 = vtanh.pop %v3672
      %v3729 = vtanh.pop %v3685
      %v3730 = vtanh.pop %v3698
      %v3731 = vtanh.pop %v3711
      %v3732 = vtanh.pop %v3724
      %v3733 = vpack.c.bf16 %v3727, %v3727
      %v3734 = vpack.c.bf16 %v3728, %v3728
      %v3735 = vpack.c.bf16 %v3729, %v3729
      %v3736 = vpack.c.bf16 %v3730, %v3730
      %v3737 = vpack.c.bf16 %v3731, %v3731
      %v3738 = vpack.c.bf16 %v3732, %v3732
      %s3739 = scalar_lea.vmem %s311, 1520
      %v3740 = vld [vmem:[%s3739] sm:$0xf]
      %v3741 = vld [vmem:[%s3739 + $0x4] sm:$0xf]
      %v3742 = vld [vmem:[%s3739 + $0x8] sm:$0xf]
      %v3743 = vld [vmem:[%s3739 + $0xc] sm:$0xf]
      %v3744 = vld [vmem:[%s3739 + $0x10] sm:$0xf]
      %v3745 = vld [vmem:[%s3739 + $0x14] sm:$0xf]
      %v3746 = vld [vmem:[%s3739 + $0x18] sm:$0xf]
      %v3747 = vld [vmem:[%s3739 + $0x1c] sm:$0xf]
      %v3748 = vld [vmem:[%s3739 + $0x20] sm:$0xf]
      %v3749 = vld [vmem:[%s3739 + $0x24] sm:$0xf]
      %v3750 = vld [vmem:[%s3739 + $0x28] sm:$0xf]
      %v3751 = vld [vmem:[%s3739 + $0x2c] sm:$0xf]
      %v3752 = vld [vmem:[%s3739 + $0x30] sm:$0xf]
      %v3753 = vld [vmem:[%s3739 + $0x34] sm:$0xf]
      %v3754 = vld [vmem:[%s3739 + $0x38] sm:$0xf]
      %v3755 = vld [vmem:[%s3739 + $0x3c] sm:$0xf]
      %v3756 = vld [vmem:[%s3739 + $0x40] sm:$0xf]
      %v3757 = vld [vmem:[%s3739 + $0x44] sm:$0xf]
      %v3758 = vld [vmem:[%s3739 + $0x48] sm:$0xf]
      %v3759 = vld [vmem:[%s3739 + $0x4c] sm:$0xf]
      %v3760 = vld [vmem:[%s3739 + $0x50] sm:$0xf]
      %v3761 = vld [vmem:[%s3739 + $0x54] sm:$0xf]
      %v3762 = vld [vmem:[%s3739 + $0x58] sm:$0xf]
      %v3763 = vld [vmem:[%s3739 + $0x5c] sm:$0xf]
      %v3764 = vld [vmem:[%s3739 + $0x60] sm:$0xf]
      %v3765 = vld [vmem:[%s3739 + $0x64] sm:$0xf]
      %v3766 = vld [vmem:[%s3739 + $0x68] sm:$0xf]
      %v3767 = vld [vmem:[%s3739 + $0x6c] sm:$0xf]
      %v3768 = vld [vmem:[%s3739 + $0x70] sm:$0xf]
      %v3769 = vld [vmem:[%s3739 + $0x74] sm:$0xf]
      %v3770 = vld [vmem:[%s3739 + $0x78] sm:$0xf]
      %v3771 = vld [vmem:[%s3739 + $0x7c] sm:$0xf]
      %v3772 = vld [vmem:[%s3739 + $0x80] sm:$0xf]
      %v3773 = vld [vmem:[%s3739 + $0x84] sm:$0xf]
      %v3774 = vld [vmem:[%s3739 + $0x88] sm:$0xf]
      %v3775 = vld [vmem:[%s3739 + $0x8c] sm:$0xf]
      %v3776 = vld [vmem:[%s3739 + $0x90] sm:$0xf]
      %v3777 = vld [vmem:[%s3739 + $0x94] sm:$0xf]
      %v3778 = vld [vmem:[%s3739 + $0x98] sm:$0xf]
      %v3779 = vld [vmem:[%s3739 + $0x9c] sm:$0xf]
      %v3780 = vld [vmem:[%s3739 + $0xa0] sm:$0xf]
      %v3781 = vld [vmem:[%s3739 + $0xa4] sm:$0xf]
      %v3782 = vld [vmem:[%s3739 + $0xa8] sm:$0xf]
      %v3783 = vld [vmem:[%s3739 + $0xac] sm:$0xf]
      %v3784 = vld [vmem:[%s3739 + $0xb0] sm:$0xf]
      %v3785 = vld [vmem:[%s3739 + $0xb4] sm:$0xf]
      %v3786 = vld [vmem:[%s3739 + $0xb8] sm:$0xf]
      %v3787 = vld [vmem:[%s3739 + $0xbc] sm:$0xf]
      %v3788 = vld [vmem:[%s3739 + $0xc0] sm:$0xf]
      %v3789 = vld [vmem:[%s3739 + $0xc4] sm:$0xf]
      %v3790 = vld [vmem:[%s3739 + $0xc8] sm:$0xf]
      %v3791 = vld [vmem:[%s3739 + $0xcc] sm:$0xf]
      %v3792 = vld [vmem:[%s3739 + $0xd0] sm:$0xf]
      %v3793 = vld [vmem:[%s3739 + $0xd4] sm:$0xf]
      %v3794 = vld [vmem:[%s3739 + $0xd8] sm:$0xf]
      %v3795 = vld [vmem:[%s3739 + $0xdc] sm:$0xf]
      %v3796 = vld [vmem:[%s3739 + $0xe0] sm:$0xf]
      %v3797 = vld [vmem:[%s3739 + $0xe4] sm:$0xf]
      %v3798 = vld [vmem:[%s3739 + $0xe8] sm:$0xf]
      %v3799 = vld [vmem:[%s3739 + $0xec] sm:$0xf]
      %v3800 = vld [vmem:[%s3739 + $0xf0] sm:$0xf]
      %v3801 = vld [vmem:[%s3739 + $0xf4] sm:$0xf]
      %v3802 = vld [vmem:[%s3739 + $0xf8] sm:$0xf]
      %v3803 = vld [vmem:[%s3739 + $0xfc] sm:$0xf]
      %v3804 = vld [vmem:[%s3739 + $0x100] sm:$0xf]
      %v3805 = vld [vmem:[%s3739 + $0x104] sm:$0xf]
      %v3806 = vld [vmem:[%s3739 + $0x108] sm:$0xf]
      %v3807 = vld [vmem:[%s3739 + $0x10c] sm:$0xf]
      %v3808 = vld [vmem:[%s3739 + $0x110] sm:$0xf]
      %v3809 = vld [vmem:[%s3739 + $0x114] sm:$0xf]
      %v3810 = vld [vmem:[%s3739 + $0x118] sm:$0xf]
      %v3811 = vld [vmem:[%s3739 + $0x11c] sm:$0xf]
      %v3812 = vld [vmem:[%s3739 + $0x120] sm:$0xf]
      %v3813 = vld [vmem:[%s3739 + $0x124] sm:$0xf]
      %v3814 = vld [vmem:[%s3739 + $0x128] sm:$0xf]
      %v3815 = vld [vmem:[%s3739 + $0x12c] sm:$0xf]
      %v3816 = vld [vmem:[%s3739 + $0x130] sm:$0xf]
      %v3817 = vld [vmem:[%s3739 + $0x134] sm:$0xf]
      %v3818 = vld [vmem:[%s3739 + $0x138] sm:$0xf]
      %v3819 = vld [vmem:[%s3739 + $0x13c] sm:$0xf]
      %v3820 = vld [vmem:[%s3739 + $0x140] sm:$0xf]
      %v3821 = vld [vmem:[%s3739 + $0x144] sm:$0xf]
      %v3822 = vld [vmem:[%s3739 + $0x148] sm:$0xf]
      %v3823 = vld [vmem:[%s3739 + $0x14c] sm:$0xf]
      %v3824 = vld [vmem:[%s3739 + $0x150] sm:$0xf]
      %v3825 = vld [vmem:[%s3739 + $0x154] sm:$0xf]
      %v3826 = vld [vmem:[%s3739 + $0x158] sm:$0xf]
      %v3827 = vld [vmem:[%s3739 + $0x15c] sm:$0xf]
      %v3828 = vld [vmem:[%s3739 + $0x160] sm:$0xf]
      %v3829 = vld [vmem:[%s3739 + $0x164] sm:$0xf]
      %v3830 = vld [vmem:[%s3739 + $0x168] sm:$0xf]
      %v3831 = vld [vmem:[%s3739 + $0x16c] sm:$0xf]
      %v3832 = vld [vmem:[%s3739 + $0x170] sm:$0xf]
      %v3833 = vld [vmem:[%s3739 + $0x174] sm:$0xf]
      %v3834 = vld [vmem:[%s3739 + $0x178] sm:$0xf]
      %s3835 = scalar_lea.vmem %s316, 4
      %v3836 = vld [vmem:[%s3835] sm:$0x1]
      %v3838 = vperm.slane %v3836, 0
      %v3935 = vunpack.c.l.b16 %v3740
      %v3936 = vunpack.c.l.b16 %v3741
      %v3937 = vunpack.c.l.b16 %v3742
      %v3938 = vunpack.c.l.b16 %v3743
      %v3939 = vunpack.c.l.b16 %v3744
      %v3940 = vunpack.c.l.b16 %v3745
      %v3941 = vunpack.c.l.b16 %v3746
      %v3942 = vunpack.c.l.b16 %v3747
      %v3943 = vunpack.c.l.b16 %v3748
      %v3944 = vunpack.c.l.b16 %v3749
      %v3945 = vunpack.c.l.b16 %v3750
      %v3946 = vunpack.c.l.b16 %v3751
      %v3947 = vunpack.c.l.b16 %v3752
      %v3948 = vunpack.c.l.b16 %v3753
      %v3949 = vunpack.c.l.b16 %v3754
      %v3950 = vunpack.c.l.b16 %v3755
      %v3951 = vunpack.c.l.b16 %v3756
      %v3952 = vunpack.c.l.b16 %v3757
      %v3953 = vunpack.c.l.b16 %v3758
      %v3954 = vunpack.c.l.b16 %v3759
      %v3955 = vunpack.c.l.b16 %v3760
      %v3956 = vunpack.c.l.b16 %v3761
      %v3957 = vunpack.c.l.b16 %v3762
      %v3958 = vunpack.c.l.b16 %v3763
      %v3959 = vunpack.c.l.b16 %v3764
      %v3960 = vunpack.c.l.b16 %v3765
      %v3961 = vunpack.c.l.b16 %v3766
      %v3962 = vunpack.c.l.b16 %v3767
      %v3963 = vunpack.c.l.b16 %v3768
      %v3964 = vunpack.c.l.b16 %v3769
      %v3965 = vunpack.c.l.b16 %v3770
      %v3966 = vunpack.c.l.b16 %v3771
      %v3967 = vunpack.c.l.b16 %v3772
      %v3968 = vunpack.c.l.b16 %v3773
      %v3969 = vunpack.c.l.b16 %v3774
      %v3970 = vunpack.c.l.b16 %v3775
      %v3971 = vunpack.c.l.b16 %v3776
      %v3972 = vunpack.c.l.b16 %v3777
      %v3973 = vunpack.c.l.b16 %v3778
      %v3974 = vunpack.c.l.b16 %v3779
      %v3975 = vunpack.c.l.b16 %v3780
      %v3976 = vunpack.c.l.b16 %v3781
      %v3977 = vunpack.c.l.b16 %v3782
      %v3978 = vunpack.c.l.b16 %v3783
      %v3979 = vunpack.c.l.b16 %v3784
      %v3980 = vunpack.c.l.b16 %v3785
      %v3981 = vunpack.c.l.b16 %v3786
      %v3982 = vunpack.c.l.b16 %v3787
      %v3983 = vunpack.c.l.b16 %v3788
      %v3984 = vunpack.c.l.b16 %v3789
      %v3985 = vunpack.c.l.b16 %v3790
      %v3986 = vunpack.c.l.b16 %v3791
      %v3987 = vunpack.c.l.b16 %v3792
      %v3988 = vunpack.c.l.b16 %v3793
      %v3989 = vunpack.c.l.b16 %v3794
      %v3990 = vunpack.c.l.b16 %v3795
      %v3991 = vunpack.c.l.b16 %v3796
      %v3992 = vunpack.c.l.b16 %v3797
      %v3993 = vunpack.c.l.b16 %v3798
      %v3994 = vunpack.c.l.b16 %v3799
      %v3995 = vunpack.c.l.b16 %v3800
      %v3996 = vunpack.c.l.b16 %v3801
      %v3997 = vunpack.c.l.b16 %v3802
      %v3998 = vunpack.c.l.b16 %v3803
      %v3999 = vunpack.c.l.b16 %v3804
      %v4000 = vunpack.c.l.b16 %v3805
      %v4001 = vunpack.c.l.b16 %v3806
      %v4002 = vunpack.c.l.b16 %v3807
      %v4003 = vunpack.c.l.b16 %v3808
      %v4004 = vunpack.c.l.b16 %v3809
      %v4005 = vunpack.c.l.b16 %v3810
      %v4006 = vunpack.c.l.b16 %v3811
      %v4007 = vunpack.c.l.b16 %v3812
      %v4008 = vunpack.c.l.b16 %v3813
      %v4009 = vunpack.c.l.b16 %v3814
      %v4010 = vunpack.c.l.b16 %v3815
      %v4011 = vunpack.c.l.b16 %v3816
      %v4012 = vunpack.c.l.b16 %v3817
      %v4013 = vunpack.c.l.b16 %v3818
      %v4014 = vunpack.c.l.b16 %v3819
      %v4015 = vunpack.c.l.b16 %v3820
      %v4016 = vunpack.c.l.b16 %v3821
      %v4017 = vunpack.c.l.b16 %v3822
      %v4018 = vunpack.c.l.b16 %v3823
      %v4019 = vunpack.c.l.b16 %v3824
      %v4020 = vunpack.c.l.b16 %v3825
      %v4021 = vunpack.c.l.b16 %v3826
      %v4022 = vunpack.c.l.b16 %v3827
      %v4023 = vunpack.c.l.b16 %v3828
      %v4024 = vunpack.c.l.b16 %v3829
      %v4025 = vunpack.c.l.b16 %v3830
      %v4026 = vunpack.c.l.b16 %v3831
      %v4027 = vunpack.c.l.b16 %v3832
      %v4028 = vunpack.c.l.b16 %v3833
      %v4029 = vunpack.c.l.b16 %v3834
      %v4030 = vpack.c.b16 %v3936, %v3935
      %v4031 = vpack.c.b16 %v3938, %v3937
      %v4032 = vpack.c.b16 %v3940, %v3939
      %v4033 = vpack.c.b16 %v3942, %v3941
      %v4034 = vpack.c.b16 %v3944, %v3943
      %v4035 = vpack.c.b16 %v3946, %v3945
      %v4036 = vpack.c.b16 %v3948, %v3947
      %v4037 = vpack.c.b16 %v3950, %v3949
      %v4038 = vpack.c.b16 %v3952, %v3951
      %v4039 = vpack.c.b16 %v3954, %v3953
      %v4040 = vpack.c.b16 %v3956, %v3955
      %v4041 = vpack.c.b16 %v3958, %v3957
      %v4042 = vpack.c.b16 %v3960, %v3959
      %v4043 = vpack.c.b16 %v3962, %v3961
      %v4044 = vpack.c.b16 %v3964, %v3963
      %v4045 = vpack.c.b16 %v3966, %v3965
      %v4046 = vpack.c.b16 %v3968, %v3967
      %v4047 = vpack.c.b16 %v3970, %v3969
      %v4048 = vpack.c.b16 %v3972, %v3971
      %v4049 = vpack.c.b16 %v3974, %v3973
      %v4050 = vpack.c.b16 %v3976, %v3975
      %v4051 = vpack.c.b16 %v3978, %v3977
      %v4052 = vpack.c.b16 %v3980, %v3979
      %v4053 = vpack.c.b16 %v3982, %v3981
      %v4054 = vpack.c.b16 %v3984, %v3983
      %v4055 = vpack.c.b16 %v3986, %v3985
      %v4056 = vpack.c.b16 %v3988, %v3987
      %v4057 = vpack.c.b16 %v3990, %v3989
      %v4058 = vpack.c.b16 %v3992, %v3991
      %v4059 = vpack.c.b16 %v3994, %v3993
      %v4060 = vpack.c.b16 %v3996, %v3995
      %v4061 = vpack.c.b16 %v3998, %v3997
      %v4062 = vpack.c.b16 %v4000, %v3999
      %v4063 = vpack.c.b16 %v4002, %v4001
      %v4064 = vpack.c.b16 %v4004, %v4003
      %v4065 = vpack.c.b16 %v4006, %v4005
      %v4066 = vpack.c.b16 %v4008, %v4007
      %v4067 = vpack.c.b16 %v4010, %v4009
      %v4068 = vpack.c.b16 %v4012, %v4011
      %v4069 = vpack.c.b16 %v4014, %v4013
      %v4070 = vpack.c.b16 %v4016, %v4015
      %v4071 = vpack.c.b16 %v4018, %v4017
      %v4072 = vpack.c.b16 %v4020, %v4019
      %v4073 = vpack.c.b16 %v4022, %v4021
      %v4074 = vpack.c.b16 %v4024, %v4023
      %v4075 = vpack.c.b16 %v4026, %v4025
      %v4076 = vpack.c.b16 %v4028, %v4027
      %v4077 = vpack.c.b16 %v4029, %v4029
      %v4126 = vsel %vm1013, %v3738, 0
      %v4129 = vsel %vm1017, %v4077, 0
      %4131 = vmatpush.bf16.msra.mxu0 %v4037
      %4132 = vmatpush.bf16.msra.mxu0 %v4036
      %4133 = vmatpush.bf16.msra.mxu0 %v4035
      %4134 = vmatpush.bf16.msra.mxu0 %v4034
      %4135 = vmatpush.bf16.msra.mxu0 %v4033
      %4136 = vmatpush.bf16.msra.mxu0 %v4032
      %4137 = vmatpush.bf16.msra.mxu0 %v4031
      %4138 = vmatpush.bf16.msra.mxu0 %v4030
      %4139 = vmatmul.bf16.gmra.mxu0 %v3733
      %v4140 = vpop.f32.mrf.mxu0
      %v4141 = vadd.f32 %v3838, %v4140
      %v4142 = vpop.f32.mrf.mxu0
      %4143 = vdwg.mxu0
      %4144 = vmatpush.bf16.msra.mxu0 %v4045
      %4145 = vmatpush.bf16.msra.mxu0 %v4044
      %4146 = vmatpush.bf16.msra.mxu0 %v4043
      %4147 = vmatpush.bf16.msra.mxu0 %v4042
      %4148 = vmatpush.bf16.msra.mxu0 %v4041
      %4149 = vmatpush.bf16.msra.mxu0 %v4040
      %4150 = vmatpush.bf16.msra.mxu0 %v4039
      %4151 = vmatpush.bf16.msra.mxu0 %v4038
      %4152 = vmatmul.bf16.gmra.mxu0 %v3734
      %v4153 = vpop.f32.mrf.mxu0
      %v4154 = vadd.f32 %v4141, %v4153
      %v4155 = vpop.f32.mrf.mxu0
      %4156 = vdwg.mxu0
      %4157 = vmatpush.bf16.msra.mxu0 %v4053
      %4158 = vmatpush.bf16.msra.mxu0 %v4052
      %4159 = vmatpush.bf16.msra.mxu0 %v4051
      %4160 = vmatpush.bf16.msra.mxu0 %v4050
      %4161 = vmatpush.bf16.msra.mxu0 %v4049
      %4162 = vmatpush.bf16.msra.mxu0 %v4048
      %4163 = vmatpush.bf16.msra.mxu0 %v4047
      %4164 = vmatpush.bf16.msra.mxu0 %v4046
      %4165 = vmatmul.bf16.gmra.mxu0 %v3735
      %v4166 = vpop.f32.mrf.mxu0
      %v4167 = vadd.f32 %v4154, %v4166
      %v4168 = vpop.f32.mrf.mxu0
      %4169 = vdwg.mxu0
      %4170 = vmatpush.bf16.msra.mxu0 %v4061
      %4171 = vmatpush.bf16.msra.mxu0 %v4060
      %4172 = vmatpush.bf16.msra.mxu0 %v4059
      %4173 = vmatpush.bf16.msra.mxu0 %v4058
      %4174 = vmatpush.bf16.msra.mxu0 %v4057
      %4175 = vmatpush.bf16.msra.mxu0 %v4056
      %4176 = vmatpush.bf16.msra.mxu0 %v4055
      %4177 = vmatpush.bf16.msra.mxu0 %v4054
      %4178 = vmatmul.bf16.gmra.mxu0 %v3736
      %v4179 = vpop.f32.mrf.mxu0
      %v4180 = vadd.f32 %v4167, %v4179
      %v4181 = vpop.f32.mrf.mxu0
      %4182 = vdwg.mxu0
      %4183 = vmatpush.bf16.msra.mxu0 %v4069
      %4184 = vmatpush.bf16.msra.mxu0 %v4068
      %4185 = vmatpush.bf16.msra.mxu0 %v4067
      %4186 = vmatpush.bf16.msra.mxu0 %v4066
      %4187 = vmatpush.bf16.msra.mxu0 %v4065
      %4188 = vmatpush.bf16.msra.mxu0 %v4064
      %4189 = vmatpush.bf16.msra.mxu0 %v4063
      %4190 = vmatpush.bf16.msra.mxu0 %v4062
      %4191 = vmatmul.bf16.gmra.mxu0 %v3737
      %v4192 = vpop.f32.mrf.mxu0
      %v4193 = vadd.f32 %v4180, %v4192
      %v4194 = vpop.f32.mrf.mxu0
      %4195 = vdwg.mxu0
      %4196 = vmatpush.bf16.msra.mxu0 %v4129
      %4197 = vmatpush.bf16.msra.mxu0 %v4076
      %4198 = vmatpush.bf16.msra.mxu0 %v4075
      %4199 = vmatpush.bf16.msra.mxu0 %v4074
      %4200 = vmatpush.bf16.msra.mxu0 %v4073
      %4201 = vmatpush.bf16.msra.mxu0 %v4072
      %4202 = vmatpush.bf16.msra.mxu0 %v4071
      %4203 = vmatpush.bf16.msra.mxu0 %v4070
      %4204 = vmatmul.bf16.gmra.mxu0 %v4126
      %v4205 = vpop.f32.mrf.mxu0
      %v4206 = vadd.f32 %v4193, %v4205
      %v4207 = vpop.f32.mrf.mxu0
      %4208 = vdwg.mxu0
      %v4209 = vmax.f32 %v4206, 0.0
      %v4210 = vmul.f32 %v4209, %v1101
      %v4211 = vsel %vm516, %v4210, 0.0
      %4212 = vadd.xlane.f32.xlu0 %v4211
      %v4213 = vpop.xlane.xlu0 %4212
      %v4214 = vrcp.pop %v4213
      %v4215 = vmul.f32 %v4209, %v4214
      %s4216 = scalar_lea.vmem %s322, 32
      %4217 = vst.msk [vmem:[%s4216] sm:$0xff] %vm516, %v4215
      %s4218 = scalar_lea.vmem %s298, 1200
      %v4219 = vld [vmem:[%s4218] sm:$0xff]
      %v4220 = vld [vmem:[%s4218 + $0x8] sm:$0xff]
      %v4221 = vld [vmem:[%s4218 + $0x10] sm:$0xff]
      %v4222 = vld [vmem:[%s4218 + $0x18] sm:$0xff]
      %v4223 = vld [vmem:[%s4218 + $0x20] sm:$0xff]
      %v4224 = vld [vmem:[%s4218 + $0x28] sm:$0xff]
      %v4225 = vld [vmem:[%s4218 + $0x30] sm:$0xff]
      %v4226 = vld [vmem:[%s4218 + $0x38] sm:$0xff]
      %v4227 = vld [vmem:[%s4218 + $0x40] sm:$0xff]
      %v4228 = vld [vmem:[%s4218 + $0x48] sm:$0xff]
      %v4229 = vld [vmem:[%s4218 + $0x50] sm:$0xff]
      %v4230 = vld [vmem:[%s4218 + $0x58] sm:$0xff]
      %v4231 = vld [vmem:[%s4218 + $0x60] sm:$0xff]
      %v4232 = vld [vmem:[%s4218 + $0x68] sm:$0xff]
      %v4233 = vld [vmem:[%s4218 + $0x70] sm:$0xff]
      %v4234 = vld [vmem:[%s4218 + $0x78] sm:$0xff]
      %v4235 = vld [vmem:[%s4218 + $0x80] sm:$0xff]
      %v4236 = vld [vmem:[%s4218 + $0x88] sm:$0xff]
      %v4237 = vld [vmem:[%s4218 + $0x90] sm:$0xff]
      %v4238 = vld [vmem:[%s4218 + $0x98] sm:$0xff]
      %v4239 = vld [vmem:[%s4218 + $0xa0] sm:$0xff]
      %v4240 = vld [vmem:[%s4218 + $0xa8] sm:$0xff]
      %v4241 = vld [vmem:[%s4218 + $0xb0] sm:$0xff]
      %v4242 = vld [vmem:[%s4218 + $0xb8] sm:$0xff]
      %v4243 = vld [vmem:[%s4218 + $0xc0] sm:$0xff]
      %v4244 = vld [vmem:[%s4218 + $0xc8] sm:$0xff]
      %v4245 = vld [vmem:[%s4218 + $0xd0] sm:$0xff]
      %v4246 = vld [vmem:[%s4218 + $0xd8] sm:$0x33]
      %v4247 = vld [vmem:[%s4218 + $0xe0] sm:$0x33]
      %v4248 = vld [vmem:[%s4218 + $0xe8] sm:$0x33]
      %s4249 = scalar_lea.vmem %s304, 30
      %v4250 = vld [vmem:[%s4249] sm:$0x3f]
      %v4252 = vperm.slane %v4250, 0
      %v4253 = vperm.slane %v4250, 1
      %v4254 = vperm.slane %v4250, 2
      %v4255 = vperm.slane %v4250, 3
      %v4256 = vperm.slane %v4250, 4
      %v4257 = vperm.slane %v4250, 5
      %v4294 = vunpack.c.l.b16 %v4219
      %v4295 = vunpack.c.h.b16 %v4219
      %v4296 = vunpack.c.l.b16 %v4220
      %v4297 = vunpack.c.h.b16 %v4220
      %v4298 = vunpack.c.l.b16 %v4221
      %v4299 = vunpack.c.h.b16 %v4221
      %v4300 = vunpack.c.l.b16 %v4222
      %v4301 = vunpack.c.h.b16 %v4222
      %v4302 = vunpack.c.l.b16 %v4223
      %v4303 = vunpack.c.h.b16 %v4223
      %v4304 = vunpack.c.l.b16 %v4224
      %v4305 = vunpack.c.h.b16 %v4224
      %v4306 = vunpack.c.l.b16 %v4225
      %v4307 = vunpack.c.h.b16 %v4225
      %v4308 = vunpack.c.l.b16 %v4226
      %v4309 = vunpack.c.h.b16 %v4226
      %v4310 = vunpack.c.l.b16 %v4227
      %v4311 = vunpack.c.h.b16 %v4227
      %v4312 = vunpack.c.l.b16 %v4228
      %v4313 = vunpack.c.h.b16 %v4228
      %v4314 = vunpack.c.l.b16 %v4229
      %v4315 = vunpack.c.h.b16 %v4229
      %v4316 = vunpack.c.l.b16 %v4230
      %v4317 = vunpack.c.h.b16 %v4230
      %v4318 = vunpack.c.l.b16 %v4231
      %v4319 = vunpack.c.h.b16 %v4231
      %v4320 = vunpack.c.l.b16 %v4232
      %v4321 = vunpack.c.h.b16 %v4232
      %v4322 = vunpack.c.l.b16 %v4233
      %v4323 = vunpack.c.h.b16 %v4233
      %v4324 = vunpack.c.l.b16 %v4234
      %v4325 = vunpack.c.h.b16 %v4234
      %v4326 = vunpack.c.l.b16 %v4235
      %v4327 = vunpack.c.h.b16 %v4235
      %v4328 = vunpack.c.l.b16 %v4236
      %v4329 = vunpack.c.h.b16 %v4236
      %v4330 = vunpack.c.l.b16 %v4237
      %v4331 = vunpack.c.h.b16 %v4237
      %v4332 = vunpack.c.l.b16 %v4238
      %v4333 = vunpack.c.h.b16 %v4238
      %v4334 = vunpack.c.l.b16 %v4239
      %v4335 = vunpack.c.h.b16 %v4239
      %v4336 = vunpack.c.l.b16 %v4240
      %v4337 = vunpack.c.h.b16 %v4240
      %v4338 = vunpack.c.l.b16 %v4241
      %v4339 = vunpack.c.h.b16 %v4241
      %v4340 = vunpack.c.l.b16 %v4242
      %v4341 = vunpack.c.h.b16 %v4242
      %v4342 = vunpack.c.l.b16 %v4243
      %v4343 = vunpack.c.h.b16 %v4243
      %v4344 = vunpack.c.l.b16 %v4244
      %v4345 = vunpack.c.h.b16 %v4244
      %v4346 = vunpack.c.l.b16 %v4245
      %v4347 = vunpack.c.h.b16 %v4245
      %v4348 = vunpack.c.l.b16 %v4246
      %v4349 = vunpack.c.h.b16 %v4246
      %v4350 = vunpack.c.l.b16 %v4247
      %v4351 = vunpack.c.h.b16 %v4247
      %v4352 = vunpack.c.l.b16 %v4248
      %v4353 = vunpack.c.h.b16 %v4248
      %v4354 = vpack.c.b16 %v4300, %v4294
      %v4355 = vpack.c.b16 %v4301, %v4295
      %v4356 = vpack.c.b16 %v4302, %v4296
      %v4357 = vpack.c.b16 %v4303, %v4297
      %v4358 = vpack.c.b16 %v4304, %v4298
      %v4359 = vpack.c.b16 %v4305, %v4299
      %v4360 = vpack.c.b16 %v4312, %v4306
      %v4361 = vpack.c.b16 %v4313, %v4307
      %v4362 = vpack.c.b16 %v4314, %v4308
      %v4363 = vpack.c.b16 %v4315, %v4309
      %v4364 = vpack.c.b16 %v4316, %v4310
      %v4365 = vpack.c.b16 %v4317, %v4311
      %v4366 = vpack.c.b16 %v4324, %v4318
      %v4367 = vpack.c.b16 %v4325, %v4319
      %v4368 = vpack.c.b16 %v4326, %v4320
      %v4369 = vpack.c.b16 %v4327, %v4321
      %v4370 = vpack.c.b16 %v4328, %v4322
      %v4371 = vpack.c.b16 %v4329, %v4323
      %v4372 = vpack.c.b16 %v4336, %v4330
      %v4373 = vpack.c.b16 %v4337, %v4331
      %v4374 = vpack.c.b16 %v4338, %v4332
      %v4375 = vpack.c.b16 %v4339, %v4333
      %v4376 = vpack.c.b16 %v4340, %v4334
      %v4377 = vpack.c.b16 %v4341, %v4335
      %v4378 = vpack.c.b16 %v4348, %v4342
      %v4379 = vpack.c.b16 %v4349, %v4343
      %v4380 = vpack.c.b16 %v4350, %v4344
      %v4381 = vpack.c.b16 %v4351, %v4345
      %v4382 = vpack.c.b16 %v4352, %v4346
      %v4383 = vpack.c.b16 %v4353, %v4347
      %v4409 = vsel %vm520, %v4378, 0
      %v4412 = vsel %vm520, %v4379, 0
      %v4415 = vsel %vm520, %v4380, 0
      %v4418 = vsel %vm520, %v4381, 0
      %v4421 = vsel %vm520, %v4382, 0
      %v4424 = vsel %vm520, %v4383, 0
      %4426 = vmatpush.bf16.msra.mxu0 0
      %4427 = vmatpush.bf16.msra.mxu0 0
      %4428 = vmatpush.bf16.msra.mxu0 0
      %4429 = vmatpush.bf16.msra.mxu0 %v4409
      %4430 = vmatpush.bf16.msra.mxu0 %v4372
      %4431 = vmatpush.bf16.msra.mxu0 %v4366
      %4432 = vmatpush.bf16.msra.mxu0 %v4360
      %4433 = vmatpush.bf16.msra.mxu0 %v4354
      %4434 = vmatmul.bf16.gmra.mxu0 %v518
      %v4435 = vpop.f32.mrf.mxu0
      %v4436 = vadd.f32 %v4252, %v4435
      %v4437 = vpop.f32.mrf.mxu0
      %4438 = vdwg.mxu0
      %4439 = vmatpush.bf16.msra.mxu0 0
      %4440 = vmatpush.bf16.msra.mxu0 0
      %4441 = vmatpush.bf16.msra.mxu0 0
      %4442 = vmatpush.bf16.msra.mxu0 %v4412
      %4443 = vmatpush.bf16.msra.mxu0 %v4373
      %4444 = vmatpush.bf16.msra.mxu0 %v4367
      %4445 = vmatpush.bf16.msra.mxu0 %v4361
      %4446 = vmatpush.bf16.msra.mxu0 %v4355
      %4447 = vmatmul.bf16.gmra.mxu0 %v518
      %v4448 = vpop.f32.mrf.mxu0
      %v4449 = vadd.f32 %v4253, %v4448
      %v4450 = vpop.f32.mrf.mxu0
      %4451 = vdwg.mxu0
      %4452 = vmatpush.bf16.msra.mxu0 0
      %4453 = vmatpush.bf16.msra.mxu0 0
      %4454 = vmatpush.bf16.msra.mxu0 0
      %4455 = vmatpush.bf16.msra.mxu0 %v4415
      %4456 = vmatpush.bf16.msra.mxu0 %v4374
      %4457 = vmatpush.bf16.msra.mxu0 %v4368
      %4458 = vmatpush.bf16.msra.mxu0 %v4362
      %4459 = vmatpush.bf16.msra.mxu0 %v4356
      %4460 = vmatmul.bf16.gmra.mxu0 %v518
      %v4461 = vpop.f32.mrf.mxu0
      %v4462 = vadd.f32 %v4254, %v4461
      %v4463 = vpop.f32.mrf.mxu0
      %4464 = vdwg.mxu0
      %4465 = vmatpush.bf16.msra.mxu0 0
      %4466 = vmatpush.bf16.msra.mxu0 0
      %4467 = vmatpush.bf16.msra.mxu0 0
      %4468 = vmatpush.bf16.msra.mxu0 %v4418
      %4469 = vmatpush.bf16.msra.mxu0 %v4375
      %4470 = vmatpush.bf16.msra.mxu0 %v4369
      %4471 = vmatpush.bf16.msra.mxu0 %v4363
      %4472 = vmatpush.bf16.msra.mxu0 %v4357
      %4473 = vmatmul.bf16.gmra.mxu0 %v518
      %v4474 = vpop.f32.mrf.mxu0
      %v4475 = vadd.f32 %v4255, %v4474
      %v4476 = vpop.f32.mrf.mxu0
      %4477 = vdwg.mxu0
      %4478 = vmatpush.bf16.msra.mxu0 0
      %4479 = vmatpush.bf16.msra.mxu0 0
      %4480 = vmatpush.bf16.msra.mxu0 0
      %4481 = vmatpush.bf16.msra.mxu0 %v4421
      %4482 = vmatpush.bf16.msra.mxu0 %v4376
      %4483 = vmatpush.bf16.msra.mxu0 %v4370
      %4484 = vmatpush.bf16.msra.mxu0 %v4364
      %4485 = vmatpush.bf16.msra.mxu0 %v4358
      %4486 = vmatmul.bf16.gmra.mxu0 %v518
      %v4487 = vpop.f32.mrf.mxu0
      %v4488 = vadd.f32 %v4256, %v4487
      %v4489 = vpop.f32.mrf.mxu0
      %4490 = vdwg.mxu0
      %4491 = vmatpush.bf16.msra.mxu0 0
      %4492 = vmatpush.bf16.msra.mxu0 0
      %4493 = vmatpush.bf16.msra.mxu0 0
      %4494 = vmatpush.bf16.msra.mxu0 %v4424
      %4495 = vmatpush.bf16.msra.mxu0 %v4377
      %4496 = vmatpush.bf16.msra.mxu0 %v4371
      %4497 = vmatpush.bf16.msra.mxu0 %v4365
      %4498 = vmatpush.bf16.msra.mxu0 %v4359
      %4499 = vmatmul.bf16.gmra.mxu0 %v518
      %v4500 = vpop.f32.mrf.mxu0
      %v4501 = vadd.f32 %v4257, %v4500
      %v4502 = vpop.f32.mrf.mxu0
      %4503 = vdwg.mxu0
      %v4504 = vtanh.pop %v4436
      %v4505 = vtanh.pop %v4449
      %v4506 = vtanh.pop %v4462
      %v4507 = vtanh.pop %v4475
      %v4508 = vtanh.pop %v4488
      %v4509 = vtanh.pop %v4501
      %v4510 = vpack.c.bf16 %v4504, %v4504
      %v4511 = vpack.c.bf16 %v4505, %v4505
      %v4512 = vpack.c.bf16 %v4506, %v4506
      %v4513 = vpack.c.bf16 %v4507, %v4507
      %v4514 = vpack.c.bf16 %v4508, %v4508
      %v4515 = vpack.c.bf16 %v4509, %v4509
      %s4516 = scalar_lea.vmem %s311, 1900
      %v4517 = vld [vmem:[%s4516] sm:$0xf]
      %v4518 = vld [vmem:[%s4516 + $0x4] sm:$0xf]
      %v4519 = vld [vmem:[%s4516 + $0x8] sm:$0xf]
      %v4520 = vld [vmem:[%s4516 + $0xc] sm:$0xf]
      %v4521 = vld [vmem:[%s4516 + $0x10] sm:$0xf]
      %v4522 = vld [vmem:[%s4516 + $0x14] sm:$0xf]
      %v4523 = vld [vmem:[%s4516 + $0x18] sm:$0xf]
      %v4524 = vld [vmem:[%s4516 + $0x1c] sm:$0xf]
      %v4525 = vld [vmem:[%s4516 + $0x20] sm:$0xf]
      %v4526 = vld [vmem:[%s4516 + $0x24] sm:$0xf]
      %v4527 = vld [vmem:[%s4516 + $0x28] sm:$0xf]
      %v4528 = vld [vmem:[%s4516 + $0x2c] sm:$0xf]
      %v4529 = vld [vmem:[%s4516 + $0x30] sm:$0xf]
      %v4530 = vld [vmem:[%s4516 + $0x34] sm:$0xf]
      %v4531 = vld [vmem:[%s4516 + $0x38] sm:$0xf]
      %v4532 = vld [vmem:[%s4516 + $0x3c] sm:$0xf]
      %v4533 = vld [vmem:[%s4516 + $0x40] sm:$0xf]
      %v4534 = vld [vmem:[%s4516 + $0x44] sm:$0xf]
      %v4535 = vld [vmem:[%s4516 + $0x48] sm:$0xf]
      %v4536 = vld [vmem:[%s4516 + $0x4c] sm:$0xf]
      %v4537 = vld [vmem:[%s4516 + $0x50] sm:$0xf]
      %v4538 = vld [vmem:[%s4516 + $0x54] sm:$0xf]
      %v4539 = vld [vmem:[%s4516 + $0x58] sm:$0xf]
      %v4540 = vld [vmem:[%s4516 + $0x5c] sm:$0xf]
      %v4541 = vld [vmem:[%s4516 + $0x60] sm:$0xf]
      %v4542 = vld [vmem:[%s4516 + $0x64] sm:$0xf]
      %v4543 = vld [vmem:[%s4516 + $0x68] sm:$0xf]
      %v4544 = vld [vmem:[%s4516 + $0x6c] sm:$0xf]
      %v4545 = vld [vmem:[%s4516 + $0x70] sm:$0xf]
      %v4546 = vld [vmem:[%s4516 + $0x74] sm:$0xf]
      %v4547 = vld [vmem:[%s4516 + $0x78] sm:$0xf]
      %v4548 = vld [vmem:[%s4516 + $0x7c] sm:$0xf]
      %v4549 = vld [vmem:[%s4516 + $0x80] sm:$0xf]
      %v4550 = vld [vmem:[%s4516 + $0x84] sm:$0xf]
      %v4551 = vld [vmem:[%s4516 + $0x88] sm:$0xf]
      %v4552 = vld [vmem:[%s4516 + $0x8c] sm:$0xf]
      %v4553 = vld [vmem:[%s4516 + $0x90] sm:$0xf]
      %v4554 = vld [vmem:[%s4516 + $0x94] sm:$0xf]
      %v4555 = vld [vmem:[%s4516 + $0x98] sm:$0xf]
      %v4556 = vld [vmem:[%s4516 + $0x9c] sm:$0xf]
      %v4557 = vld [vmem:[%s4516 + $0xa0] sm:$0xf]
      %v4558 = vld [vmem:[%s4516 + $0xa4] sm:$0xf]
      %v4559 = vld [vmem:[%s4516 + $0xa8] sm:$0xf]
      %v4560 = vld [vmem:[%s4516 + $0xac] sm:$0xf]
      %v4561 = vld [vmem:[%s4516 + $0xb0] sm:$0xf]
      %v4562 = vld [vmem:[%s4516 + $0xb4] sm:$0xf]
      %v4563 = vld [vmem:[%s4516 + $0xb8] sm:$0xf]
      %v4564 = vld [vmem:[%s4516 + $0xbc] sm:$0xf]
      %v4565 = vld [vmem:[%s4516 + $0xc0] sm:$0xf]
      %v4566 = vld [vmem:[%s4516 + $0xc4] sm:$0xf]
      %v4567 = vld [vmem:[%s4516 + $0xc8] sm:$0xf]
      %v4568 = vld [vmem:[%s4516 + $0xcc] sm:$0xf]
      %v4569 = vld [vmem:[%s4516 + $0xd0] sm:$0xf]
      %v4570 = vld [vmem:[%s4516 + $0xd4] sm:$0xf]
      %v4571 = vld [vmem:[%s4516 + $0xd8] sm:$0xf]
      %v4572 = vld [vmem:[%s4516 + $0xdc] sm:$0xf]
      %v4573 = vld [vmem:[%s4516 + $0xe0] sm:$0xf]
      %v4574 = vld [vmem:[%s4516 + $0xe4] sm:$0xf]
      %v4575 = vld [vmem:[%s4516 + $0xe8] sm:$0xf]
      %v4576 = vld [vmem:[%s4516 + $0xec] sm:$0xf]
      %v4577 = vld [vmem:[%s4516 + $0xf0] sm:$0xf]
      %v4578 = vld [vmem:[%s4516 + $0xf4] sm:$0xf]
      %v4579 = vld [vmem:[%s4516 + $0xf8] sm:$0xf]
      %v4580 = vld [vmem:[%s4516 + $0xfc] sm:$0xf]
      %v4581 = vld [vmem:[%s4516 + $0x100] sm:$0xf]
      %v4582 = vld [vmem:[%s4516 + $0x104] sm:$0xf]
      %v4583 = vld [vmem:[%s4516 + $0x108] sm:$0xf]
      %v4584 = vld [vmem:[%s4516 + $0x10c] sm:$0xf]
      %v4585 = vld [vmem:[%s4516 + $0x110] sm:$0xf]
      %v4586 = vld [vmem:[%s4516 + $0x114] sm:$0xf]
      %v4587 = vld [vmem:[%s4516 + $0x118] sm:$0xf]
      %v4588 = vld [vmem:[%s4516 + $0x11c] sm:$0xf]
      %v4589 = vld [vmem:[%s4516 + $0x120] sm:$0xf]
      %v4590 = vld [vmem:[%s4516 + $0x124] sm:$0xf]
      %v4591 = vld [vmem:[%s4516 + $0x128] sm:$0xf]
      %v4592 = vld [vmem:[%s4516 + $0x12c] sm:$0xf]
      %v4593 = vld [vmem:[%s4516 + $0x130] sm:$0xf]
      %v4594 = vld [vmem:[%s4516 + $0x134] sm:$0xf]
      %v4595 = vld [vmem:[%s4516 + $0x138] sm:$0xf]
      %v4596 = vld [vmem:[%s4516 + $0x13c] sm:$0xf]
      %v4597 = vld [vmem:[%s4516 + $0x140] sm:$0xf]
      %v4598 = vld [vmem:[%s4516 + $0x144] sm:$0xf]
      %v4599 = vld [vmem:[%s4516 + $0x148] sm:$0xf]
      %v4600 = vld [vmem:[%s4516 + $0x14c] sm:$0xf]
      %v4601 = vld [vmem:[%s4516 + $0x150] sm:$0xf]
      %v4602 = vld [vmem:[%s4516 + $0x154] sm:$0xf]
      %v4603 = vld [vmem:[%s4516 + $0x158] sm:$0xf]
      %v4604 = vld [vmem:[%s4516 + $0x15c] sm:$0xf]
      %v4605 = vld [vmem:[%s4516 + $0x160] sm:$0xf]
      %v4606 = vld [vmem:[%s4516 + $0x164] sm:$0xf]
      %v4607 = vld [vmem:[%s4516 + $0x168] sm:$0xf]
      %v4608 = vld [vmem:[%s4516 + $0x16c] sm:$0xf]
      %v4609 = vld [vmem:[%s4516 + $0x170] sm:$0xf]
      %v4610 = vld [vmem:[%s4516 + $0x174] sm:$0xf]
      %v4611 = vld [vmem:[%s4516 + $0x178] sm:$0xf]
      %s4612 = scalar_lea.vmem %s316, 5
      %v4613 = vld [vmem:[%s4612] sm:$0x1]
      %v4615 = vperm.slane %v4613, 0
      %v4712 = vunpack.c.l.b16 %v4517
      %v4713 = vunpack.c.l.b16 %v4518
      %v4714 = vunpack.c.l.b16 %v4519
      %v4715 = vunpack.c.l.b16 %v4520
      %v4716 = vunpack.c.l.b16 %v4521
      %v4717 = vunpack.c.l.b16 %v4522
      %v4718 = vunpack.c.l.b16 %v4523
      %v4719 = vunpack.c.l.b16 %v4524
      %v4720 = vunpack.c.l.b16 %v4525
      %v4721 = vunpack.c.l.b16 %v4526
      %v4722 = vunpack.c.l.b16 %v4527
      %v4723 = vunpack.c.l.b16 %v4528
      %v4724 = vunpack.c.l.b16 %v4529
      %v4725 = vunpack.c.l.b16 %v4530
      %v4726 = vunpack.c.l.b16 %v4531
      %v4727 = vunpack.c.l.b16 %v4532
      %v4728 = vunpack.c.l.b16 %v4533
      %v4729 = vunpack.c.l.b16 %v4534
      %v4730 = vunpack.c.l.b16 %v4535
      %v4731 = vunpack.c.l.b16 %v4536
      %v4732 = vunpack.c.l.b16 %v4537
      %v4733 = vunpack.c.l.b16 %v4538
      %v4734 = vunpack.c.l.b16 %v4539
      %v4735 = vunpack.c.l.b16 %v4540
      %v4736 = vunpack.c.l.b16 %v4541
      %v4737 = vunpack.c.l.b16 %v4542
      %v4738 = vunpack.c.l.b16 %v4543
      %v4739 = vunpack.c.l.b16 %v4544
      %v4740 = vunpack.c.l.b16 %v4545
      %v4741 = vunpack.c.l.b16 %v4546
      %v4742 = vunpack.c.l.b16 %v4547
      %v4743 = vunpack.c.l.b16 %v4548
      %v4744 = vunpack.c.l.b16 %v4549
      %v4745 = vunpack.c.l.b16 %v4550
      %v4746 = vunpack.c.l.b16 %v4551
      %v4747 = vunpack.c.l.b16 %v4552
      %v4748 = vunpack.c.l.b16 %v4553
      %v4749 = vunpack.c.l.b16 %v4554
      %v4750 = vunpack.c.l.b16 %v4555
      %v4751 = vunpack.c.l.b16 %v4556
      %v4752 = vunpack.c.l.b16 %v4557
      %v4753 = vunpack.c.l.b16 %v4558
      %v4754 = vunpack.c.l.b16 %v4559
      %v4755 = vunpack.c.l.b16 %v4560
      %v4756 = vunpack.c.l.b16 %v4561
      %v4757 = vunpack.c.l.b16 %v4562
      %v4758 = vunpack.c.l.b16 %v4563
      %v4759 = vunpack.c.l.b16 %v4564
      %v4760 = vunpack.c.l.b16 %v4565
      %v4761 = vunpack.c.l.b16 %v4566
      %v4762 = vunpack.c.l.b16 %v4567
      %v4763 = vunpack.c.l.b16 %v4568
      %v4764 = vunpack.c.l.b16 %v4569
      %v4765 = vunpack.c.l.b16 %v4570
      %v4766 = vunpack.c.l.b16 %v4571
      %v4767 = vunpack.c.l.b16 %v4572
      %v4768 = vunpack.c.l.b16 %v4573
      %v4769 = vunpack.c.l.b16 %v4574
      %v4770 = vunpack.c.l.b16 %v4575
      %v4771 = vunpack.c.l.b16 %v4576
      %v4772 = vunpack.c.l.b16 %v4577
      %v4773 = vunpack.c.l.b16 %v4578
      %v4774 = vunpack.c.l.b16 %v4579
      %v4775 = vunpack.c.l.b16 %v4580
      %v4776 = vunpack.c.l.b16 %v4581
      %v4777 = vunpack.c.l.b16 %v4582
      %v4778 = vunpack.c.l.b16 %v4583
      %v4779 = vunpack.c.l.b16 %v4584
      %v4780 = vunpack.c.l.b16 %v4585
      %v4781 = vunpack.c.l.b16 %v4586
      %v4782 = vunpack.c.l.b16 %v4587
      %v4783 = vunpack.c.l.b16 %v4588
      %v4784 = vunpack.c.l.b16 %v4589
      %v4785 = vunpack.c.l.b16 %v4590
      %v4786 = vunpack.c.l.b16 %v4591
      %v4787 = vunpack.c.l.b16 %v4592
      %v4788 = vunpack.c.l.b16 %v4593
      %v4789 = vunpack.c.l.b16 %v4594
      %v4790 = vunpack.c.l.b16 %v4595
      %v4791 = vunpack.c.l.b16 %v4596
      %v4792 = vunpack.c.l.b16 %v4597
      %v4793 = vunpack.c.l.b16 %v4598
      %v4794 = vunpack.c.l.b16 %v4599
      %v4795 = vunpack.c.l.b16 %v4600
      %v4796 = vunpack.c.l.b16 %v4601
      %v4797 = vunpack.c.l.b16 %v4602
      %v4798 = vunpack.c.l.b16 %v4603
      %v4799 = vunpack.c.l.b16 %v4604
      %v4800 = vunpack.c.l.b16 %v4605
      %v4801 = vunpack.c.l.b16 %v4606
      %v4802 = vunpack.c.l.b16 %v4607
      %v4803 = vunpack.c.l.b16 %v4608
      %v4804 = vunpack.c.l.b16 %v4609
      %v4805 = vunpack.c.l.b16 %v4610
      %v4806 = vunpack.c.l.b16 %v4611
      %v4807 = vpack.c.b16 %v4713, %v4712
      %v4808 = vpack.c.b16 %v4715, %v4714
      %v4809 = vpack.c.b16 %v4717, %v4716
      %v4810 = vpack.c.b16 %v4719, %v4718
      %v4811 = vpack.c.b16 %v4721, %v4720
      %v4812 = vpack.c.b16 %v4723, %v4722
      %v4813 = vpack.c.b16 %v4725, %v4724
      %v4814 = vpack.c.b16 %v4727, %v4726
      %v4815 = vpack.c.b16 %v4729, %v4728
      %v4816 = vpack.c.b16 %v4731, %v4730
      %v4817 = vpack.c.b16 %v4733, %v4732
      %v4818 = vpack.c.b16 %v4735, %v4734
      %v4819 = vpack.c.b16 %v4737, %v4736
      %v4820 = vpack.c.b16 %v4739, %v4738
      %v4821 = vpack.c.b16 %v4741, %v4740
      %v4822 = vpack.c.b16 %v4743, %v4742
      %v4823 = vpack.c.b16 %v4745, %v4744
      %v4824 = vpack.c.b16 %v4747, %v4746
      %v4825 = vpack.c.b16 %v4749, %v4748
      %v4826 = vpack.c.b16 %v4751, %v4750
      %v4827 = vpack.c.b16 %v4753, %v4752
      %v4828 = vpack.c.b16 %v4755, %v4754
      %v4829 = vpack.c.b16 %v4757, %v4756
      %v4830 = vpack.c.b16 %v4759, %v4758
      %v4831 = vpack.c.b16 %v4761, %v4760
      %v4832 = vpack.c.b16 %v4763, %v4762
      %v4833 = vpack.c.b16 %v4765, %v4764
      %v4834 = vpack.c.b16 %v4767, %v4766
      %v4835 = vpack.c.b16 %v4769, %v4768
      %v4836 = vpack.c.b16 %v4771, %v4770
      %v4837 = vpack.c.b16 %v4773, %v4772
      %v4838 = vpack.c.b16 %v4775, %v4774
      %v4839 = vpack.c.b16 %v4777, %v4776
      %v4840 = vpack.c.b16 %v4779, %v4778
      %v4841 = vpack.c.b16 %v4781, %v4780
      %v4842 = vpack.c.b16 %v4783, %v4782
      %v4843 = vpack.c.b16 %v4785, %v4784
      %v4844 = vpack.c.b16 %v4787, %v4786
      %v4845 = vpack.c.b16 %v4789, %v4788
      %v4846 = vpack.c.b16 %v4791, %v4790
      %v4847 = vpack.c.b16 %v4793, %v4792
      %v4848 = vpack.c.b16 %v4795, %v4794
      %v4849 = vpack.c.b16 %v4797, %v4796
      %v4850 = vpack.c.b16 %v4799, %v4798
      %v4851 = vpack.c.b16 %v4801, %v4800
      %v4852 = vpack.c.b16 %v4803, %v4802
      %v4853 = vpack.c.b16 %v4805, %v4804
      %v4854 = vpack.c.b16 %v4806, %v4806
      %v4903 = vsel %vm1013, %v4515, 0
      %v4906 = vsel %vm1017, %v4854, 0
      %4908 = vmatpush.bf16.msra.mxu0 %v4814
      %4909 = vmatpush.bf16.msra.mxu0 %v4813
      %4910 = vmatpush.bf16.msra.mxu0 %v4812
      %4911 = vmatpush.bf16.msra.mxu0 %v4811
      %4912 = vmatpush.bf16.msra.mxu0 %v4810
      %4913 = vmatpush.bf16.msra.mxu0 %v4809
      %4914 = vmatpush.bf16.msra.mxu0 %v4808
      %4915 = vmatpush.bf16.msra.mxu0 %v4807
      %4916 = vmatmul.bf16.gmra.mxu0 %v4510
      %v4917 = vpop.f32.mrf.mxu0
      %v4918 = vadd.f32 %v4615, %v4917
      %v4919 = vpop.f32.mrf.mxu0
      %4920 = vdwg.mxu0
      %4921 = vmatpush.bf16.msra.mxu0 %v4822
      %4922 = vmatpush.bf16.msra.mxu0 %v4821
      %4923 = vmatpush.bf16.msra.mxu0 %v4820
      %4924 = vmatpush.bf16.msra.mxu0 %v4819
      %4925 = vmatpush.bf16.msra.mxu0 %v4818
      %4926 = vmatpush.bf16.msra.mxu0 %v4817
      %4927 = vmatpush.bf16.msra.mxu0 %v4816
      %4928 = vmatpush.bf16.msra.mxu0 %v4815
      %4929 = vmatmul.bf16.gmra.mxu0 %v4511
      %v4930 = vpop.f32.mrf.mxu0
      %v4931 = vadd.f32 %v4918, %v4930
      %v4932 = vpop.f32.mrf.mxu0
      %4933 = vdwg.mxu0
      %4934 = vmatpush.bf16.msra.mxu0 %v4830
      %4935 = vmatpush.bf16.msra.mxu0 %v4829
      %4936 = vmatpush.bf16.msra.mxu0 %v4828
      %4937 = vmatpush.bf16.msra.mxu0 %v4827
      %4938 = vmatpush.bf16.msra.mxu0 %v4826
      %4939 = vmatpush.bf16.msra.mxu0 %v4825
      %4940 = vmatpush.bf16.msra.mxu0 %v4824
      %4941 = vmatpush.bf16.msra.mxu0 %v4823
      %4942 = vmatmul.bf16.gmra.mxu0 %v4512
      %v4943 = vpop.f32.mrf.mxu0
      %v4944 = vadd.f32 %v4931, %v4943
      %v4945 = vpop.f32.mrf.mxu0
      %4946 = vdwg.mxu0
      %4947 = vmatpush.bf16.msra.mxu0 %v4838
      %4948 = vmatpush.bf16.msra.mxu0 %v4837
      %4949 = vmatpush.bf16.msra.mxu0 %v4836
      %4950 = vmatpush.bf16.msra.mxu0 %v4835
      %4951 = vmatpush.bf16.msra.mxu0 %v4834
      %4952 = vmatpush.bf16.msra.mxu0 %v4833
      %4953 = vmatpush.bf16.msra.mxu0 %v4832
      %4954 = vmatpush.bf16.msra.mxu0 %v4831
      %4955 = vmatmul.bf16.gmra.mxu0 %v4513
      %v4956 = vpop.f32.mrf.mxu0
      %v4957 = vadd.f32 %v4944, %v4956
      %v4958 = vpop.f32.mrf.mxu0
      %4959 = vdwg.mxu0
      %4960 = vmatpush.bf16.msra.mxu0 %v4846
      %4961 = vmatpush.bf16.msra.mxu0 %v4845
      %4962 = vmatpush.bf16.msra.mxu0 %v4844
      %4963 = vmatpush.bf16.msra.mxu0 %v4843
      %4964 = vmatpush.bf16.msra.mxu0 %v4842
      %4965 = vmatpush.bf16.msra.mxu0 %v4841
      %4966 = vmatpush.bf16.msra.mxu0 %v4840
      %4967 = vmatpush.bf16.msra.mxu0 %v4839
      %4968 = vmatmul.bf16.gmra.mxu0 %v4514
      %v4969 = vpop.f32.mrf.mxu0
      %v4970 = vadd.f32 %v4957, %v4969
      %v4971 = vpop.f32.mrf.mxu0
      %4972 = vdwg.mxu0
      %4973 = vmatpush.bf16.msra.mxu0 %v4906
      %4974 = vmatpush.bf16.msra.mxu0 %v4853
      %4975 = vmatpush.bf16.msra.mxu0 %v4852
      %4976 = vmatpush.bf16.msra.mxu0 %v4851
      %4977 = vmatpush.bf16.msra.mxu0 %v4850
      %4978 = vmatpush.bf16.msra.mxu0 %v4849
      %4979 = vmatpush.bf16.msra.mxu0 %v4848
      %4980 = vmatpush.bf16.msra.mxu0 %v4847
      %4981 = vmatmul.bf16.gmra.mxu0 %v4903
      %v4982 = vpop.f32.mrf.mxu0
      %v4983 = vadd.f32 %v4970, %v4982
      %v4984 = vpop.f32.mrf.mxu0
      %4985 = vdwg.mxu0
      %v4986 = vmax.f32 %v4983, 0.0
      %v4987 = vmul.f32 %v4986, %v1101
      %v4988 = vsel %vm516, %v4987, 0.0
      %4989 = vadd.xlane.f32.xlu0 %v4988
      %v4990 = vpop.xlane.xlu0 %4989
      %v4991 = vrcp.pop %v4990
      %v4992 = vmul.f32 %v4986, %v4991
      %s4993 = scalar_lea.vmem %s322, 40
      %4994 = vst.msk [vmem:[%s4993] sm:$0xff] %vm516, %v4992
      %s4995 = scalar_lea.vmem %s298, 1440
      %v4996 = vld [vmem:[%s4995] sm:$0xff]
      %v4997 = vld [vmem:[%s4995 + $0x8] sm:$0xff]
      %v4998 = vld [vmem:[%s4995 + $0x10] sm:$0xff]
      %v4999 = vld [vmem:[%s4995 + $0x18] sm:$0xff]
      %v5000 = vld [vmem:[%s4995 + $0x20] sm:$0xff]
      %v5001 = vld [vmem:[%s4995 + $0x28] sm:$0xff]
      %v5002 = vld [vmem:[%s4995 + $0x30] sm:$0xff]
      %v5003 = vld [vmem:[%s4995 + $0x38] sm:$0xff]
      %v5004 = vld [vmem:[%s4995 + $0x40] sm:$0xff]
      %v5005 = vld [vmem:[%s4995 + $0x48] sm:$0xff]
      %v5006 = vld [vmem:[%s4995 + $0x50] sm:$0xff]
      %v5007 = vld [vmem:[%s4995 + $0x58] sm:$0xff]
      %v5008 = vld [vmem:[%s4995 + $0x60] sm:$0xff]
      %v5009 = vld [vmem:[%s4995 + $0x68] sm:$0xff]
      %v5010 = vld [vmem:[%s4995 + $0x70] sm:$0xff]
      %v5011 = vld [vmem:[%s4995 + $0x78] sm:$0xff]
      %v5012 = vld [vmem:[%s4995 + $0x80] sm:$0xff]
      %v5013 = vld [vmem:[%s4995 + $0x88] sm:$0xff]
      %v5014 = vld [vmem:[%s4995 + $0x90] sm:$0xff]
      %v5015 = vld [vmem:[%s4995 + $0x98] sm:$0xff]
      %v5016 = vld [vmem:[%s4995 + $0xa0] sm:$0xff]
      %v5017 = vld [vmem:[%s4995 + $0xa8] sm:$0xff]
      %v5018 = vld [vmem:[%s4995 + $0xb0] sm:$0xff]
      %v5019 = vld [vmem:[%s4995 + $0xb8] sm:$0xff]
      %v5020 = vld [vmem:[%s4995 + $0xc0] sm:$0xff]
      %v5021 = vld [vmem:[%s4995 + $0xc8] sm:$0xff]
      %v5022 = vld [vmem:[%s4995 + $0xd0] sm:$0xff]
      %v5023 = vld [vmem:[%s4995 + $0xd8] sm:$0x33]
      %v5024 = vld [vmem:[%s4995 + $0xe0] sm:$0x33]
      %v5025 = vld [vmem:[%s4995 + $0xe8] sm:$0x33]
      %s5026 = scalar_lea.vmem %s304, 36
      %v5027 = vld [vmem:[%s5026] sm:$0x3f]
      %v5029 = vperm.slane %v5027, 0
      %v5030 = vperm.slane %v5027, 1
      %v5031 = vperm.slane %v5027, 2
      %v5032 = vperm.slane %v5027, 3
      %v5033 = vperm.slane %v5027, 4
      %v5034 = vperm.slane %v5027, 5
      %v5071 = vunpack.c.l.b16 %v4996
      %v5072 = vunpack.c.h.b16 %v4996
      %v5073 = vunpack.c.l.b16 %v4997
      %v5074 = vunpack.c.h.b16 %v4997
      %v5075 = vunpack.c.l.b16 %v4998
      %v5076 = vunpack.c.h.b16 %v4998
      %v5077 = vunpack.c.l.b16 %v4999
      %v5078 = vunpack.c.h.b16 %v4999
      %v5079 = vunpack.c.l.b16 %v5000
      %v5080 = vunpack.c.h.b16 %v5000
      %v5081 = vunpack.c.l.b16 %v5001
      %v5082 = vunpack.c.h.b16 %v5001
      %v5083 = vunpack.c.l.b16 %v5002
      %v5084 = vunpack.c.h.b16 %v5002
      %v5085 = vunpack.c.l.b16 %v5003
      %v5086 = vunpack.c.h.b16 %v5003
      %v5087 = vunpack.c.l.b16 %v5004
      %v5088 = vunpack.c.h.b16 %v5004
      %v5089 = vunpack.c.l.b16 %v5005
      %v5090 = vunpack.c.h.b16 %v5005
      %v5091 = vunpack.c.l.b16 %v5006
      %v5092 = vunpack.c.h.b16 %v5006
      %v5093 = vunpack.c.l.b16 %v5007
      %v5094 = vunpack.c.h.b16 %v5007
      %v5095 = vunpack.c.l.b16 %v5008
      %v5096 = vunpack.c.h.b16 %v5008
      %v5097 = vunpack.c.l.b16 %v5009
      %v5098 = vunpack.c.h.b16 %v5009
      %v5099 = vunpack.c.l.b16 %v5010
      %v5100 = vunpack.c.h.b16 %v5010
      %v5101 = vunpack.c.l.b16 %v5011
      %v5102 = vunpack.c.h.b16 %v5011
      %v5103 = vunpack.c.l.b16 %v5012
      %v5104 = vunpack.c.h.b16 %v5012
      %v5105 = vunpack.c.l.b16 %v5013
      %v5106 = vunpack.c.h.b16 %v5013
      %v5107 = vunpack.c.l.b16 %v5014
      %v5108 = vunpack.c.h.b16 %v5014
      %v5109 = vunpack.c.l.b16 %v5015
      %v5110 = vunpack.c.h.b16 %v5015
      %v5111 = vunpack.c.l.b16 %v5016
      %v5112 = vunpack.c.h.b16 %v5016
      %v5113 = vunpack.c.l.b16 %v5017
      %v5114 = vunpack.c.h.b16 %v5017
      %v5115 = vunpack.c.l.b16 %v5018
      %v5116 = vunpack.c.h.b16 %v5018
      %v5117 = vunpack.c.l.b16 %v5019
      %v5118 = vunpack.c.h.b16 %v5019
      %v5119 = vunpack.c.l.b16 %v5020
      %v5120 = vunpack.c.h.b16 %v5020
      %v5121 = vunpack.c.l.b16 %v5021
      %v5122 = vunpack.c.h.b16 %v5021
      %v5123 = vunpack.c.l.b16 %v5022
      %v5124 = vunpack.c.h.b16 %v5022
      %v5125 = vunpack.c.l.b16 %v5023
      %v5126 = vunpack.c.h.b16 %v5023
      %v5127 = vunpack.c.l.b16 %v5024
      %v5128 = vunpack.c.h.b16 %v5024
      %v5129 = vunpack.c.l.b16 %v5025
      %v5130 = vunpack.c.h.b16 %v5025
      %v5131 = vpack.c.b16 %v5077, %v5071
      %v5132 = vpack.c.b16 %v5078, %v5072
      %v5133 = vpack.c.b16 %v5079, %v5073
      %v5134 = vpack.c.b16 %v5080, %v5074
      %v5135 = vpack.c.b16 %v5081, %v5075
      %v5136 = vpack.c.b16 %v5082, %v5076
      %v5137 = vpack.c.b16 %v5089, %v5083
      %v5138 = vpack.c.b16 %v5090, %v5084
      %v5139 = vpack.c.b16 %v5091, %v5085
      %v5140 = vpack.c.b16 %v5092, %v5086
      %v5141 = vpack.c.b16 %v5093, %v5087
      %v5142 = vpack.c.b16 %v5094, %v5088
      %v5143 = vpack.c.b16 %v5101, %v5095
      %v5144 = vpack.c.b16 %v5102, %v5096
      %v5145 = vpack.c.b16 %v5103, %v5097
      %v5146 = vpack.c.b16 %v5104, %v5098
      %v5147 = vpack.c.b16 %v5105, %v5099
      %v5148 = vpack.c.b16 %v5106, %v5100
      %v5149 = vpack.c.b16 %v5113, %v5107
      %v5150 = vpack.c.b16 %v5114, %v5108
      %v5151 = vpack.c.b16 %v5115, %v5109
      %v5152 = vpack.c.b16 %v5116, %v5110
      %v5153 = vpack.c.b16 %v5117, %v5111
      %v5154 = vpack.c.b16 %v5118, %v5112
      %v5155 = vpack.c.b16 %v5125, %v5119
      %v5156 = vpack.c.b16 %v5126, %v5120
      %v5157 = vpack.c.b16 %v5127, %v5121
      %v5158 = vpack.c.b16 %v5128, %v5122
      %v5159 = vpack.c.b16 %v5129, %v5123
      %v5160 = vpack.c.b16 %v5130, %v5124
      %v5186 = vsel %vm520, %v5155, 0
      %v5189 = vsel %vm520, %v5156, 0
      %v5192 = vsel %vm520, %v5157, 0
      %v5195 = vsel %vm520, %v5158, 0
      %v5198 = vsel %vm520, %v5159, 0
      %v5201 = vsel %vm520, %v5160, 0
      %5203 = vmatpush.bf16.msra.mxu0 0
      %5204 = vmatpush.bf16.msra.mxu0 0
      %5205 = vmatpush.bf16.msra.mxu0 0
      %5206 = vmatpush.bf16.msra.mxu0 %v5186
      %5207 = vmatpush.bf16.msra.mxu0 %v5149
      %5208 = vmatpush.bf16.msra.mxu0 %v5143
      %5209 = vmatpush.bf16.msra.mxu0 %v5137
      %5210 = vmatpush.bf16.msra.mxu0 %v5131
      %5211 = vmatmul.bf16.gmra.mxu0 %v518
      %v5212 = vpop.f32.mrf.mxu0
      %v5213 = vadd.f32 %v5029, %v5212
      %v5214 = vpop.f32.mrf.mxu0
      %5215 = vdwg.mxu0
      %5216 = vmatpush.bf16.msra.mxu0 0
      %5217 = vmatpush.bf16.msra.mxu0 0
      %5218 = vmatpush.bf16.msra.mxu0 0
      %5219 = vmatpush.bf16.msra.mxu0 %v5189
      %5220 = vmatpush.bf16.msra.mxu0 %v5150
      %5221 = vmatpush.bf16.msra.mxu0 %v5144
      %5222 = vmatpush.bf16.msra.mxu0 %v5138
      %5223 = vmatpush.bf16.msra.mxu0 %v5132
      %5224 = vmatmul.bf16.gmra.mxu0 %v518
      %v5225 = vpop.f32.mrf.mxu0
      %v5226 = vadd.f32 %v5030, %v5225
      %v5227 = vpop.f32.mrf.mxu0
      %5228 = vdwg.mxu0
      %5229 = vmatpush.bf16.msra.mxu0 0
      %5230 = vmatpush.bf16.msra.mxu0 0
      %5231 = vmatpush.bf16.msra.mxu0 0
      %5232 = vmatpush.bf16.msra.mxu0 %v5192
      %5233 = vmatpush.bf16.msra.mxu0 %v5151
      %5234 = vmatpush.bf16.msra.mxu0 %v5145
      %5235 = vmatpush.bf16.msra.mxu0 %v5139
      %5236 = vmatpush.bf16.msra.mxu0 %v5133
      %5237 = vmatmul.bf16.gmra.mxu0 %v518
      %v5238 = vpop.f32.mrf.mxu0
      %v5239 = vadd.f32 %v5031, %v5238
      %v5240 = vpop.f32.mrf.mxu0
      %5241 = vdwg.mxu0
      %5242 = vmatpush.bf16.msra.mxu0 0
      %5243 = vmatpush.bf16.msra.mxu0 0
      %5244 = vmatpush.bf16.msra.mxu0 0
      %5245 = vmatpush.bf16.msra.mxu0 %v5195
      %5246 = vmatpush.bf16.msra.mxu0 %v5152
      %5247 = vmatpush.bf16.msra.mxu0 %v5146
      %5248 = vmatpush.bf16.msra.mxu0 %v5140
      %5249 = vmatpush.bf16.msra.mxu0 %v5134
      %5250 = vmatmul.bf16.gmra.mxu0 %v518
      %v5251 = vpop.f32.mrf.mxu0
      %v5252 = vadd.f32 %v5032, %v5251
      %v5253 = vpop.f32.mrf.mxu0
      %5254 = vdwg.mxu0
      %5255 = vmatpush.bf16.msra.mxu0 0
      %5256 = vmatpush.bf16.msra.mxu0 0
      %5257 = vmatpush.bf16.msra.mxu0 0
      %5258 = vmatpush.bf16.msra.mxu0 %v5198
      %5259 = vmatpush.bf16.msra.mxu0 %v5153
      %5260 = vmatpush.bf16.msra.mxu0 %v5147
      %5261 = vmatpush.bf16.msra.mxu0 %v5141
      %5262 = vmatpush.bf16.msra.mxu0 %v5135
      %5263 = vmatmul.bf16.gmra.mxu0 %v518
      %v5264 = vpop.f32.mrf.mxu0
      %v5265 = vadd.f32 %v5033, %v5264
      %v5266 = vpop.f32.mrf.mxu0
      %5267 = vdwg.mxu0
      %5268 = vmatpush.bf16.msra.mxu0 0
      %5269 = vmatpush.bf16.msra.mxu0 0
      %5270 = vmatpush.bf16.msra.mxu0 0
      %5271 = vmatpush.bf16.msra.mxu0 %v5201
      %5272 = vmatpush.bf16.msra.mxu0 %v5154
      %5273 = vmatpush.bf16.msra.mxu0 %v5148
      %5274 = vmatpush.bf16.msra.mxu0 %v5142
      %5275 = vmatpush.bf16.msra.mxu0 %v5136
      %5276 = vmatmul.bf16.gmra.mxu0 %v518
      %v5277 = vpop.f32.mrf.mxu0
      %v5278 = vadd.f32 %v5034, %v5277
      %v5279 = vpop.f32.mrf.mxu0
      %5280 = vdwg.mxu0
      %v5281 = vtanh.pop %v5213
      %v5282 = vtanh.pop %v5226
      %v5283 = vtanh.pop %v5239
      %v5284 = vtanh.pop %v5252
      %v5285 = vtanh.pop %v5265
      %v5286 = vtanh.pop %v5278
      %v5287 = vpack.c.bf16 %v5281, %v5281
      %v5288 = vpack.c.bf16 %v5282, %v5282
      %v5289 = vpack.c.bf16 %v5283, %v5283
      %v5290 = vpack.c.bf16 %v5284, %v5284
      %v5291 = vpack.c.bf16 %v5285, %v5285
      %v5292 = vpack.c.bf16 %v5286, %v5286
      %s5293 = scalar_lea.vmem %s311, 2280
      %v5294 = vld [vmem:[%s5293] sm:$0xf]
      %v5295 = vld [vmem:[%s5293 + $0x4] sm:$0xf]
      %v5296 = vld [vmem:[%s5293 + $0x8] sm:$0xf]
      %v5297 = vld [vmem:[%s5293 + $0xc] sm:$0xf]
      %v5298 = vld [vmem:[%s5293 + $0x10] sm:$0xf]
      %v5299 = vld [vmem:[%s5293 + $0x14] sm:$0xf]
      %v5300 = vld [vmem:[%s5293 + $0x18] sm:$0xf]
      %v5301 = vld [vmem:[%s5293 + $0x1c] sm:$0xf]
      %v5302 = vld [vmem:[%s5293 + $0x20] sm:$0xf]
      %v5303 = vld [vmem:[%s5293 + $0x24] sm:$0xf]
      %v5304 = vld [vmem:[%s5293 + $0x28] sm:$0xf]
      %v5305 = vld [vmem:[%s5293 + $0x2c] sm:$0xf]
      %v5306 = vld [vmem:[%s5293 + $0x30] sm:$0xf]
      %v5307 = vld [vmem:[%s5293 + $0x34] sm:$0xf]
      %v5308 = vld [vmem:[%s5293 + $0x38] sm:$0xf]
      %v5309 = vld [vmem:[%s5293 + $0x3c] sm:$0xf]
      %v5310 = vld [vmem:[%s5293 + $0x40] sm:$0xf]
      %v5311 = vld [vmem:[%s5293 + $0x44] sm:$0xf]
      %v5312 = vld [vmem:[%s5293 + $0x48] sm:$0xf]
      %v5313 = vld [vmem:[%s5293 + $0x4c] sm:$0xf]
      %v5314 = vld [vmem:[%s5293 + $0x50] sm:$0xf]
      %v5315 = vld [vmem:[%s5293 + $0x54] sm:$0xf]
      %v5316 = vld [vmem:[%s5293 + $0x58] sm:$0xf]
      %v5317 = vld [vmem:[%s5293 + $0x5c] sm:$0xf]
      %v5318 = vld [vmem:[%s5293 + $0x60] sm:$0xf]
      %v5319 = vld [vmem:[%s5293 + $0x64] sm:$0xf]
      %v5320 = vld [vmem:[%s5293 + $0x68] sm:$0xf]
      %v5321 = vld [vmem:[%s5293 + $0x6c] sm:$0xf]
      %v5322 = vld [vmem:[%s5293 + $0x70] sm:$0xf]
      %v5323 = vld [vmem:[%s5293 + $0x74] sm:$0xf]
      %v5324 = vld [vmem:[%s5293 + $0x78] sm:$0xf]
      %v5325 = vld [vmem:[%s5293 + $0x7c] sm:$0xf]
      %v5326 = vld [vmem:[%s5293 + $0x80] sm:$0xf]
      %v5327 = vld [vmem:[%s5293 + $0x84] sm:$0xf]
      %v5328 = vld [vmem:[%s5293 + $0x88] sm:$0xf]
      %v5329 = vld [vmem:[%s5293 + $0x8c] sm:$0xf]
      %v5330 = vld [vmem:[%s5293 + $0x90] sm:$0xf]
      %v5331 = vld [vmem:[%s5293 + $0x94] sm:$0xf]
      %v5332 = vld [vmem:[%s5293 + $0x98] sm:$0xf]
      %v5333 = vld [vmem:[%s5293 + $0x9c] sm:$0xf]
      %v5334 = vld [vmem:[%s5293 + $0xa0] sm:$0xf]
      %v5335 = vld [vmem:[%s5293 + $0xa4] sm:$0xf]
      %v5336 = vld [vmem:[%s5293 + $0xa8] sm:$0xf]
      %v5337 = vld [vmem:[%s5293 + $0xac] sm:$0xf]
      %v5338 = vld [vmem:[%s5293 + $0xb0] sm:$0xf]
      %v5339 = vld [vmem:[%s5293 + $0xb4] sm:$0xf]
      %v5340 = vld [vmem:[%s5293 + $0xb8] sm:$0xf]
      %v5341 = vld [vmem:[%s5293 + $0xbc] sm:$0xf]
      %v5342 = vld [vmem:[%s5293 + $0xc0] sm:$0xf]
      %v5343 = vld [vmem:[%s5293 + $0xc4] sm:$0xf]
      %v5344 = vld [vmem:[%s5293 + $0xc8] sm:$0xf]
      %v5345 = vld [vmem:[%s5293 + $0xcc] sm:$0xf]
      %v5346 = vld [vmem:[%s5293 + $0xd0] sm:$0xf]
      %v5347 = vld [vmem:[%s5293 + $0xd4] sm:$0xf]
      %v5348 = vld [vmem:[%s5293 + $0xd8] sm:$0xf]
      %v5349 = vld [vmem:[%s5293 + $0xdc] sm:$0xf]
      %v5350 = vld [vmem:[%s5293 + $0xe0] sm:$0xf]
      %v5351 = vld [vmem:[%s5293 + $0xe4] sm:$0xf]
      %v5352 = vld [vmem:[%s5293 + $0xe8] sm:$0xf]
      %v5353 = vld [vmem:[%s5293 + $0xec] sm:$0xf]
      %v5354 = vld [vmem:[%s5293 + $0xf0] sm:$0xf]
      %v5355 = vld [vmem:[%s5293 + $0xf4] sm:$0xf]
      %v5356 = vld [vmem:[%s5293 + $0xf8] sm:$0xf]
      %v5357 = vld [vmem:[%s5293 + $0xfc] sm:$0xf]
      %v5358 = vld [vmem:[%s5293 + $0x100] sm:$0xf]
      %v5359 = vld [vmem:[%s5293 + $0x104] sm:$0xf]
      %v5360 = vld [vmem:[%s5293 + $0x108] sm:$0xf]
      %v5361 = vld [vmem:[%s5293 + $0x10c] sm:$0xf]
      %v5362 = vld [vmem:[%s5293 + $0x110] sm:$0xf]
      %v5363 = vld [vmem:[%s5293 + $0x114] sm:$0xf]
      %v5364 = vld [vmem:[%s5293 + $0x118] sm:$0xf]
      %v5365 = vld [vmem:[%s5293 + $0x11c] sm:$0xf]
      %v5366 = vld [vmem:[%s5293 + $0x120] sm:$0xf]
      %v5367 = vld [vmem:[%s5293 + $0x124] sm:$0xf]
      %v5368 = vld [vmem:[%s5293 + $0x128] sm:$0xf]
      %v5369 = vld [vmem:[%s5293 + $0x12c] sm:$0xf]
      %v5370 = vld [vmem:[%s5293 + $0x130] sm:$0xf]
      %v5371 = vld [vmem:[%s5293 + $0x134] sm:$0xf]
      %v5372 = vld [vmem:[%s5293 + $0x138] sm:$0xf]
      %v5373 = vld [vmem:[%s5293 + $0x13c] sm:$0xf]
      %v5374 = vld [vmem:[%s5293 + $0x140] sm:$0xf]
      %v5375 = vld [vmem:[%s5293 + $0x144] sm:$0xf]
      %v5376 = vld [vmem:[%s5293 + $0x148] sm:$0xf]
      %v5377 = vld [vmem:[%s5293 + $0x14c] sm:$0xf]
      %v5378 = vld [vmem:[%s5293 + $0x150] sm:$0xf]
      %v5379 = vld [vmem:[%s5293 + $0x154] sm:$0xf]
      %v5380 = vld [vmem:[%s5293 + $0x158] sm:$0xf]
      %v5381 = vld [vmem:[%s5293 + $0x15c] sm:$0xf]
      %v5382 = vld [vmem:[%s5293 + $0x160] sm:$0xf]
      %v5383 = vld [vmem:[%s5293 + $0x164] sm:$0xf]
      %v5384 = vld [vmem:[%s5293 + $0x168] sm:$0xf]
      %v5385 = vld [vmem:[%s5293 + $0x16c] sm:$0xf]
      %v5386 = vld [vmem:[%s5293 + $0x170] sm:$0xf]
      %v5387 = vld [vmem:[%s5293 + $0x174] sm:$0xf]
      %v5388 = vld [vmem:[%s5293 + $0x178] sm:$0xf]
      %s5389 = scalar_lea.vmem %s316, 6
      %v5390 = vld [vmem:[%s5389] sm:$0x1]
      %v5392 = vperm.slane %v5390, 0
      %v5489 = vunpack.c.l.b16 %v5294
      %v5490 = vunpack.c.l.b16 %v5295
      %v5491 = vunpack.c.l.b16 %v5296
      %v5492 = vunpack.c.l.b16 %v5297
      %v5493 = vunpack.c.l.b16 %v5298
      %v5494 = vunpack.c.l.b16 %v5299
      %v5495 = vunpack.c.l.b16 %v5300
      %v5496 = vunpack.c.l.b16 %v5301
      %v5497 = vunpack.c.l.b16 %v5302
      %v5498 = vunpack.c.l.b16 %v5303
      %v5499 = vunpack.c.l.b16 %v5304
      %v5500 = vunpack.c.l.b16 %v5305
      %v5501 = vunpack.c.l.b16 %v5306
      %v5502 = vunpack.c.l.b16 %v5307
      %v5503 = vunpack.c.l.b16 %v5308
      %v5504 = vunpack.c.l.b16 %v5309
      %v5505 = vunpack.c.l.b16 %v5310
      %v5506 = vunpack.c.l.b16 %v5311
      %v5507 = vunpack.c.l.b16 %v5312
      %v5508 = vunpack.c.l.b16 %v5313
      %v5509 = vunpack.c.l.b16 %v5314
      %v5510 = vunpack.c.l.b16 %v5315
      %v5511 = vunpack.c.l.b16 %v5316
      %v5512 = vunpack.c.l.b16 %v5317
      %v5513 = vunpack.c.l.b16 %v5318
      %v5514 = vunpack.c.l.b16 %v5319
      %v5515 = vunpack.c.l.b16 %v5320
      %v5516 = vunpack.c.l.b16 %v5321
      %v5517 = vunpack.c.l.b16 %v5322
      %v5518 = vunpack.c.l.b16 %v5323
      %v5519 = vunpack.c.l.b16 %v5324
      %v5520 = vunpack.c.l.b16 %v5325
      %v5521 = vunpack.c.l.b16 %v5326
      %v5522 = vunpack.c.l.b16 %v5327
      %v5523 = vunpack.c.l.b16 %v5328
      %v5524 = vunpack.c.l.b16 %v5329
      %v5525 = vunpack.c.l.b16 %v5330
      %v5526 = vunpack.c.l.b16 %v5331
      %v5527 = vunpack.c.l.b16 %v5332
      %v5528 = vunpack.c.l.b16 %v5333
      %v5529 = vunpack.c.l.b16 %v5334
      %v5530 = vunpack.c.l.b16 %v5335
      %v5531 = vunpack.c.l.b16 %v5336
      %v5532 = vunpack.c.l.b16 %v5337
      %v5533 = vunpack.c.l.b16 %v5338
      %v5534 = vunpack.c.l.b16 %v5339
      %v5535 = vunpack.c.l.b16 %v5340
      %v5536 = vunpack.c.l.b16 %v5341
      %v5537 = vunpack.c.l.b16 %v5342
      %v5538 = vunpack.c.l.b16 %v5343
      %v5539 = vunpack.c.l.b16 %v5344
      %v5540 = vunpack.c.l.b16 %v5345
      %v5541 = vunpack.c.l.b16 %v5346
      %v5542 = vunpack.c.l.b16 %v5347
      %v5543 = vunpack.c.l.b16 %v5348
      %v5544 = vunpack.c.l.b16 %v5349
      %v5545 = vunpack.c.l.b16 %v5350
      %v5546 = vunpack.c.l.b16 %v5351
      %v5547 = vunpack.c.l.b16 %v5352
      %v5548 = vunpack.c.l.b16 %v5353
      %v5549 = vunpack.c.l.b16 %v5354
      %v5550 = vunpack.c.l.b16 %v5355
      %v5551 = vunpack.c.l.b16 %v5356
      %v5552 = vunpack.c.l.b16 %v5357
      %v5553 = vunpack.c.l.b16 %v5358
      %v5554 = vunpack.c.l.b16 %v5359
      %v5555 = vunpack.c.l.b16 %v5360
      %v5556 = vunpack.c.l.b16 %v5361
      %v5557 = vunpack.c.l.b16 %v5362
      %v5558 = vunpack.c.l.b16 %v5363
      %v5559 = vunpack.c.l.b16 %v5364
      %v5560 = vunpack.c.l.b16 %v5365
      %v5561 = vunpack.c.l.b16 %v5366
      %v5562 = vunpack.c.l.b16 %v5367
      %v5563 = vunpack.c.l.b16 %v5368
      %v5564 = vunpack.c.l.b16 %v5369
      %v5565 = vunpack.c.l.b16 %v5370
      %v5566 = vunpack.c.l.b16 %v5371
      %v5567 = vunpack.c.l.b16 %v5372
      %v5568 = vunpack.c.l.b16 %v5373
      %v5569 = vunpack.c.l.b16 %v5374
      %v5570 = vunpack.c.l.b16 %v5375
      %v5571 = vunpack.c.l.b16 %v5376
      %v5572 = vunpack.c.l.b16 %v5377
      %v5573 = vunpack.c.l.b16 %v5378
      %v5574 = vunpack.c.l.b16 %v5379
      %v5575 = vunpack.c.l.b16 %v5380
      %v5576 = vunpack.c.l.b16 %v5381
      %v5577 = vunpack.c.l.b16 %v5382
      %v5578 = vunpack.c.l.b16 %v5383
      %v5579 = vunpack.c.l.b16 %v5384
      %v5580 = vunpack.c.l.b16 %v5385
      %v5581 = vunpack.c.l.b16 %v5386
      %v5582 = vunpack.c.l.b16 %v5387
      %v5583 = vunpack.c.l.b16 %v5388
      %v5584 = vpack.c.b16 %v5490, %v5489
      %v5585 = vpack.c.b16 %v5492, %v5491
      %v5586 = vpack.c.b16 %v5494, %v5493
      %v5587 = vpack.c.b16 %v5496, %v5495
      %v5588 = vpack.c.b16 %v5498, %v5497
      %v5589 = vpack.c.b16 %v5500, %v5499
      %v5590 = vpack.c.b16 %v5502, %v5501
      %v5591 = vpack.c.b16 %v5504, %v5503
      %v5592 = vpack.c.b16 %v5506, %v5505
      %v5593 = vpack.c.b16 %v5508, %v5507
      %v5594 = vpack.c.b16 %v5510, %v5509
      %v5595 = vpack.c.b16 %v5512, %v5511
      %v5596 = vpack.c.b16 %v5514, %v5513
      %v5597 = vpack.c.b16 %v5516, %v5515
      %v5598 = vpack.c.b16 %v5518, %v5517
      %v5599 = vpack.c.b16 %v5520, %v5519
      %v5600 = vpack.c.b16 %v5522, %v5521
      %v5601 = vpack.c.b16 %v5524, %v5523
      %v5602 = vpack.c.b16 %v5526, %v5525
      %v5603 = vpack.c.b16 %v5528, %v5527
      %v5604 = vpack.c.b16 %v5530, %v5529
      %v5605 = vpack.c.b16 %v5532, %v5531
      %v5606 = vpack.c.b16 %v5534, %v5533
      %v5607 = vpack.c.b16 %v5536, %v5535
      %v5608 = vpack.c.b16 %v5538, %v5537
      %v5609 = vpack.c.b16 %v5540, %v5539
      %v5610 = vpack.c.b16 %v5542, %v5541
      %v5611 = vpack.c.b16 %v5544, %v5543
      %v5612 = vpack.c.b16 %v5546, %v5545
      %v5613 = vpack.c.b16 %v5548, %v5547
      %v5614 = vpack.c.b16 %v5550, %v5549
      %v5615 = vpack.c.b16 %v5552, %v5551
      %v5616 = vpack.c.b16 %v5554, %v5553
      %v5617 = vpack.c.b16 %v5556, %v5555
      %v5618 = vpack.c.b16 %v5558, %v5557
      %v5619 = vpack.c.b16 %v5560, %v5559
      %v5620 = vpack.c.b16 %v5562, %v5561
      %v5621 = vpack.c.b16 %v5564, %v5563
      %v5622 = vpack.c.b16 %v5566, %v5565
      %v5623 = vpack.c.b16 %v5568, %v5567
      %v5624 = vpack.c.b16 %v5570, %v5569
      %v5625 = vpack.c.b16 %v5572, %v5571
      %v5626 = vpack.c.b16 %v5574, %v5573
      %v5627 = vpack.c.b16 %v5576, %v5575
      %v5628 = vpack.c.b16 %v5578, %v5577
      %v5629 = vpack.c.b16 %v5580, %v5579
      %v5630 = vpack.c.b16 %v5582, %v5581
      %v5631 = vpack.c.b16 %v5583, %v5583
      %v5680 = vsel %vm1013, %v5292, 0
      %v5683 = vsel %vm1017, %v5631, 0
      %5685 = vmatpush.bf16.msra.mxu0 %v5591
      %5686 = vmatpush.bf16.msra.mxu0 %v5590
      %5687 = vmatpush.bf16.msra.mxu0 %v5589
      %5688 = vmatpush.bf16.msra.mxu0 %v5588
      %5689 = vmatpush.bf16.msra.mxu0 %v5587
      %5690 = vmatpush.bf16.msra.mxu0 %v5586
      %5691 = vmatpush.bf16.msra.mxu0 %v5585
      %5692 = vmatpush.bf16.msra.mxu0 %v5584
      %5693 = vmatmul.bf16.gmra.mxu0 %v5287
      %v5694 = vpop.f32.mrf.mxu0
      %v5695 = vadd.f32 %v5392, %v5694
      %v5696 = vpop.f32.mrf.mxu0
      %5697 = vdwg.mxu0
      %5698 = vmatpush.bf16.msra.mxu0 %v5599
      %5699 = vmatpush.bf16.msra.mxu0 %v5598
      %5700 = vmatpush.bf16.msra.mxu0 %v5597
      %5701 = vmatpush.bf16.msra.mxu0 %v5596
      %5702 = vmatpush.bf16.msra.mxu0 %v5595
      %5703 = vmatpush.bf16.msra.mxu0 %v5594
      %5704 = vmatpush.bf16.msra.mxu0 %v5593
      %5705 = vmatpush.bf16.msra.mxu0 %v5592
      %5706 = vmatmul.bf16.gmra.mxu0 %v5288
      %v5707 = vpop.f32.mrf.mxu0
      %v5708 = vadd.f32 %v5695, %v5707
      %v5709 = vpop.f32.mrf.mxu0
      %5710 = vdwg.mxu0
      %5711 = vmatpush.bf16.msra.mxu0 %v5607
      %5712 = vmatpush.bf16.msra.mxu0 %v5606
      %5713 = vmatpush.bf16.msra.mxu0 %v5605
      %5714 = vmatpush.bf16.msra.mxu0 %v5604
      %5715 = vmatpush.bf16.msra.mxu0 %v5603
      %5716 = vmatpush.bf16.msra.mxu0 %v5602
      %5717 = vmatpush.bf16.msra.mxu0 %v5601
      %5718 = vmatpush.bf16.msra.mxu0 %v5600
      %5719 = vmatmul.bf16.gmra.mxu0 %v5289
      %v5720 = vpop.f32.mrf.mxu0
      %v5721 = vadd.f32 %v5708, %v5720
      %v5722 = vpop.f32.mrf.mxu0
      %5723 = vdwg.mxu0
      %5724 = vmatpush.bf16.msra.mxu0 %v5615
      %5725 = vmatpush.bf16.msra.mxu0 %v5614
      %5726 = vmatpush.bf16.msra.mxu0 %v5613
      %5727 = vmatpush.bf16.msra.mxu0 %v5612
      %5728 = vmatpush.bf16.msra.mxu0 %v5611
      %5729 = vmatpush.bf16.msra.mxu0 %v5610
      %5730 = vmatpush.bf16.msra.mxu0 %v5609
      %5731 = vmatpush.bf16.msra.mxu0 %v5608
      %5732 = vmatmul.bf16.gmra.mxu0 %v5290
      %v5733 = vpop.f32.mrf.mxu0
      %v5734 = vadd.f32 %v5721, %v5733
      %v5735 = vpop.f32.mrf.mxu0
      %5736 = vdwg.mxu0
      %5737 = vmatpush.bf16.msra.mxu0 %v5623
      %5738 = vmatpush.bf16.msra.mxu0 %v5622
      %5739 = vmatpush.bf16.msra.mxu0 %v5621
      %5740 = vmatpush.bf16.msra.mxu0 %v5620
      %5741 = vmatpush.bf16.msra.mxu0 %v5619
      %5742 = vmatpush.bf16.msra.mxu0 %v5618
      %5743 = vmatpush.bf16.msra.mxu0 %v5617
      %5744 = vmatpush.bf16.msra.mxu0 %v5616
      %5745 = vmatmul.bf16.gmra.mxu0 %v5291
      %v5746 = vpop.f32.mrf.mxu0
      %v5747 = vadd.f32 %v5734, %v5746
      %v5748 = vpop.f32.mrf.mxu0
      %5749 = vdwg.mxu0
      %5750 = vmatpush.bf16.msra.mxu0 %v5683
      %5751 = vmatpush.bf16.msra.mxu0 %v5630
      %5752 = vmatpush.bf16.msra.mxu0 %v5629
      %5753 = vmatpush.bf16.msra.mxu0 %v5628
      %5754 = vmatpush.bf16.msra.mxu0 %v5627
      %5755 = vmatpush.bf16.msra.mxu0 %v5626
      %5756 = vmatpush.bf16.msra.mxu0 %v5625
      %5757 = vmatpush.bf16.msra.mxu0 %v5624
      %5758 = vmatmul.bf16.gmra.mxu0 %v5680
      %v5759 = vpop.f32.mrf.mxu0
      %v5760 = vadd.f32 %v5747, %v5759
      %v5761 = vpop.f32.mrf.mxu0
      %5762 = vdwg.mxu0
      %v5763 = vmax.f32 %v5760, 0.0
      %v5764 = vmul.f32 %v5763, %v1101
      %v5765 = vsel %vm516, %v5764, 0.0
      %5766 = vadd.xlane.f32.xlu0 %v5765
      %v5767 = vpop.xlane.xlu0 %5766
      %v5768 = vrcp.pop %v5767
      %v5769 = vmul.f32 %v5763, %v5768
      %s5770 = scalar_lea.vmem %s322, 48
      %5771 = vst.msk [vmem:[%s5770] sm:$0xff] %vm516, %v5769
      %s5772 = scalar_lea.vmem %s298, 1680
      %v5773 = vld [vmem:[%s5772] sm:$0xff]
      %v5774 = vld [vmem:[%s5772 + $0x8] sm:$0xff]
      %v5775 = vld [vmem:[%s5772 + $0x10] sm:$0xff]
      %v5776 = vld [vmem:[%s5772 + $0x18] sm:$0xff]
      %v5777 = vld [vmem:[%s5772 + $0x20] sm:$0xff]
      %v5778 = vld [vmem:[%s5772 + $0x28] sm:$0xff]
      %v5779 = vld [vmem:[%s5772 + $0x30] sm:$0xff]
      %v5780 = vld [vmem:[%s5772 + $0x38] sm:$0xff]
      %v5781 = vld [vmem:[%s5772 + $0x40] sm:$0xff]
      %v5782 = vld [vmem:[%s5772 + $0x48] sm:$0xff]
      %v5783 = vld [vmem:[%s5772 + $0x50] sm:$0xff]
      %v5784 = vld [vmem:[%s5772 + $0x58] sm:$0xff]
      %v5785 = vld [vmem:[%s5772 + $0x60] sm:$0xff]
      %v5786 = vld [vmem:[%s5772 + $0x68] sm:$0xff]
      %v5787 = vld [vmem:[%s5772 + $0x70] sm:$0xff]
      %v5788 = vld [vmem:[%s5772 + $0x78] sm:$0xff]
      %v5789 = vld [vmem:[%s5772 + $0x80] sm:$0xff]
      %v5790 = vld [vmem:[%s5772 + $0x88] sm:$0xff]
      %v5791 = vld [vmem:[%s5772 + $0x90] sm:$0xff]
      %v5792 = vld [vmem:[%s5772 + $0x98] sm:$0xff]
      %v5793 = vld [vmem:[%s5772 + $0xa0] sm:$0xff]
      %v5794 = vld [vmem:[%s5772 + $0xa8] sm:$0xff]
      %v5795 = vld [vmem:[%s5772 + $0xb0] sm:$0xff]
      %v5796 = vld [vmem:[%s5772 + $0xb8] sm:$0xff]
      %v5797 = vld [vmem:[%s5772 + $0xc0] sm:$0xff]
      %v5798 = vld [vmem:[%s5772 + $0xc8] sm:$0xff]
      %v5799 = vld [vmem:[%s5772 + $0xd0] sm:$0xff]
      %v5800 = vld [vmem:[%s5772 + $0xd8] sm:$0x33]
      %v5801 = vld [vmem:[%s5772 + $0xe0] sm:$0x33]
      %v5802 = vld [vmem:[%s5772 + $0xe8] sm:$0x33]
      %s5803 = scalar_lea.vmem %s304, 42
      %v5804 = vld [vmem:[%s5803] sm:$0x3f]
      %v5806 = vperm.slane %v5804, 0
      %v5807 = vperm.slane %v5804, 1
      %v5808 = vperm.slane %v5804, 2
      %v5809 = vperm.slane %v5804, 3
      %v5810 = vperm.slane %v5804, 4
      %v5811 = vperm.slane %v5804, 5
      %v5848 = vunpack.c.l.b16 %v5773
      %v5849 = vunpack.c.h.b16 %v5773
      %v5850 = vunpack.c.l.b16 %v5774
      %v5851 = vunpack.c.h.b16 %v5774
      %v5852 = vunpack.c.l.b16 %v5775
      %v5853 = vunpack.c.h.b16 %v5775
      %v5854 = vunpack.c.l.b16 %v5776
      %v5855 = vunpack.c.h.b16 %v5776
      %v5856 = vunpack.c.l.b16 %v5777
      %v5857 = vunpack.c.h.b16 %v5777
      %v5858 = vunpack.c.l.b16 %v5778
      %v5859 = vunpack.c.h.b16 %v5778
      %v5860 = vunpack.c.l.b16 %v5779
      %v5861 = vunpack.c.h.b16 %v5779
      %v5862 = vunpack.c.l.b16 %v5780
      %v5863 = vunpack.c.h.b16 %v5780
      %v5864 = vunpack.c.l.b16 %v5781
      %v5865 = vunpack.c.h.b16 %v5781
      %v5866 = vunpack.c.l.b16 %v5782
      %v5867 = vunpack.c.h.b16 %v5782
      %v5868 = vunpack.c.l.b16 %v5783
      %v5869 = vunpack.c.h.b16 %v5783
      %v5870 = vunpack.c.l.b16 %v5784
      %v5871 = vunpack.c.h.b16 %v5784
      %v5872 = vunpack.c.l.b16 %v5785
      %v5873 = vunpack.c.h.b16 %v5785
      %v5874 = vunpack.c.l.b16 %v5786
      %v5875 = vunpack.c.h.b16 %v5786
      %v5876 = vunpack.c.l.b16 %v5787
      %v5877 = vunpack.c.h.b16 %v5787
      %v5878 = vunpack.c.l.b16 %v5788
      %v5879 = vunpack.c.h.b16 %v5788
      %v5880 = vunpack.c.l.b16 %v5789
      %v5881 = vunpack.c.h.b16 %v5789
      %v5882 = vunpack.c.l.b16 %v5790
      %v5883 = vunpack.c.h.b16 %v5790
      %v5884 = vunpack.c.l.b16 %v5791
      %v5885 = vunpack.c.h.b16 %v5791
      %v5886 = vunpack.c.l.b16 %v5792
      %v5887 = vunpack.c.h.b16 %v5792
      %v5888 = vunpack.c.l.b16 %v5793
      %v5889 = vunpack.c.h.b16 %v5793
      %v5890 = vunpack.c.l.b16 %v5794
      %v5891 = vunpack.c.h.b16 %v5794
      %v5892 = vunpack.c.l.b16 %v5795
      %v5893 = vunpack.c.h.b16 %v5795
      %v5894 = vunpack.c.l.b16 %v5796
      %v5895 = vunpack.c.h.b16 %v5796
      %v5896 = vunpack.c.l.b16 %v5797
      %v5897 = vunpack.c.h.b16 %v5797
      %v5898 = vunpack.c.l.b16 %v5798
      %v5899 = vunpack.c.h.b16 %v5798
      %v5900 = vunpack.c.l.b16 %v5799
      %v5901 = vunpack.c.h.b16 %v5799
      %v5902 = vunpack.c.l.b16 %v5800
      %v5903 = vunpack.c.h.b16 %v5800
      %v5904 = vunpack.c.l.b16 %v5801
      %v5905 = vunpack.c.h.b16 %v5801
      %v5906 = vunpack.c.l.b16 %v5802
      %v5907 = vunpack.c.h.b16 %v5802
      %v5908 = vpack.c.b16 %v5854, %v5848
      %v5909 = vpack.c.b16 %v5855, %v5849
      %v5910 = vpack.c.b16 %v5856, %v5850
      %v5911 = vpack.c.b16 %v5857, %v5851
      %v5912 = vpack.c.b16 %v5858, %v5852
      %v5913 = vpack.c.b16 %v5859, %v5853
      %v5914 = vpack.c.b16 %v5866, %v5860
      %v5915 = vpack.c.b16 %v5867, %v5861
      %v5916 = vpack.c.b16 %v5868, %v5862
      %v5917 = vpack.c.b16 %v5869, %v5863
      %v5918 = vpack.c.b16 %v5870, %v5864
      %v5919 = vpack.c.b16 %v5871, %v5865
      %v5920 = vpack.c.b16 %v5878, %v5872
      %v5921 = vpack.c.b16 %v5879, %v5873
      %v5922 = vpack.c.b16 %v5880, %v5874
      %v5923 = vpack.c.b16 %v5881, %v5875
      %v5924 = vpack.c.b16 %v5882, %v5876
      %v5925 = vpack.c.b16 %v5883, %v5877
      %v5926 = vpack.c.b16 %v5890, %v5884
      %v5927 = vpack.c.b16 %v5891, %v5885
      %v5928 = vpack.c.b16 %v5892, %v5886
      %v5929 = vpack.c.b16 %v5893, %v5887
      %v5930 = vpack.c.b16 %v5894, %v5888
      %v5931 = vpack.c.b16 %v5895, %v5889
      %v5932 = vpack.c.b16 %v5902, %v5896
      %v5933 = vpack.c.b16 %v5903, %v5897
      %v5934 = vpack.c.b16 %v5904, %v5898
      %v5935 = vpack.c.b16 %v5905, %v5899
      %v5936 = vpack.c.b16 %v5906, %v5900
      %v5937 = vpack.c.b16 %v5907, %v5901
      %v5963 = vsel %vm520, %v5932, 0
      %v5966 = vsel %vm520, %v5933, 0
      %v5969 = vsel %vm520, %v5934, 0
      %v5972 = vsel %vm520, %v5935, 0
      %v5975 = vsel %vm520, %v5936, 0
      %v5978 = vsel %vm520, %v5937, 0
      %5980 = vmatpush.bf16.msra.mxu0 0
      %5981 = vmatpush.bf16.msra.mxu0 0
      %5982 = vmatpush.bf16.msra.mxu0 0
      %5983 = vmatpush.bf16.msra.mxu0 %v5963
      %5984 = vmatpush.bf16.msra.mxu0 %v5926
      %5985 = vmatpush.bf16.msra.mxu0 %v5920
      %5986 = vmatpush.bf16.msra.mxu0 %v5914
      %5987 = vmatpush.bf16.msra.mxu0 %v5908
      %5988 = vmatmul.bf16.gmra.mxu0 %v518
      %v5989 = vpop.f32.mrf.mxu0
      %v5990 = vadd.f32 %v5806, %v5989
      %v5991 = vpop.f32.mrf.mxu0
      %5992 = vdwg.mxu0
      %5993 = vmatpush.bf16.msra.mxu0 0
      %5994 = vmatpush.bf16.msra.mxu0 0
      %5995 = vmatpush.bf16.msra.mxu0 0
      %5996 = vmatpush.bf16.msra.mxu0 %v5966
      %5997 = vmatpush.bf16.msra.mxu0 %v5927
      %5998 = vmatpush.bf16.msra.mxu0 %v5921
      %5999 = vmatpush.bf16.msra.mxu0 %v5915
      %6000 = vmatpush.bf16.msra.mxu0 %v5909
      %6001 = vmatmul.bf16.gmra.mxu0 %v518
      %v6002 = vpop.f32.mrf.mxu0
      %v6003 = vadd.f32 %v5807, %v6002
      %v6004 = vpop.f32.mrf.mxu0
      %6005 = vdwg.mxu0
      %6006 = vmatpush.bf16.msra.mxu0 0
      %6007 = vmatpush.bf16.msra.mxu0 0
      %6008 = vmatpush.bf16.msra.mxu0 0
      %6009 = vmatpush.bf16.msra.mxu0 %v5969
      %6010 = vmatpush.bf16.msra.mxu0 %v5928
      %6011 = vmatpush.bf16.msra.mxu0 %v5922
      %6012 = vmatpush.bf16.msra.mxu0 %v5916
      %6013 = vmatpush.bf16.msra.mxu0 %v5910
      %6014 = vmatmul.bf16.gmra.mxu0 %v518
      %v6015 = vpop.f32.mrf.mxu0
      %v6016 = vadd.f32 %v5808, %v6015
      %v6017 = vpop.f32.mrf.mxu0
      %6018 = vdwg.mxu0
      %6019 = vmatpush.bf16.msra.mxu0 0
      %6020 = vmatpush.bf16.msra.mxu0 0
      %6021 = vmatpush.bf16.msra.mxu0 0
      %6022 = vmatpush.bf16.msra.mxu0 %v5972
      %6023 = vmatpush.bf16.msra.mxu0 %v5929
      %6024 = vmatpush.bf16.msra.mxu0 %v5923
      %6025 = vmatpush.bf16.msra.mxu0 %v5917
      %6026 = vmatpush.bf16.msra.mxu0 %v5911
      %6027 = vmatmul.bf16.gmra.mxu0 %v518
      %v6028 = vpop.f32.mrf.mxu0
      %v6029 = vadd.f32 %v5809, %v6028
      %v6030 = vpop.f32.mrf.mxu0
      %6031 = vdwg.mxu0
      %6032 = vmatpush.bf16.msra.mxu0 0
      %6033 = vmatpush.bf16.msra.mxu0 0
      %6034 = vmatpush.bf16.msra.mxu0 0
      %6035 = vmatpush.bf16.msra.mxu0 %v5975
      %6036 = vmatpush.bf16.msra.mxu0 %v5930
      %6037 = vmatpush.bf16.msra.mxu0 %v5924
      %6038 = vmatpush.bf16.msra.mxu0 %v5918
      %6039 = vmatpush.bf16.msra.mxu0 %v5912
      %6040 = vmatmul.bf16.gmra.mxu0 %v518
      %v6041 = vpop.f32.mrf.mxu0
      %v6042 = vadd.f32 %v5810, %v6041
      %v6043 = vpop.f32.mrf.mxu0
      %6044 = vdwg.mxu0
      %6045 = vmatpush.bf16.msra.mxu0 0
      %6046 = vmatpush.bf16.msra.mxu0 0
      %6047 = vmatpush.bf16.msra.mxu0 0
      %6048 = vmatpush.bf16.msra.mxu0 %v5978
      %6049 = vmatpush.bf16.msra.mxu0 %v5931
      %6050 = vmatpush.bf16.msra.mxu0 %v5925
      %6051 = vmatpush.bf16.msra.mxu0 %v5919
      %6052 = vmatpush.bf16.msra.mxu0 %v5913
      %6053 = vmatmul.bf16.gmra.mxu0 %v518
      %v6054 = vpop.f32.mrf.mxu0
      %v6055 = vadd.f32 %v5811, %v6054
      %v6056 = vpop.f32.mrf.mxu0
      %6057 = vdwg.mxu0
      %v6058 = vtanh.pop %v5990
      %v6059 = vtanh.pop %v6003
      %v6060 = vtanh.pop %v6016
      %v6061 = vtanh.pop %v6029
      %v6062 = vtanh.pop %v6042
      %v6063 = vtanh.pop %v6055
      %v6064 = vpack.c.bf16 %v6058, %v6058
      %v6065 = vpack.c.bf16 %v6059, %v6059
      %v6066 = vpack.c.bf16 %v6060, %v6060
      %v6067 = vpack.c.bf16 %v6061, %v6061
      %v6068 = vpack.c.bf16 %v6062, %v6062
      %v6069 = vpack.c.bf16 %v6063, %v6063
      %s6070 = scalar_lea.vmem %s311, 2660
      %v6071 = vld [vmem:[%s6070] sm:$0xf]
      %v6072 = vld [vmem:[%s6070 + $0x4] sm:$0xf]
      %v6073 = vld [vmem:[%s6070 + $0x8] sm:$0xf]
      %v6074 = vld [vmem:[%s6070 + $0xc] sm:$0xf]
      %v6075 = vld [vmem:[%s6070 + $0x10] sm:$0xf]
      %v6076 = vld [vmem:[%s6070 + $0x14] sm:$0xf]
      %v6077 = vld [vmem:[%s6070 + $0x18] sm:$0xf]
      %v6078 = vld [vmem:[%s6070 + $0x1c] sm:$0xf]
      %v6079 = vld [vmem:[%s6070 + $0x20] sm:$0xf]
      %v6080 = vld [vmem:[%s6070 + $0x24] sm:$0xf]
      %v6081 = vld [vmem:[%s6070 + $0x28] sm:$0xf]
      %v6082 = vld [vmem:[%s6070 + $0x2c] sm:$0xf]
      %v6083 = vld [vmem:[%s6070 + $0x30] sm:$0xf]
      %v6084 = vld [vmem:[%s6070 + $0x34] sm:$0xf]
      %v6085 = vld [vmem:[%s6070 + $0x38] sm:$0xf]
      %v6086 = vld [vmem:[%s6070 + $0x3c] sm:$0xf]
      %v6087 = vld [vmem:[%s6070 + $0x40] sm:$0xf]
      %v6088 = vld [vmem:[%s6070 + $0x44] sm:$0xf]
      %v6089 = vld [vmem:[%s6070 + $0x48] sm:$0xf]
      %v6090 = vld [vmem:[%s6070 + $0x4c] sm:$0xf]
      %v6091 = vld [vmem:[%s6070 + $0x50] sm:$0xf]
      %v6092 = vld [vmem:[%s6070 + $0x54] sm:$0xf]
      %v6093 = vld [vmem:[%s6070 + $0x58] sm:$0xf]
      %v6094 = vld [vmem:[%s6070 + $0x5c] sm:$0xf]
      %v6095 = vld [vmem:[%s6070 + $0x60] sm:$0xf]
      %v6096 = vld [vmem:[%s6070 + $0x64] sm:$0xf]
      %v6097 = vld [vmem:[%s6070 + $0x68] sm:$0xf]
      %v6098 = vld [vmem:[%s6070 + $0x6c] sm:$0xf]
      %v6099 = vld [vmem:[%s6070 + $0x70] sm:$0xf]
      %v6100 = vld [vmem:[%s6070 + $0x74] sm:$0xf]
      %v6101 = vld [vmem:[%s6070 + $0x78] sm:$0xf]
      %v6102 = vld [vmem:[%s6070 + $0x7c] sm:$0xf]
      %v6103 = vld [vmem:[%s6070 + $0x80] sm:$0xf]
      %v6104 = vld [vmem:[%s6070 + $0x84] sm:$0xf]
      %v6105 = vld [vmem:[%s6070 + $0x88] sm:$0xf]
      %v6106 = vld [vmem:[%s6070 + $0x8c] sm:$0xf]
      %v6107 = vld [vmem:[%s6070 + $0x90] sm:$0xf]
      %v6108 = vld [vmem:[%s6070 + $0x94] sm:$0xf]
      %v6109 = vld [vmem:[%s6070 + $0x98] sm:$0xf]
      %v6110 = vld [vmem:[%s6070 + $0x9c] sm:$0xf]
      %v6111 = vld [vmem:[%s6070 + $0xa0] sm:$0xf]
      %v6112 = vld [vmem:[%s6070 + $0xa4] sm:$0xf]
      %v6113 = vld [vmem:[%s6070 + $0xa8] sm:$0xf]
      %v6114 = vld [vmem:[%s6070 + $0xac] sm:$0xf]
      %v6115 = vld [vmem:[%s6070 + $0xb0] sm:$0xf]
      %v6116 = vld [vmem:[%s6070 + $0xb4] sm:$0xf]
      %v6117 = vld [vmem:[%s6070 + $0xb8] sm:$0xf]
      %v6118 = vld [vmem:[%s6070 + $0xbc] sm:$0xf]
      %v6119 = vld [vmem:[%s6070 + $0xc0] sm:$0xf]
      %v6120 = vld [vmem:[%s6070 + $0xc4] sm:$0xf]
      %v6121 = vld [vmem:[%s6070 + $0xc8] sm:$0xf]
      %v6122 = vld [vmem:[%s6070 + $0xcc] sm:$0xf]
      %v6123 = vld [vmem:[%s6070 + $0xd0] sm:$0xf]
      %v6124 = vld [vmem:[%s6070 + $0xd4] sm:$0xf]
      %v6125 = vld [vmem:[%s6070 + $0xd8] sm:$0xf]
      %v6126 = vld [vmem:[%s6070 + $0xdc] sm:$0xf]
      %v6127 = vld [vmem:[%s6070 + $0xe0] sm:$0xf]
      %v6128 = vld [vmem:[%s6070 + $0xe4] sm:$0xf]
      %v6129 = vld [vmem:[%s6070 + $0xe8] sm:$0xf]
      %v6130 = vld [vmem:[%s6070 + $0xec] sm:$0xf]
      %v6131 = vld [vmem:[%s6070 + $0xf0] sm:$0xf]
      %v6132 = vld [vmem:[%s6070 + $0xf4] sm:$0xf]
      %v6133 = vld [vmem:[%s6070 + $0xf8] sm:$0xf]
      %v6134 = vld [vmem:[%s6070 + $0xfc] sm:$0xf]
      %v6135 = vld [vmem:[%s6070 + $0x100] sm:$0xf]
      %v6136 = vld [vmem:[%s6070 + $0x104] sm:$0xf]
      %v6137 = vld [vmem:[%s6070 + $0x108] sm:$0xf]
      %v6138 = vld [vmem:[%s6070 + $0x10c] sm:$0xf]
      %v6139 = vld [vmem:[%s6070 + $0x110] sm:$0xf]
      %v6140 = vld [vmem:[%s6070 + $0x114] sm:$0xf]
      %v6141 = vld [vmem:[%s6070 + $0x118] sm:$0xf]
      %v6142 = vld [vmem:[%s6070 + $0x11c] sm:$0xf]
      %v6143 = vld [vmem:[%s6070 + $0x120] sm:$0xf]
      %v6144 = vld [vmem:[%s6070 + $0x124] sm:$0xf]
      %v6145 = vld [vmem:[%s6070 + $0x128] sm:$0xf]
      %v6146 = vld [vmem:[%s6070 + $0x12c] sm:$0xf]
      %v6147 = vld [vmem:[%s6070 + $0x130] sm:$0xf]
      %v6148 = vld [vmem:[%s6070 + $0x134] sm:$0xf]
      %v6149 = vld [vmem:[%s6070 + $0x138] sm:$0xf]
      %v6150 = vld [vmem:[%s6070 + $0x13c] sm:$0xf]
      %v6151 = vld [vmem:[%s6070 + $0x140] sm:$0xf]
      %v6152 = vld [vmem:[%s6070 + $0x144] sm:$0xf]
      %v6153 = vld [vmem:[%s6070 + $0x148] sm:$0xf]
      %v6154 = vld [vmem:[%s6070 + $0x14c] sm:$0xf]
      %v6155 = vld [vmem:[%s6070 + $0x150] sm:$0xf]
      %v6156 = vld [vmem:[%s6070 + $0x154] sm:$0xf]
      %v6157 = vld [vmem:[%s6070 + $0x158] sm:$0xf]
      %v6158 = vld [vmem:[%s6070 + $0x15c] sm:$0xf]
      %v6159 = vld [vmem:[%s6070 + $0x160] sm:$0xf]
      %v6160 = vld [vmem:[%s6070 + $0x164] sm:$0xf]
      %v6161 = vld [vmem:[%s6070 + $0x168] sm:$0xf]
      %v6162 = vld [vmem:[%s6070 + $0x16c] sm:$0xf]
      %v6163 = vld [vmem:[%s6070 + $0x170] sm:$0xf]
      %v6164 = vld [vmem:[%s6070 + $0x174] sm:$0xf]
      %v6165 = vld [vmem:[%s6070 + $0x178] sm:$0xf]
      %s6166 = scalar_lea.vmem %s316, 7
      %v6167 = vld [vmem:[%s6166] sm:$0x1]
      %v6169 = vperm.slane %v6167, 0
      %v6266 = vunpack.c.l.b16 %v6071
      %v6267 = vunpack.c.l.b16 %v6072
      %v6268 = vunpack.c.l.b16 %v6073
      %v6269 = vunpack.c.l.b16 %v6074
      %v6270 = vunpack.c.l.b16 %v6075
      %v6271 = vunpack.c.l.b16 %v6076
      %v6272 = vunpack.c.l.b16 %v6077
      %v6273 = vunpack.c.l.b16 %v6078
      %v6274 = vunpack.c.l.b16 %v6079
      %v6275 = vunpack.c.l.b16 %v6080
      %v6276 = vunpack.c.l.b16 %v6081
      %v6277 = vunpack.c.l.b16 %v6082
      %v6278 = vunpack.c.l.b16 %v6083
      %v6279 = vunpack.c.l.b16 %v6084
      %v6280 = vunpack.c.l.b16 %v6085
      %v6281 = vunpack.c.l.b16 %v6086
      %v6282 = vunpack.c.l.b16 %v6087
      %v6283 = vunpack.c.l.b16 %v6088
      %v6284 = vunpack.c.l.b16 %v6089
      %v6285 = vunpack.c.l.b16 %v6090
      %v6286 = vunpack.c.l.b16 %v6091
      %v6287 = vunpack.c.l.b16 %v6092
      %v6288 = vunpack.c.l.b16 %v6093
      %v6289 = vunpack.c.l.b16 %v6094
      %v6290 = vunpack.c.l.b16 %v6095
      %v6291 = vunpack.c.l.b16 %v6096
      %v6292 = vunpack.c.l.b16 %v6097
      %v6293 = vunpack.c.l.b16 %v6098
      %v6294 = vunpack.c.l.b16 %v6099
      %v6295 = vunpack.c.l.b16 %v6100
      %v6296 = vunpack.c.l.b16 %v6101
      %v6297 = vunpack.c.l.b16 %v6102
      %v6298 = vunpack.c.l.b16 %v6103
      %v6299 = vunpack.c.l.b16 %v6104
      %v6300 = vunpack.c.l.b16 %v6105
      %v6301 = vunpack.c.l.b16 %v6106
      %v6302 = vunpack.c.l.b16 %v6107
      %v6303 = vunpack.c.l.b16 %v6108
      %v6304 = vunpack.c.l.b16 %v6109
      %v6305 = vunpack.c.l.b16 %v6110
      %v6306 = vunpack.c.l.b16 %v6111
      %v6307 = vunpack.c.l.b16 %v6112
      %v6308 = vunpack.c.l.b16 %v6113
      %v6309 = vunpack.c.l.b16 %v6114
      %v6310 = vunpack.c.l.b16 %v6115
      %v6311 = vunpack.c.l.b16 %v6116
      %v6312 = vunpack.c.l.b16 %v6117
      %v6313 = vunpack.c.l.b16 %v6118
      %v6314 = vunpack.c.l.b16 %v6119
      %v6315 = vunpack.c.l.b16 %v6120
      %v6316 = vunpack.c.l.b16 %v6121
      %v6317 = vunpack.c.l.b16 %v6122
      %v6318 = vunpack.c.l.b16 %v6123
      %v6319 = vunpack.c.l.b16 %v6124
      %v6320 = vunpack.c.l.b16 %v6125
      %v6321 = vunpack.c.l.b16 %v6126
      %v6322 = vunpack.c.l.b16 %v6127
      %v6323 = vunpack.c.l.b16 %v6128
      %v6324 = vunpack.c.l.b16 %v6129
      %v6325 = vunpack.c.l.b16 %v6130
      %v6326 = vunpack.c.l.b16 %v6131
      %v6327 = vunpack.c.l.b16 %v6132
      %v6328 = vunpack.c.l.b16 %v6133
      %v6329 = vunpack.c.l.b16 %v6134
      %v6330 = vunpack.c.l.b16 %v6135
      %v6331 = vunpack.c.l.b16 %v6136
      %v6332 = vunpack.c.l.b16 %v6137
      %v6333 = vunpack.c.l.b16 %v6138
      %v6334 = vunpack.c.l.b16 %v6139
      %v6335 = vunpack.c.l.b16 %v6140
      %v6336 = vunpack.c.l.b16 %v6141
      %v6337 = vunpack.c.l.b16 %v6142
      %v6338 = vunpack.c.l.b16 %v6143
      %v6339 = vunpack.c.l.b16 %v6144
      %v6340 = vunpack.c.l.b16 %v6145
      %v6341 = vunpack.c.l.b16 %v6146
      %v6342 = vunpack.c.l.b16 %v6147
      %v6343 = vunpack.c.l.b16 %v6148
      %v6344 = vunpack.c.l.b16 %v6149
      %v6345 = vunpack.c.l.b16 %v6150
      %v6346 = vunpack.c.l.b16 %v6151
      %v6347 = vunpack.c.l.b16 %v6152
      %v6348 = vunpack.c.l.b16 %v6153
      %v6349 = vunpack.c.l.b16 %v6154
      %v6350 = vunpack.c.l.b16 %v6155
      %v6351 = vunpack.c.l.b16 %v6156
      %v6352 = vunpack.c.l.b16 %v6157
      %v6353 = vunpack.c.l.b16 %v6158
      %v6354 = vunpack.c.l.b16 %v6159
      %v6355 = vunpack.c.l.b16 %v6160
      %v6356 = vunpack.c.l.b16 %v6161
      %v6357 = vunpack.c.l.b16 %v6162
      %v6358 = vunpack.c.l.b16 %v6163
      %v6359 = vunpack.c.l.b16 %v6164
      %v6360 = vunpack.c.l.b16 %v6165
      %v6361 = vpack.c.b16 %v6267, %v6266
      %v6362 = vpack.c.b16 %v6269, %v6268
      %v6363 = vpack.c.b16 %v6271, %v6270
      %v6364 = vpack.c.b16 %v6273, %v6272
      %v6365 = vpack.c.b16 %v6275, %v6274
      %v6366 = vpack.c.b16 %v6277, %v6276
      %v6367 = vpack.c.b16 %v6279, %v6278
      %v6368 = vpack.c.b16 %v6281, %v6280
      %v6369 = vpack.c.b16 %v6283, %v6282
      %v6370 = vpack.c.b16 %v6285, %v6284
      %v6371 = vpack.c.b16 %v6287, %v6286
      %v6372 = vpack.c.b16 %v6289, %v6288
      %v6373 = vpack.c.b16 %v6291, %v6290
      %v6374 = vpack.c.b16 %v6293, %v6292
      %v6375 = vpack.c.b16 %v6295, %v6294
      %v6376 = vpack.c.b16 %v6297, %v6296
      %v6377 = vpack.c.b16 %v6299, %v6298
      %v6378 = vpack.c.b16 %v6301, %v6300
      %v6379 = vpack.c.b16 %v6303, %v6302
      %v6380 = vpack.c.b16 %v6305, %v6304
      %v6381 = vpack.c.b16 %v6307, %v6306
      %v6382 = vpack.c.b16 %v6309, %v6308
      %v6383 = vpack.c.b16 %v6311, %v6310
      %v6384 = vpack.c.b16 %v6313, %v6312
      %v6385 = vpack.c.b16 %v6315, %v6314
      %v6386 = vpack.c.b16 %v6317, %v6316
      %v6387 = vpack.c.b16 %v6319, %v6318
      %v6388 = vpack.c.b16 %v6321, %v6320
      %v6389 = vpack.c.b16 %v6323, %v6322
      %v6390 = vpack.c.b16 %v6325, %v6324
      %v6391 = vpack.c.b16 %v6327, %v6326
      %v6392 = vpack.c.b16 %v6329, %v6328
      %v6393 = vpack.c.b16 %v6331, %v6330
      %v6394 = vpack.c.b16 %v6333, %v6332
      %v6395 = vpack.c.b16 %v6335, %v6334
      %v6396 = vpack.c.b16 %v6337, %v6336
      %v6397 = vpack.c.b16 %v6339, %v6338
      %v6398 = vpack.c.b16 %v6341, %v6340
      %v6399 = vpack.c.b16 %v6343, %v6342
      %v6400 = vpack.c.b16 %v6345, %v6344
      %v6401 = vpack.c.b16 %v6347, %v6346
      %v6402 = vpack.c.b16 %v6349, %v6348
      %v6403 = vpack.c.b16 %v6351, %v6350
      %v6404 = vpack.c.b16 %v6353, %v6352
      %v6405 = vpack.c.b16 %v6355, %v6354
      %v6406 = vpack.c.b16 %v6357, %v6356
      %v6407 = vpack.c.b16 %v6359, %v6358
      %v6408 = vpack.c.b16 %v6360, %v6360
      %v6457 = vsel %vm1013, %v6069, 0
      %v6460 = vsel %vm1017, %v6408, 0
      %6462 = vmatpush.bf16.msra.mxu0 %v6368
      %6463 = vmatpush.bf16.msra.mxu0 %v6367
      %6464 = vmatpush.bf16.msra.mxu0 %v6366
      %6465 = vmatpush.bf16.msra.mxu0 %v6365
      %6466 = vmatpush.bf16.msra.mxu0 %v6364
      %6467 = vmatpush.bf16.msra.mxu0 %v6363
      %6468 = vmatpush.bf16.msra.mxu0 %v6362
      %6469 = vmatpush.bf16.msra.mxu0 %v6361
      %6470 = vmatmul.bf16.gmra.mxu0 %v6064
      %v6471 = vpop.f32.mrf.mxu0
      %v6472 = vadd.f32 %v6169, %v6471
      %v6473 = vpop.f32.mrf.mxu0
      %6474 = vdwg.mxu0
      %6475 = vmatpush.bf16.msra.mxu0 %v6376
      %6476 = vmatpush.bf16.msra.mxu0 %v6375
      %6477 = vmatpush.bf16.msra.mxu0 %v6374
      %6478 = vmatpush.bf16.msra.mxu0 %v6373
      %6479 = vmatpush.bf16.msra.mxu0 %v6372
      %6480 = vmatpush.bf16.msra.mxu0 %v6371
      %6481 = vmatpush.bf16.msra.mxu0 %v6370
      %6482 = vmatpush.bf16.msra.mxu0 %v6369
      %6483 = vmatmul.bf16.gmra.mxu0 %v6065
      %v6484 = vpop.f32.mrf.mxu0
      %v6485 = vadd.f32 %v6472, %v6484
      %v6486 = vpop.f32.mrf.mxu0
      %6487 = vdwg.mxu0
      %6488 = vmatpush.bf16.msra.mxu0 %v6384
      %6489 = vmatpush.bf16.msra.mxu0 %v6383
      %6490 = vmatpush.bf16.msra.mxu0 %v6382
      %6491 = vmatpush.bf16.msra.mxu0 %v6381
      %6492 = vmatpush.bf16.msra.mxu0 %v6380
      %6493 = vmatpush.bf16.msra.mxu0 %v6379
      %6494 = vmatpush.bf16.msra.mxu0 %v6378
      %6495 = vmatpush.bf16.msra.mxu0 %v6377
      %6496 = vmatmul.bf16.gmra.mxu0 %v6066
      %v6497 = vpop.f32.mrf.mxu0
      %v6498 = vadd.f32 %v6485, %v6497
      %v6499 = vpop.f32.mrf.mxu0
      %6500 = vdwg.mxu0
      %6501 = vmatpush.bf16.msra.mxu0 %v6392
      %6502 = vmatpush.bf16.msra.mxu0 %v6391
      %6503 = vmatpush.bf16.msra.mxu0 %v6390
      %6504 = vmatpush.bf16.msra.mxu0 %v6389
      %6505 = vmatpush.bf16.msra.mxu0 %v6388
      %6506 = vmatpush.bf16.msra.mxu0 %v6387
      %6507 = vmatpush.bf16.msra.mxu0 %v6386
      %6508 = vmatpush.bf16.msra.mxu0 %v6385
      %6509 = vmatmul.bf16.gmra.mxu0 %v6067
      %v6510 = vpop.f32.mrf.mxu0
      %v6511 = vadd.f32 %v6498, %v6510
      %v6512 = vpop.f32.mrf.mxu0
      %6513 = vdwg.mxu0
      %6514 = vmatpush.bf16.msra.mxu0 %v6400
      %6515 = vmatpush.bf16.msra.mxu0 %v6399
      %6516 = vmatpush.bf16.msra.mxu0 %v6398
      %6517 = vmatpush.bf16.msra.mxu0 %v6397
      %6518 = vmatpush.bf16.msra.mxu0 %v6396
      %6519 = vmatpush.bf16.msra.mxu0 %v6395
      %6520 = vmatpush.bf16.msra.mxu0 %v6394
      %6521 = vmatpush.bf16.msra.mxu0 %v6393
      %6522 = vmatmul.bf16.gmra.mxu0 %v6068
      %v6523 = vpop.f32.mrf.mxu0
      %v6524 = vadd.f32 %v6511, %v6523
      %v6525 = vpop.f32.mrf.mxu0
      %6526 = vdwg.mxu0
      %6527 = vmatpush.bf16.msra.mxu0 %v6460
      %6528 = vmatpush.bf16.msra.mxu0 %v6407
      %6529 = vmatpush.bf16.msra.mxu0 %v6406
      %6530 = vmatpush.bf16.msra.mxu0 %v6405
      %6531 = vmatpush.bf16.msra.mxu0 %v6404
      %6532 = vmatpush.bf16.msra.mxu0 %v6403
      %6533 = vmatpush.bf16.msra.mxu0 %v6402
      %6534 = vmatpush.bf16.msra.mxu0 %v6401
      %6535 = vmatmul.bf16.gmra.mxu0 %v6457
      %v6536 = vpop.f32.mrf.mxu0
      %v6537 = vadd.f32 %v6524, %v6536
      %v6538 = vpop.f32.mrf.mxu0
      %6539 = vdwg.mxu0
      %v6540 = vmax.f32 %v6537, 0.0
      %v6541 = vmul.f32 %v6540, %v1101
      %v6542 = vsel %vm516, %v6541, 0.0
      %6543 = vadd.xlane.f32.xlu0 %v6542
      %v6544 = vpop.xlane.xlu0 %6543
      %v6545 = vrcp.pop %v6544
      %v6546 = vmul.f32 %v6540, %v6545
      %s6547 = scalar_lea.vmem %s322, 56
      %6548 = vst.msk [vmem:[%s6547] sm:$0xff] %vm516, %v6546
      %s6549 = smul.u32 8, %s17
      %p6550 = scmp.lt.s32.totalorder %s6549, 31
      %s6551 = scalar_select %p6550, %s6549, 31
      %s6552 = smul.addr %s6551, 8
      %s6553 = scalar_lea.vmem %s6, %s6552
      // Predicated region
      $region45: #{nn_forward.1} parent=43 // pred_check
        %p6554 = pneg %p181
      $region46: #{nn_forward.1} parent=43 // pred_check_branch
        %6556 = sbr.rel (%p6554) target = $region48
      $region47: #{nn_forward.1} parent=43 // pred_region
        %s6557 = smul.u32 8, %s17
      $region48: #{nn_forward.1} parent=43 // pred_fallthru
        _
    $region44: #{nn_forward.1} parent=5 // pred_fallthru
      _
    %p6558 = scmp.le.s32.totalorder 2, %s12
    // Predicated region
    $region49: #{nn_forward.1} parent=5 // pred_check
      %p6559 = pneg %p6558
    $region50: #{nn_forward.1} parent=5 // pred_check_branch
      %6561 = sbr.rel (%p6559) target = $region52
    $region51: #{nn_forward.1} parent=5 // pred_region
      %s6562 = ssub.s32 %s12, 2
      // Predicated region
      $region53: #{nn_forward.1} parent=51 // pred_check
        %p6563 = pneg %p187
      $region54: #{nn_forward.1} parent=51 // pred_check_branch
        %6565 = sbr.rel (%p6563) target = $region56
      $region55: #{nn_forward.1} parent=51 // pred_region
        %s6566 = smul.u32 8, %s18
        %p6567 = scmp.lt.s32.totalorder %s6566, 31
        %s6568 = scalar_select %p6567, %s6566, 31
        %s6569 = smul.addr %s6568, 8
        %s6570 = scalar_lea.vmem %s6, %s6569
      $region56: #{nn_forward.1} parent=51 // pred_fallthru
        _
    $region52: #{nn_forward.1} parent=5 // pred_fallthru
      _
  $region6: #{nn_forward.1} parent=0 // loop_footer
    %s16 = sadd.s32 1, %s12
  $region7: #{nn_forward.1} parent=0 // loop_footer_branch
    %11 = sbr.rel target = $region3
  $region8: #{nn_forward.1} parent=0 // loop_exit
    _

</llo_original>
